<compile_context>
chip_gen: v6e
topology: v6e:2x2x1
jax: 0.10.0
libtpu: 0.0.40
codegen_flags: <defaults>
</compile_context>

<pallas_src>
import functools
import math

import jax
import jax.numpy as jnp
from jax.experimental import pallas as pl
from jax.experimental.pallas import tpu as pltpu


def _pick_tile(dim, target, multiple):
    """Largest tile <= target that divides `dim` and is a multiple of
    `multiple`; falls back to the full dim (always a legal block size)."""
    if dim <= target:
        return dim
    t = target
    while t >= multiple:
        if dim % t == 0:
            return t
        t //= 2
    return dim


def _vmem_limit(footprint_bytes):
    """Scoped-VMEM limit from the double-buffered footprint + headroom,
    capped well under v7x's 64 MiB/TC (v5e/v6e have 128 MiB physical)."""
    return int(min(max(footprint_bytes * 5 // 4 + (2 << 20), 8 << 20), 56 << 20))


# ---------------------------------------------------------------------------
# Kernel 1: tiled linear  y = act(x @ W + b)
#   x: [M, K] (f32 or bf16), W: [K, N] bf16, b: [N] f32.
#   f32 VMEM accumulator; bias (+ optional gelu) fused into the K epilogue.
# ---------------------------------------------------------------------------
def _linear_kernel(x_ref, w_ref, b_ref, o_ref, acc_ref, *, activation):
    k = pl.program_id(2)

    @pl.when(k == 0)
    def _():
        acc_ref[...] = jnp.zeros_like(acc_ref)

    # Cast activations to bf16 in VMEM (MXU-native); accumulate in f32.
    acc_ref[...] += jnp.dot(x_ref[...].astype(jnp.bfloat16), w_ref[...],
                            preferred_element_type=jnp.float32)

    @pl.when(k == pl.num_programs(2) - 1)
    def _():
        out = acc_ref[...] + b_ref[...]          # f32 bias add
        if activation == "gelu":
            # TODO(synk): tanh-approx GELU (torch.nn.GELU default is exact erf).
            out = jax.nn.gelu(out, approximate=True)
        o_ref[...] = out.astype(o_ref.dtype)


def tiled_linear(x, w, b, *, activation=None, out_dtype=jnp.bfloat16,
                 tm=512, tn=512, tk=512):
    M, K = x.shape
    K2, N = w.shape
    assert K == K2 and b.shape == (N,)
    tm = _pick_tile(M, tm, 8)
    tn = _pick_tile(N, tn, 128)
    tk = _pick_tile(K, tk, 128)
    out_bytes = jnp.dtype(out_dtype).itemsize
    footprint = (2 * tm * tk * x.dtype.itemsize + 2 * tk * tn * w.dtype.itemsize
                 + 2 * tn * 4 + 2 * tm * tn * out_bytes + tm * tn * 4)
    return pl.pallas_call(
        functools.partial(_linear_kernel, activation=activation),
        out_shape=jax.ShapeDtypeStruct((M, N), out_dtype),
        grid=(M // tm, N // tn, K // tk),
        in_specs=[
            pl.BlockSpec((tm, tk), lambda i, j, k: (i, k)),
            pl.BlockSpec((tk, tn), lambda i, j, k: (k, j)),
            pl.BlockSpec((1, tn), lambda i, j, k: (0, j)),
        ],
        out_specs=pl.BlockSpec((tm, tn), lambda i, j, k: (i, j)),
        scratch_shapes=[pltpu.VMEM((tm, tn), jnp.float32)],
        compiler_params=pltpu.CompilerParams(
            dimension_semantics=("parallel", "parallel", "arbitrary"),
            vmem_limit_bytes=_vmem_limit(footprint)),
    )(x, w, b.reshape(1, N))


# ---------------------------------------------------------------------------
# Kernel 2: flash-style attention core (online softmax, KV innermost axis).
#   qkv: [S, B, 3, nh, dh] bf16 (raw projection output), mask: [B, S, S] f32.
#   Output: [B, S, nh, dh] bf16 — the (s,b)->(b,s) reorder and head merge are
#   absorbed by the out BlockSpec, so no transpose passes around attention.
# ---------------------------------------------------------------------------
def _flash_attn_kernel(q_ref, k_ref, v_ref, mask_ref, o_ref,
                       m_sc, l_sc, acc_sc, *, scale, num_heads):
    kv = pl.program_id(2)

    @pl.when(kv == 0)
    def _():
        m_sc[...] = jnp.full_like(m_sc, -jnp.inf)
        l_sc[...] = jnp.zeros_like(l_sc)
        acc_sc[...] = jnp.zeros_like(acc_sc)

    q = q_ref[...]                      # (tq,  nh, dh) bf16
    k = k_ref[...]                      # (tkv, nh, dh) bf16
    v = v_ref[...]                      # (tkv, nh, dh) bf16
    mask = mask_ref[...]                # (tq, tkv) f32, fetched once per (b,qi,ki)

    # Per-head 2-D dots keep Mosaic lowering simple; all heads share one
    # mask/KV fetch.  nh is small, so a statically-unrolled loop is fine.
    # TODO(synk): pack heads into a lane-dense PV matmul (256-wide MXU on
    #             v6e/v7x) and switch to lax.fori_loop for large head counts.
    for h in range(num_heads):
        qh = q[:, h, :]                 # (tq, dh)
        kh = k[:, h, :]                 # (tkv, dh)
        vh = v[:, h, :]                 # (tkv, dh)

        # trans_b matmul (contract dh with dh): no k.T materialization.
        s = jax.lax.dot_general(
            qh, kh, (((1,), (1,)), ((), ())),
            preferred_element_type=jnp.float32) * scale + mask

        m_prev = m_sc[h]                                            # (tq, 1)
        m_new = jnp.maximum(m_prev, jnp.max(s, axis=-1, keepdims=True))
        # Guard fully-masked rows so exp never sees (-inf) - (-inf).
        m_safe = jnp.where(m_new == -jnp.inf, 0.0, m_new)
        alpha = jnp.exp(m_prev - m_safe)
        p = jnp.exp(s - m_safe)

        l_sc[h] = alpha * l_sc[h] + jnp.sum(p, axis=-1, keepdims=True)
        acc_sc[h] = alpha * acc_sc[h] + jax.lax.dot_general(
            p.astype(vh.dtype), vh, (((1,), (0,)), ((), ())),
            preferred_element_type=jnp.float32)
        m_sc[h] = m_new

    @pl.when(kv == pl.num_programs(2) - 1)
    def _():
        for h in range(num_heads):
            l = l_sc[h]
            l = jnp.where(l == 0.0, 1.0, l)     # fully-masked rows -> zeros
            o_ref[:, h, :] = (acc_sc[h] * pl.reciprocal(l, approx=True)
                              ).astype(o_ref.dtype)


def flash_attention(qkv, mask, num_heads, *, tq=256, tkv=256):
    """qkv: [S, B, 3, nh, dh] bf16, mask: [B, S, S] f32 -> [B, S, nh, dh] bf16."""
    S, B, three, nh, dh = qkv.shape
    assert three == 3 and nh == num_heads
    scale = 1.0 / math.sqrt(dh)
    tq = _pick_tile(S, tq, 8)
    tkv = _pick_tile(S, tkv, 128)
    grid = (B, S // tq, S // tkv)       # (b, q-tile) parallel; kv arbitrary

    # Head split and (seq,batch)->(batch,seq) relayout live in the index_maps.
    q_spec = pl.BlockSpec((tq, None, None, nh, dh),
                          lambda b, qi, ki: (qi, b, 0, 0, 0))
    k_spec = pl.BlockSpec((tkv, None, None, nh, dh),
                          lambda b, qi, ki: (ki, b, 1, 0, 0))
    v_spec = pl.BlockSpec((tkv, None, None, nh, dh),
                          lambda b, qi, ki: (ki, b, 2, 0, 0))
    mask_spec = pl.BlockSpec((None, tq, tkv), lambda b, qi, ki: (b, qi, ki))
    out_spec = pl.BlockSpec((None, tq, nh, dh), lambda b, qi, ki: (b, qi, 0, 0))

    hd = nh * dh
    footprint = (2 * tq * hd * 2 + 4 * tkv * hd * 2 + 2 * tq * tkv * 4
                 + 2 * tq * hd * 2 + nh * tq * dh * 4 + 2 * nh * tq * 128 * 4)
    kernel = functools.partial(_flash_attn_kernel, scale=scale,
                               num_heads=num_heads)
    # TODO(synk): pipeline_mode=pl.Buffered(3) on k/v specs once validated.
    return pl.pallas_call(
        kernel,
        out_shape=jax.ShapeDtypeStruct((B, S, nh, dh), jnp.bfloat16),
        grid=grid,
        in_specs=[q_spec, k_spec, v_spec, mask_spec],
        out_specs=out_spec,
        scratch_shapes=[
            pltpu.VMEM((nh, tq, 1), jnp.float32),    # running max, per head
            pltpu.VMEM((nh, tq, 1), jnp.float32),    # running sum, per head
            pltpu.VMEM((nh, tq, dh), jnp.float32),   # output accumulator
        ],
        compiler_params=pltpu.CompilerParams(
            dimension_semantics=("parallel", "parallel", "arbitrary"),
            vmem_limit_bytes=_vmem_limit(footprint)),
    )(qkv, qkv, qkv, mask)


# ---------------------------------------------------------------------------
# Kernel 3: fused MLP  y = gelu(x @ W1 + b1) @ W2 + b2
#   The [M, ffn_hidden] intermediate stays in VMEM (never written to HBM).
#   Grid: (M tiles, ffn-chunk reduction).
# ---------------------------------------------------------------------------
def _mlp_kernel(x_ref, w1_ref, b1_ref, w2_ref, b2_ref, o_ref, acc_ref):
    j = pl.program_id(1)

    @pl.when(j == 0)
    def _():
        acc_ref[...] = jnp.zeros_like(acc_ref)

    h = jnp.dot(x_ref[...], w1_ref[...], preferred_element_type=jnp.float32)
    # TODO(synk): tanh-approx GELU (torch.nn.GELU default is exact erf).
    h = jax.nn.gelu(h + b1_ref[...], approximate=True)
    acc_ref[...] += jnp.dot(h.astype(jnp.bfloat16), w2_ref[...],
                            preferred_element_type=jnp.float32)

    @pl.when(j == pl.num_programs(1) - 1)
    def _():
        o_ref[...] = (acc_ref[...] + b2_ref[...]).astype(o_ref.dtype)


def fused_mlp(x, w1, b1, w2, b2, *, out_dtype=jnp.float32, tm=256, tf=512):
    """x: [M, H] bf16, w1: [H, F] bf16, w2: [F, H] bf16 -> [M, H]."""
    M, H = x.shape
    H2, F = w1.shape
    F2, H3 = w2.shape
    assert H == H2 and F == F2 and H == H3
    tm = _pick_tile(M, tm, 8)
    tf = _pick_tile(F, tf, 128)
    out_bytes = jnp.dtype(out_dtype).itemsize
    footprint = (2 * tm * H * 2 + 2 * H * tf * 2 + 2 * tf * 4 + 2 * tf * H * 2
                 + 2 * H * 4 + 2 * tm * H * out_bytes + tm * H * 4 + tm * tf * 4)
    return pl.pallas_call(
        _mlp_kernel,
        out_shape=jax.ShapeDtypeStruct((M, H), out_dtype),
        grid=(M // tm, F // tf),
        in_specs=[
            pl.BlockSpec((tm, H), lambda i, j: (i, 0)),
            pl.BlockSpec((H, tf), lambda i, j: (0, j)),
            pl.BlockSpec((1, tf), lambda i, j: (0, j)),
            pl.BlockSpec((tf, H), lambda i, j: (j, 0)),
            pl.BlockSpec((1, H), lambda i, j: (0, 0)),
        ],
        out_specs=pl.BlockSpec((tm, H), lambda i, j: (i, 0)),
        scratch_shapes=[pltpu.VMEM((tm, H), jnp.float32)],
        compiler_params=pltpu.CompilerParams(
            dimension_semantics=("parallel", "arbitrary"),
            vmem_limit_bytes=_vmem_limit(footprint)),
    )(x, w1, b1.reshape(1, F), w2, b2.reshape(1, H))


# ---------------------------------------------------------------------------
# TransformerLayer forward (hot paths in Pallas; glue is free reshapes only)
# ---------------------------------------------------------------------------
def transformer_layer(params, hidden_states, attention_mask, num_heads):
    """hidden_states: [S, B, H] f32; attention_mask: [B, S, S] additive f32.
    Returns [B, S, H] f32."""
    S, B, Hdim = hidden_states.shape
    head_dim = Hdim // num_heads

    # QKV projection directly on the [S*B, H] rows (matmul rows are
    # order-independent); f32->bf16 cast happens inside the kernel.
    x2d = hidden_states.reshape(S * B, Hdim)
    qkv = tiled_linear(x2d, params["w_qkv_t"], params["b_qkv"])   # [S*B, 3H] bf16
    qkv = qkv.reshape(S, B, 3, num_heads, head_dim)               # free reshape

    # Flash attention; context comes back already in [B, S, nh, dh].
    ctx = flash_attention(qkv, attention_mask.astype(jnp.float32), num_heads)
    ctx2d = ctx.reshape(B * S, Hdim)                              # free reshape

    # Output projection.
    attn_out = tiled_linear(ctx2d, params["w_dense_t"], params["b_dense"])
    # TODO(synk): fuse the dense projection into the MLP pipeline as well
    # (keep the ctx tile resident while streaming W_dense chunks).

    # Fused MLP: the [B*S, 4H] intermediate never hits HBM.  Output stays f32
    # to match the torch module dtype (bf16 would halve v5e store traffic if
    # downstream tolerates it).
    out = fused_mlp(attn_out, params["w_4h_t"], params["b_4h"],
                    params["w_h_t"], params["b_h"], out_dtype=jnp.float32)
    return out.reshape(B, S, Hdim)                                # [batch, seq, hidden]


def init_params(key, hidden_size, ffn_hidden_size):
    ks = jax.random.split(key, 8)
    scale = 0.02
    # nn.Linear stores weight [out, in]; we keep the transposed [in, out].
    # Weights bf16 (MXU-native), biases f32 (added in the f32 epilogue).
    return {
        "w_qkv_t": (scale * jax.random.normal(
            ks[0], (hidden_size, 3 * hidden_size), jnp.float32)).astype(jnp.bfloat16),
        "b_qkv": scale * jax.random.normal(ks[1], (3 * hidden_size,), jnp.float32),
        "w_dense_t": (scale * jax.random.normal(
            ks[2], (hidden_size, hidden_size), jnp.float32)).astype(jnp.bfloat16),
        "b_dense": scale * jax.random.normal(ks[3], (hidden_size,), jnp.float32),
        "w_4h_t": (scale * jax.random.normal(
            ks[4], (hidden_size, ffn_hidden_size), jnp.float32)).astype(jnp.bfloat16),
        "b_4h": scale * jax.random.normal(ks[5], (ffn_hidden_size,), jnp.float32),
        "w_h_t": (scale * jax.random.normal(
            ks[6], (ffn_hidden_size, hidden_size), jnp.float32)).astype(jnp.bfloat16),
        "b_h": scale * jax.random.normal(ks[7], (hidden_size,), jnp.float32),
    }


if __name__ == "__main__":
    seq, batch, hidden, heads = 8, 2, 32, 4
    ffn_hidden = 4 * hidden

    key = jax.random.PRNGKey(0)
    k_param, k_x = jax.random.split(key)
    params = init_params(k_param, hidden, ffn_hidden)

    # Input layout: [seq, batch, hidden]; additive mask [batch, seq, seq].
    hidden_states = jax.random.normal(k_x, (seq, batch, hidden), jnp.float32)
    attention_mask = jnp.zeros((batch, seq, seq), jnp.float32)

    fwd = jax.jit(functools.partial(transformer_layer, num_heads=heads))
    out = fwd(params, hidden_states, attention_mask)
    jax.block_until_ready(out)

    assert out.shape == (batch, seq, hidden)
    assert bool(jnp.all(jnp.isfinite(out)))
    print("KERNEL_OK")
</pallas_src>

<mosaic_0001>
module attributes {stable_mosaic.version = 11 : i64} {
  func.func @_linear_kernel(%arg0: i32, %arg1: i32, %arg2: i32, %arg3: memref<16x32xf32, #tpu.memory_space<vmem>>, %arg4: memref<32x96xbf16, #tpu.memory_space<vmem>>, %arg5: memref<1x96xf32, #tpu.memory_space<vmem>>, %arg6: memref<16x96xbf16, #tpu.memory_space<vmem>>, %arg7: memref<16x96xf32, #tpu.memory_space<vmem>>) attributes {dimension_semantics = [#tpu.dimension_semantics<parallel>, #tpu.dimension_semantics<parallel>, #tpu.dimension_semantics<arbitrary>], iteration_bounds = array<i64: 1, 1, 1>, scalar_prefetch = 0 : i64, scratch_operands = 1 : i64, tpu.core_type = #tpu.core_type<tc>, window_params = [{transform_indices = @transform_0, window_bounds = array<i64: 16, 32>}, {transform_indices = @transform_1, window_bounds = array<i64: 32, 96>}, {transform_indices = @transform_2, window_bounds = array<i64: 1, 96>}, {transform_indices = @transform_3, window_bounds = array<i64: 16, 96>}]} {
    %c0_i32 = arith.constant 0 : i32
    %0 = arith.cmpi eq, %arg2, %c0_i32 : i32
    %1 = arith.extui %0 : i1 to i32
    %c0_i32_0 = arith.constant 0 : i32
    %2 = arith.cmpi ne, %1, %c0_i32_0 : i32
    scf.if %2 {
      %cst_10 = arith.constant 0.000000e+00 : f32
      %13 = vector.broadcast %cst_10 : f32 to vector<16x96xf32>
      %c0_11 = arith.constant 0 : index
      %c0_12 = arith.constant 0 : index
      %14 = vector.load %arg7[%c0_11, %c0_12] : memref<16x96xf32, #tpu.memory_space<vmem>>, vector<16x96xf32>
      tpu.vector_store %arg7[%c0_11, %c0_12], %13 {strides = array<i32>} : memref<16x96xf32, #tpu.memory_space<vmem>>, vector<16x96xf32>,
    } else {
    }
    %c0 = arith.constant 0 : index
    %c0_1 = arith.constant 0 : index
    %3 = vector.load %arg7[%c0, %c0_1] : memref<16x96xf32, #tpu.memory_space<vmem>>, vector<16x96xf32>
    %c0_2 = arith.constant 0 : index
    %c0_3 = arith.constant 0 : index
    %4 = vector.load %arg3[%c0_2, %c0_3] : memref<16x32xf32, #tpu.memory_space<vmem>>, vector<16x32xf32>
    %5 = arith.truncf %4 : vector<16x32xf32> to vector<16x32xbf16>
    %c0_4 = arith.constant 0 : index
    %c0_5 = arith.constant 0 : index
    %6 = vector.load %arg4[%c0_4, %c0_5] : memref<32x96xbf16, #tpu.memory_space<vmem>>, vector<32x96xbf16>
    %cst = arith.constant dense<0.000000e+00> : vector<16x96xf32>
    %7 = tpu.matmul %5, %6, %cst {dimension_numbers = #tpu.dot_dimension_numbers<[1], [0], [0], [1], [0, 0, 1, 1], [], []>} : vector<16x32xbf16>, vector<32x96xbf16>, vector<16x96xf32> -> vector<16x96xf32>
    %8 = arith.addf %3, %7 : vector<16x96xf32>
    %c0_6 = arith.constant 0 : index
    %c0_7 = arith.constant 0 : index
    %9 = vector.load %arg7[%c0_6, %c0_7] : memref<16x96xf32, #tpu.memory_space<vmem>>, vector<16x96xf32>
    tpu.vector_store %arg7[%c0_6, %c0_7], %8 {strides = array<i32>} : memref<16x96xf32, #tpu.memory_space<vmem>>, vector<16x96xf32>,
    %c0_i32_8 = arith.constant 0 : i32
    %10 = arith.cmpi eq, %arg2, %c0_i32_8 : i32
    %11 = arith.extui %10 : i1 to i32
    %c0_i32_9 = arith.constant 0 : i32
    %12 = arith.cmpi ne, %11, %c0_i32_9 : i32
    scf.if %12 {
      %c0_10 = arith.constant 0 : index
      %c0_11 = arith.constant 0 : index
      %13 = vector.load %arg7[%c0_10, %c0_11] : memref<16x96xf32, #tpu.memory_space<vmem>>, vector<16x96xf32>
      %c0_12 = arith.constant 0 : index
      %c0_13 = arith.constant 0 : index
      %14 = vector.load %arg5[%c0_12, %c0_13] : memref<1x96xf32, #tpu.memory_space<vmem>>, vector<1x96xf32>
      %15 = vector.broadcast %14 : vector<1x96xf32> to vector<16x96xf32>
      %16 = arith.addf %13, %15 : vector<16x96xf32>
      %17 = arith.truncf %16 : vector<16x96xf32> to vector<16x96xbf16>
      %c0_14 = arith.constant 0 : index
      %c0_15 = arith.constant 0 : index
      %18 = vector.load %arg6[%c0_14, %c0_15] : memref<16x96xbf16, #tpu.memory_space<vmem>>, vector<16x96xbf16>
      tpu.vector_store %arg6[%c0_14, %c0_15], %17 {strides = array<i32>} : memref<16x96xbf16, #tpu.memory_space<vmem>>, vector<16x96xbf16>,
    } else {
    }
    return
  }
  func.func @transform_0(%arg0: i32, %arg1: i32, %arg2: i32) -> (i32, i32) {
    %c0_i32 = arith.constant 0 : i32
    return %arg0, %arg2 : i32, i32
  }
  func.func @transform_1(%arg0: i32, %arg1: i32, %arg2: i32) -> (i32, i32) {
    %c0_i32 = arith.constant 0 : i32
    return %arg2, %arg1 : i32, i32
  }
  func.func @transform_2(%arg0: i32, %arg1: i32, %arg2: i32) -> (i32, i32) {
    %c0_i32 = arith.constant 0 : i32
    %c0_i32_0 = arith.constant 0 : i32
    return %c0_i32, %arg1 : i32, i32
  }
  func.func @transform_3(%arg0: i32, %arg1: i32, %arg2: i32) -> (i32, i32) {
    %c0_i32 = arith.constant 0 : i32
    return %arg0, %arg1 : i32, i32
  }
}

module attributes {stable_mosaic.version = 11 : i64} {
  func.func @_flash_attn_kernel(%arg0: i32, %arg1: i32, %arg2: i32, %arg3: memref<8x1x1x4x8xbf16, #tpu.memory_space<vmem>>, %arg4: memref<8x1x1x4x8xbf16, #tpu.memory_space<vmem>>, %arg5: memref<8x1x1x4x8xbf16, #tpu.memory_space<vmem>>, %arg6: memref<1x8x8xf32, #tpu.memory_space<vmem>>, %arg7: memref<1x8x4x8xbf16, #tpu.memory_space<vmem>>, %arg8: memref<4x8x1xf32, #tpu.memory_space<vmem>>, %arg9: memref<4x8x1xf32, #tpu.memory_space<vmem>>, %arg10: memref<4x8x8xf32, #tpu.memory_space<vmem>>) attributes {dimension_semantics = [#tpu.dimension_semantics<parallel>, #tpu.dimension_semantics<parallel>, #tpu.dimension_semantics<arbitrary>], iteration_bounds = array<i64: 2, 1, 1>, scalar_prefetch = 0 : i64, scratch_operands = 3 : i64, tpu.core_type = #tpu.core_type<tc>, window_params = [{transform_indices = @transform_0, window_bounds = array<i64: 8, 1, 1, 4, 8>}, {transform_indices = @transform_1, window_bounds = array<i64: 8, 1, 1, 4, 8>}, {transform_indices = @transform_2, window_bounds = array<i64: 8, 1, 1, 4, 8>}, {transform_indices = @transform_3, window_bounds = array<i64: 1, 8, 8>}, {transform_indices = @transform_4, window_bounds = array<i64: 1, 8, 4, 8>}]} {
    %c0_i32 = arith.constant 0 : i32
    %0 = arith.cmpi eq, %arg2, %c0_i32 : i32
    %1 = arith.extui %0 : i1 to i32
    %c0_i32_0 = arith.constant 0 : i32
    %2 = arith.cmpi ne, %1, %c0_i32_0 : i32
    scf.if %2 {
      %cst_116 = arith.constant 0xFF800000 : f32
      %198 = vector.broadcast %cst_116 : f32 to vector<4x8x1xf32>
      %c0_117 = arith.constant 0 : index
      %c0_118 = arith.constant 0 : index
      %c0_119 = arith.constant 0 : index
      %199 = vector.load %arg8[%c0_117, %c0_118, %c0_119] : memref<4x8x1xf32, #tpu.memory_space<vmem>>, vector<4x8x1xf32>
      tpu.vector_store %arg8[%c0_117, %c0_118, %c0_119], %198 {strides = array<i32>} : memref<4x8x1xf32, #tpu.memory_space<vmem>>, vector<4x8x1xf32>,
      %cst_120 = arith.constant 0.000000e+00 : f32
      %200 = vector.broadcast %cst_120 : f32 to vector<4x8x1xf32>
      %c0_121 = arith.constant 0 : index
      %c0_122 = arith.constant 0 : index
      %c0_123 = arith.constant 0 : index
      %201 = vector.load %arg9[%c0_121, %c0_122, %c0_123] : memref<4x8x1xf32, #tpu.memory_space<vmem>>, vector<4x8x1xf32>
      tpu.vector_store %arg9[%c0_121, %c0_122, %c0_123], %200 {strides = array<i32>} : memref<4x8x1xf32, #tpu.memory_space<vmem>>, vector<4x8x1xf32>,
      %cst_124 = arith.constant 0.000000e+00 : f32
      %202 = vector.broadcast %cst_124 : f32 to vector<4x8x8xf32>
      %c0_125 = arith.constant 0 : index
      %c0_126 = arith.constant 0 : index
      %c0_127 = arith.constant 0 : index
      %203 = vector.load %arg10[%c0_125, %c0_126, %c0_127] : memref<4x8x8xf32, #tpu.memory_space<vmem>>, vector<4x8x8xf32>
      tpu.vector_store %arg10[%c0_125, %c0_126, %c0_127], %202 {strides = array<i32>} : memref<4x8x8xf32, #tpu.memory_space<vmem>>, vector<4x8x8xf32>,
    } else {
    }
    %c0 = arith.constant 0 : index
    %c0_1 = arith.constant 0 : index
    %c0_2 = arith.constant 0 : index
    %c0_3 = arith.constant 0 : index
    %c0_4 = arith.constant 0 : index
    %3 = vector.load %arg3[%c0, %c0_1, %c0_2, %c0_3, %c0_4] : memref<8x1x1x4x8xbf16, #tpu.memory_space<vmem>>, vector<8x1x1x4x8xbf16>
    %4 = vector.shape_cast %3 : vector<8x1x1x4x8xbf16> to vector<8x4x8xbf16>
    %c0_5 = arith.constant 0 : index
    %c0_6 = arith.constant 0 : index
    %c0_7 = arith.constant 0 : index
    %c0_8 = arith.constant 0 : index
    %c0_9 = arith.constant 0 : index
    %5 = vector.load %arg4[%c0_5, %c0_6, %c0_7, %c0_8, %c0_9] : memref<8x1x1x4x8xbf16, #tpu.memory_space<vmem>>, vector<8x1x1x4x8xbf16>
    %6 = vector.shape_cast %5 : vector<8x1x1x4x8xbf16> to vector<8x4x8xbf16>
    %c0_10 = arith.constant 0 : index
    %c0_11 = arith.constant 0 : index
    %c0_12 = arith.constant 0 : index
    %c0_13 = arith.constant 0 : index
    %c0_14 = arith.constant 0 : index
    %7 = vector.load %arg5[%c0_10, %c0_11, %c0_12, %c0_13, %c0_14] : memref<8x1x1x4x8xbf16, #tpu.memory_space<vmem>>, vector<8x1x1x4x8xbf16>
    %8 = vector.shape_cast %7 : vector<8x1x1x4x8xbf16> to vector<8x4x8xbf16>
    %c0_15 = arith.constant 0 : index
    %c0_16 = arith.constant 0 : index
    %c0_17 = arith.constant 0 : index
    %9 = vector.load %arg6[%c0_15, %c0_16, %c0_17] : memref<1x8x8xf32, #tpu.memory_space<vmem>>, vector<1x8x8xf32>
    %10 = vector.shape_cast %9 : vector<1x8x8xf32> to vector<8x8xf32>
    %11 = vector.extract_strided_slice %4 {offsets = [0, 0, 0], sizes = [8, 1, 8], strides = [1, 1, 1]} : vector<8x4x8xbf16> to vector<8x1x8xbf16>
    %12 = vector.shape_cast %11 : vector<8x1x8xbf16> to vector<8x8xbf16>
    %13 = vector.extract_strided_slice %6 {offsets = [0, 0, 0], sizes = [8, 1, 8], strides = [1, 1, 1]} : vector<8x4x8xbf16> to vector<8x1x8xbf16>
    %14 = vector.shape_cast %13 : vector<8x1x8xbf16> to vector<8x8xbf16>
    %15 = vector.extract_strided_slice %8 {offsets = [0, 0, 0], sizes = [8, 1, 8], strides = [1, 1, 1]} : vector<8x4x8xbf16> to vector<8x1x8xbf16>
    %16 = vector.shape_cast %15 : vector<8x1x8xbf16> to vector<8x8xbf16>
    %cst = arith.constant dense<0.000000e+00> : vector<8x8xf32>
    %17 = tpu.matmul %12, %14, %cst {dimension_numbers = #tpu.dot_dimension_numbers<[1], [1], [0], [0], [0, 0, 1, 0], [], []>} : vector<8x8xbf16>, vector<8x8xbf16>, vector<8x8xf32> -> vector<8x8xf32>
    %cst_18 = arith.constant 0.353553385 : f32
    %18 = vector.broadcast %cst_18 : f32 to vector<8x8xf32>
    %19 = arith.mulf %17, %18 : vector<8x8xf32>
    %20 = arith.addf %19, %10 : vector<8x8xf32>
    %c0_19 = arith.constant 0 : index
    %c0_20 = arith.constant 0 : index
    %c0_21 = arith.constant 0 : index
    %21 = vector.load %arg8[%c0_19, %c0_20, %c0_21] : memref<4x8x1xf32, #tpu.memory_space<vmem>>, vector<1x8x1xf32>
    %22 = vector.shape_cast %21 : vector<1x8x1xf32> to vector<8x1xf32>
    %cst_22 = arith.constant dense<0xFF800000> : vector<8xf32>
    %23 = vector.multi_reduction <maximumf>, %20, %cst_22 [1] : vector<8x8xf32> to vector<8xf32>
    %24 = vector.shape_cast %23 : vector<8xf32> to vector<8x1xf32>
    %25 = arith.maximumf %22, %24 : vector<8x1xf32>
    %cst_23 = arith.constant 0xFF800000 : f32
    %26 = vector.broadcast %cst_23 : f32 to vector<8x1xf32>
    %27 = arith.cmpf oeq, %25, %26 : vector<8x1xf32>
    %cst_24 = arith.constant 0.000000e+00 : f32
    %28 = vector.broadcast %cst_24 : f32 to vector<8x1xf32>
    %29 = arith.select %27, %28, %25 : vector<8x1xi1>, vector<8x1xf32>
    %30 = arith.subf %22, %29 : vector<8x1xf32>
    %31 = math.exp %30 : vector<8x1xf32>
    %32 = vector.broadcast %29 : vector<8x1xf32> to vector<8x8xf32>
    %33 = arith.subf %20, %32 : vector<8x8xf32>
    %34 = math.exp %33 : vector<8x8xf32>
    %c0_25 = arith.constant 0 : index
    %c0_26 = arith.constant 0 : index
    %c0_27 = arith.constant 0 : index
    %35 = vector.load %arg9[%c0_25, %c0_26, %c0_27] : memref<4x8x1xf32, #tpu.memory_space<vmem>>, vector<1x8x1xf32>
    %36 = vector.shape_cast %35 : vector<1x8x1xf32> to vector<8x1xf32>
    %37 = arith.mulf %31, %36 : vector<8x1xf32>
    %cst_28 = arith.constant dense<0.000000e+00> : vector<8xf32>
    %38 = vector.multi_reduction <add>, %34, %cst_28 [1] : vector<8x8xf32> to vector<8xf32>
    %39 = vector.shape_cast %38 : vector<8xf32> to vector<8x1xf32>
    %40 = arith.addf %37, %39 : vector<8x1xf32>
    %c0_29 = arith.constant 0 : index
    %c0_30 = arith.constant 0 : index
    %c0_31 = arith.constant 0 : index
    %41 = vector.load %arg9[%c0_29, %c0_30, %c0_31] : memref<4x8x1xf32, #tpu.memory_space<vmem>>, vector<1x8x1xf32>
    %42 = vector.shape_cast %41 : vector<1x8x1xf32> to vector<8x1xf32>
    %43 = vector.shape_cast %40 : vector<8x1xf32> to vector<1x8x1xf32>
    tpu.vector_store %arg9[%c0_29, %c0_30, %c0_31], %43 {strides = array<i32>} : memref<4x8x1xf32, #tpu.memory_space<vmem>>, vector<1x8x1xf32>,
    %c0_32 = arith.constant 0 : index
    %c0_33 = arith.constant 0 : index
    %c0_34 = arith.constant 0 : index
    %44 = vector.load %arg10[%c0_32, %c0_33, %c0_34] : memref<4x8x8xf32, #tpu.memory_space<vmem>>, vector<1x8x8xf32>
    %45 = vector.shape_cast %44 : vector<1x8x8xf32> to vector<8x8xf32>
    %46 = vector.broadcast %31 : vector<8x1xf32> to vector<8x8xf32>
    %47 = arith.mulf %46, %45 : vector<8x8xf32>
    %48 = arith.truncf %34 : vector<8x8xf32> to vector<8x8xbf16>
    %cst_35 = arith.constant dense<0.000000e+00> : vector<8x8xf32>
    %49 = tpu.matmul %48, %16, %cst_35 {dimension_numbers = #tpu.dot_dimension_numbers<[1], [0], [0], [1], [0, 0, 1, 1], [], []>} : vector<8x8xbf16>, vector<8x8xbf16>, vector<8x8xf32> -> vector<8x8xf32>
    %50 = arith.addf %47, %49 : vector<8x8xf32>
    %c0_36 = arith.constant 0 : index
    %c0_37 = arith.constant 0 : index
    %c0_38 = arith.constant 0 : index
    %51 = vector.load %arg10[%c0_36, %c0_37, %c0_38] : memref<4x8x8xf32, #tpu.memory_space<vmem>>, vector<1x8x8xf32>
    %52 = vector.shape_cast %51 : vector<1x8x8xf32> to vector<8x8xf32>
    %53 = vector.shape_cast %50 : vector<8x8xf32> to vector<1x8x8xf32>
    tpu.vector_store %arg10[%c0_36, %c0_37, %c0_38], %53 {strides = array<i32>} : memref<4x8x8xf32, #tpu.memory_space<vmem>>, vector<1x8x8xf32>,
    %c0_39 = arith.constant 0 : index
    %c0_40 = arith.constant 0 : index
    %c0_41 = arith.constant 0 : index
    %54 = vector.load %arg8[%c0_39, %c0_40, %c0_41] : memref<4x8x1xf32, #tpu.memory_space<vmem>>, vector<1x8x1xf32>
    %55 = vector.shape_cast %54 : vector<1x8x1xf32> to vector<8x1xf32>
    %56 = vector.shape_cast %25 : vector<8x1xf32> to vector<1x8x1xf32>
    tpu.vector_store %arg8[%c0_39, %c0_40, %c0_41], %56 {strides = array<i32>} : memref<4x8x1xf32, #tpu.memory_space<vmem>>, vector<1x8x1xf32>,
    %57 = vector.extract_strided_slice %4 {offsets = [0, 1, 0], sizes = [8, 1, 8], strides = [1, 1, 1]} : vector<8x4x8xbf16> to vector<8x1x8xbf16>
    %58 = vector.shape_cast %57 : vector<8x1x8xbf16> to vector<8x8xbf16>
    %59 = vector.extract_strided_slice %6 {offsets = [0, 1, 0], sizes = [8, 1, 8], strides = [1, 1, 1]} : vector<8x4x8xbf16> to vector<8x1x8xbf16>
    %60 = vector.shape_cast %59 : vector<8x1x8xbf16> to vector<8x8xbf16>
    %61 = vector.extract_strided_slice %8 {offsets = [0, 1, 0], sizes = [8, 1, 8], strides = [1, 1, 1]} : vector<8x4x8xbf16> to vector<8x1x8xbf16>
    %62 = vector.shape_cast %61 : vector<8x1x8xbf16> to vector<8x8xbf16>
    %cst_42 = arith.constant dense<0.000000e+00> : vector<8x8xf32>
    %63 = tpu.matmul %58, %60, %cst_42 {dimension_numbers = #tpu.dot_dimension_numbers<[1], [1], [0], [0], [0, 0, 1, 0], [], []>} : vector<8x8xbf16>, vector<8x8xbf16>, vector<8x8xf32> -> vector<8x8xf32>
    %cst_43 = arith.constant 0.353553385 : f32
    %64 = vector.broadcast %cst_43 : f32 to vector<8x8xf32>
    %65 = arith.mulf %63, %64 : vector<8x8xf32>
    %66 = arith.addf %65, %10 : vector<8x8xf32>
    %c1 = arith.constant 1 : index
    %c0_44 = arith.constant 0 : index
    %c0_45 = arith.constant 0 : index
    %67 = vector.load %arg8[%c1, %c0_44, %c0_45] : memref<4x8x1xf32, #tpu.memory_space<vmem>>, vector<1x8x1xf32>
    %68 = vector.shape_cast %67 : vector<1x8x1xf32> to vector<8x1xf32>
    %cst_46 = arith.constant dense<0xFF800000> : vector<8xf32>
    %69 = vector.multi_reduction <maximumf>, %66, %cst_46 [1] : vector<8x8xf32> to vector<8xf32>
    %70 = vector.shape_cast %69 : vector<8xf32> to vector<8x1xf32>
    %71 = arith.maximumf %68, %70 : vector<8x1xf32>
    %cst_47 = arith.constant 0xFF800000 : f32
    %72 = vector.broadcast %cst_47 : f32 to vector<8x1xf32>
    %73 = arith.cmpf oeq, %71, %72 : vector<8x1xf32>
    %cst_48 = arith.constant 0.000000e+00 : f32
    %74 = vector.broadcast %cst_48 : f32 to vector<8x1xf32>
    %75 = arith.select %73, %74, %71 : vector<8x1xi1>, vector<8x1xf32>
    %76 = arith.subf %68, %75 : vector<8x1xf32>
    %77 = math.exp %76 : vector<8x1xf32>
    %78 = vector.broadcast %75 : vector<8x1xf32> to vector<8x8xf32>
    %79 = arith.subf %66, %78 : vector<8x8xf32>
    %80 = math.exp %79 : vector<8x8xf32>
    %c1_49 = arith.constant 1 : index
    %c0_50 = arith.constant 0 : index
    %c0_51 = arith.constant 0 : index
    %81 = vector.load %arg9[%c1_49, %c0_50, %c0_51] : memref<4x8x1xf32, #tpu.memory_space<vmem>>, vector<1x8x1xf32>
    %82 = vector.shape_cast %81 : vector<1x8x1xf32> to vector<8x1xf32>
    %83 = arith.mulf %77, %82 : vector<8x1xf32>
    %cst_52 = arith.constant dense<0.000000e+00> : vector<8xf32>
    %84 = vector.multi_reduction <add>, %80, %cst_52 [1] : vector<8x8xf32> to vector<8xf32>
    %85 = vector.shape_cast %84 : vector<8xf32> to vector<8x1xf32>
    %86 = arith.addf %83, %85 : vector<8x1xf32>
    %c1_53 = arith.constant 1 : index
    %c0_54 = arith.constant 0 : index
    %c0_55 = arith.constant 0 : index
    %87 = vector.load %arg9[%c1_53, %c0_54, %c0_55] : memref<4x8x1xf32, #tpu.memory_space<vmem>>, vector<1x8x1xf32>
    %88 = vector.shape_cast %87 : vector<1x8x1xf32> to vector<8x1xf32>
    %89 = vector.shape_cast %86 : vector<8x1xf32> to vector<1x8x1xf32>
    tpu.vector_store %arg9[%c1_53, %c0_54, %c0_55], %89 {strides = array<i32>} : memref<4x8x1xf32, #tpu.memory_space<vmem>>, vector<1x8x1xf32>,
    %c1_56 = arith.constant 1 : index
    %c0_57 = arith.constant 0 : index
    %c0_58 = arith.constant 0 : index
    %90 = vector.load %arg10[%c1_56, %c0_57, %c0_58] : memref<4x8x8xf32, #tpu.memory_space<vmem>>, vector<1x8x8xf32>
    %91 = vector.shape_cast %90 : vector<1x8x8xf32> to vector<8x8xf32>
    %92 = vector.broadcast %77 : vector<8x1xf32> to vector<8x8xf32>
    %93 = arith.mulf %92, %91 : vector<8x8xf32>
    %94 = arith.truncf %80 : vector<8x8xf32> to vector<8x8xbf16>
    %cst_59 = arith.constant dense<0.000000e+00> : vector<8x8xf32>
    %95 = tpu.matmul %94, %62, %cst_59 {dimension_numbers = #tpu.dot_dimension_numbers<[1], [0], [0], [1], [0, 0, 1, 1], [], []>} : vector<8x8xbf16>, vector<8x8xbf16>, vector<8x8xf32> -> vector<8x8xf32>
    %96 = arith.addf %93, %95 : vector<8x8xf32>
    %c1_60 = arith.constant 1 : index
    %c0_61 = arith.constant 0 : index
    %c0_62 = arith.constant 0 : index
    %97 = vector.load %arg10[%c1_60, %c0_61, %c0_62] : memref<4x8x8xf32, #tpu.memory_space<vmem>>, vector<1x8x8xf32>
    %98 = vector.shape_cast %97 : vector<1x8x8xf32> to vector<8x8xf32>
    %99 = vector.shape_cast %96 : vector<8x8xf32> to vector<1x8x8xf32>
    tpu.vector_store %arg10[%c1_60, %c0_61, %c0_62], %99 {strides = array<i32>} : memref<4x8x8xf32, #tpu.memory_space<vmem>>, vector<1x8x8xf32>,
    %c1_63 = arith.constant 1 : index
    %c0_64 = arith.constant 0 : index
    %c0_65 = arith.constant 0 : index
    %100 = vector.load %arg8[%c1_63, %c0_64, %c0_65] : memref<4x8x1xf32, #tpu.memory_space<vmem>>, vector<1x8x1xf32>
    %101 = vector.shape_cast %100 : vector<1x8x1xf32> to vector<8x1xf32>
    %102 = vector.shape_cast %71 : vector<8x1xf32> to vector<1x8x1xf32>
    tpu.vector_store %arg8[%c1_63, %c0_64, %c0_65], %102 {strides = array<i32>} : memref<4x8x1xf32, #tpu.memory_space<vmem>>, vector<1x8x1xf32>,
    %103 = vector.extract_strided_slice %4 {offsets = [0, 2, 0], sizes = [8, 1, 8], strides = [1, 1, 1]} : vector<8x4x8xbf16> to vector<8x1x8xbf16>
    %104 = vector.shape_cast %103 : vector<8x1x8xbf16> to vector<8x8xbf16>
    %105 = vector.extract_strided_slice %6 {offsets = [0, 2, 0], sizes = [8, 1, 8], strides = [1, 1, 1]} : vector<8x4x8xbf16> to vector<8x1x8xbf16>
    %106 = vector.shape_cast %105 : vector<8x1x8xbf16> to vector<8x8xbf16>
    %107 = vector.extract_strided_slice %8 {offsets = [0, 2, 0], sizes = [8, 1, 8], strides = [1, 1, 1]} : vector<8x4x8xbf16> to vector<8x1x8xbf16>
    %108 = vector.shape_cast %107 : vector<8x1x8xbf16> to vector<8x8xbf16>
    %cst_66 = arith.constant dense<0.000000e+00> : vector<8x8xf32>
    %109 = tpu.matmul %104, %106, %cst_66 {dimension_numbers = #tpu.dot_dimension_numbers<[1], [1], [0], [0], [0, 0, 1, 0], [], []>} : vector<8x8xbf16>, vector<8x8xbf16>, vector<8x8xf32> -> vector<8x8xf32>
    %cst_67 = arith.constant 0.353553385 : f32
    %110 = vector.broadcast %cst_67 : f32 to vector<8x8xf32>
    %111 = arith.mulf %109, %110 : vector<8x8xf32>
    %112 = arith.addf %111, %10 : vector<8x8xf32>
    %c2 = arith.constant 2 : index
    %c0_68 = arith.constant 0 : index
    %c0_69 = arith.constant 0 : index
    %113 = vector.load %arg8[%c2, %c0_68, %c0_69] : memref<4x8x1xf32, #tpu.memory_space<vmem>>, vector<1x8x1xf32>
    %114 = vector.shape_cast %113 : vector<1x8x1xf32> to vector<8x1xf32>
    %cst_70 = arith.constant dense<0xFF800000> : vector<8xf32>
    %115 = vector.multi_reduction <maximumf>, %112, %cst_70 [1] : vector<8x8xf32> to vector<8xf32>
    %116 = vector.shape_cast %115 : vector<8xf32> to vector<8x1xf32>
    %117 = arith.maximumf %114, %116 : vector<8x1xf32>
    %cst_71 = arith.constant 0xFF800000 : f32
    %118 = vector.broadcast %cst_71 : f32 to vector<8x1xf32>
    %119 = arith.cmpf oeq, %117, %118 : vector<8x1xf32>
    %cst_72 = arith.constant 0.000000e+00 : f32
    %120 = vector.broadcast %cst_72 : f32 to vector<8x1xf32>
    %121 = arith.select %119, %120, %117 : vector<8x1xi1>, vector<8x1xf32>
    %122 = arith.subf %114, %121 : vector<8x1xf32>
    %123 = math.exp %122 : vector<8x1xf32>
    %124 = vector.broadcast %121 : vector<8x1xf32> to vector<8x8xf32>
    %125 = arith.subf %112, %124 : vector<8x8xf32>
    %126 = math.exp %125 : vector<8x8xf32>
    %c2_73 = arith.constant 2 : index
    %c0_74 = arith.constant 0 : index
    %c0_75 = arith.constant 0 : index
    %127 = vector.load %arg9[%c2_73, %c0_74, %c0_75] : memref<4x8x1xf32, #tpu.memory_space<vmem>>, vector<1x8x1xf32>
    %128 = vector.shape_cast %127 : vector<1x8x1xf32> to vector<8x1xf32>
    %129 = arith.mulf %123, %128 : vector<8x1xf32>
    %cst_76 = arith.constant dense<0.000000e+00> : vector<8xf32>
    %130 = vector.multi_reduction <add>, %126, %cst_76 [1] : vector<8x8xf32> to vector<8xf32>
    %131 = vector.shape_cast %130 : vector<8xf32> to vector<8x1xf32>
    %132 = arith.addf %129, %131 : vector<8x1xf32>
    %c2_77 = arith.constant 2 : index
    %c0_78 = arith.constant 0 : index
    %c0_79 = arith.constant 0 : index
    %133 = vector.load %arg9[%c2_77, %c0_78, %c0_79] : memref<4x8x1xf32, #tpu.memory_space<vmem>>, vector<1x8x1xf32>
    %134 = vector.shape_cast %133 : vector<1x8x1xf32> to vector<8x1xf32>
    %135 = vector.shape_cast %132 : vector<8x1xf32> to vector<1x8x1xf32>
    tpu.vector_store %arg9[%c2_77, %c0_78, %c0_79], %135 {strides = array<i32>} : memref<4x8x1xf32, #tpu.memory_space<vmem>>, vector<1x8x1xf32>,
    %c2_80 = arith.constant 2 : index
    %c0_81 = arith.constant 0 : index
    %c0_82 = arith.constant 0 : index
    %136 = vector.load %arg10[%c2_80, %c0_81, %c0_82] : memref<4x8x8xf32, #tpu.memory_space<vmem>>, vector<1x8x8xf32>
    %137 = vector.shape_cast %136 : vector<1x8x8xf32> to vector<8x8xf32>
    %138 = vector.broadcast %123 : vector<8x1xf32> to vector<8x8xf32>
    %139 = arith.mulf %138, %137 : vector<8x8xf32>
    %140 = arith.truncf %126 : vector<8x8xf32> to vector<8x8xbf16>
    %cst_83 = arith.constant dense<0.000000e+00> : vector<8x8xf32>
    %141 = tpu.matmul %140, %108, %cst_83 {dimension_numbers = #tpu.dot_dimension_numbers<[1], [0], [0], [1], [0, 0, 1, 1], [], []>} : vector<8x8xbf16>, vector<8x8xbf16>, vector<8x8xf32> -> vector<8x8xf32>
    %142 = arith.addf %139, %141 : vector<8x8xf32>
    %c2_84 = arith.constant 2 : index
    %c0_85 = arith.constant 0 : index
    %c0_86 = arith.constant 0 : index
    %143 = vector.load %arg10[%c2_84, %c0_85, %c0_86] : memref<4x8x8xf32, #tpu.memory_space<vmem>>, vector<1x8x8xf32>
    %144 = vector.shape_cast %143 : vector<1x8x8xf32> to vector<8x8xf32>
    %145 = vector.shape_cast %142 : vector<8x8xf32> to vector<1x8x8xf32>
    tpu.vector_store %arg10[%c2_84, %c0_85, %c0_86], %145 {strides = array<i32>} : memref<4x8x8xf32, #tpu.memory_space<vmem>>, vector<1x8x8xf32>,
    %c2_87 = arith.constant 2 : index
    %c0_88 = arith.constant 0 : index
    %c0_89 = arith.constant 0 : index
    %146 = vector.load %arg8[%c2_87, %c0_88, %c0_89] : memref<4x8x1xf32, #tpu.memory_space<vmem>>, vector<1x8x1xf32>
    %147 = vector.shape_cast %146 : vector<1x8x1xf32> to vector<8x1xf32>
    %148 = vector.shape_cast %117 : vector<8x1xf32> to vector<1x8x1xf32>
    tpu.vector_store %arg8[%c2_87, %c0_88, %c0_89], %148 {strides = array<i32>} : memref<4x8x1xf32, #tpu.memory_space<vmem>>, vector<1x8x1xf32>,
    %149 = vector.extract_strided_slice %4 {offsets = [0, 3, 0], sizes = [8, 1, 8], strides = [1, 1, 1]} : vector<8x4x8xbf16> to vector<8x1x8xbf16>
    %150 = vector.shape_cast %149 : vector<8x1x8xbf16> to vector<8x8xbf16>
    %151 = vector.extract_strided_slice %6 {offsets = [0, 3, 0], sizes = [8, 1, 8], strides = [1, 1, 1]} : vector<8x4x8xbf16> to vector<8x1x8xbf16>
    %152 = vector.shape_cast %151 : vector<8x1x8xbf16> to vector<8x8xbf16>
    %153 = vector.extract_strided_slice %8 {offsets = [0, 3, 0], sizes = [8, 1, 8], strides = [1, 1, 1]} : vector<8x4x8xbf16> to vector<8x1x8xbf16>
    %154 = vector.shape_cast %153 : vector<8x1x8xbf16> to vector<8x8xbf16>
    %cst_90 = arith.constant dense<0.000000e+00> : vector<8x8xf32>
    %155 = tpu.matmul %150, %152, %cst_90 {dimension_numbers = #tpu.dot_dimension_numbers<[1], [1], [0], [0], [0, 0, 1, 0], [], []>} : vector<8x8xbf16>, vector<8x8xbf16>, vector<8x8xf32> -> vector<8x8xf32>
    %cst_91 = arith.constant 0.353553385 : f32
    %156 = vector.broadcast %cst_91 : f32 to vector<8x8xf32>
    %157 = arith.mulf %155, %156 : vector<8x8xf32>
    %158 = arith.addf %157, %10 : vector<8x8xf32>
    %c3 = arith.constant 3 : index
    %c0_92 = arith.constant 0 : index
    %c0_93 = arith.constant 0 : index
    %159 = vector.load %arg8[%c3, %c0_92, %c0_93] : memref<4x8x1xf32, #tpu.memory_space<vmem>>, vector<1x8x1xf32>
    %160 = vector.shape_cast %159 : vector<1x8x1xf32> to vector<8x1xf32>
    %cst_94 = arith.constant dense<0xFF800000> : vector<8xf32>
    %161 = vector.multi_reduction <maximumf>, %158, %cst_94 [1] : vector<8x8xf32> to vector<8xf32>
    %162 = vector.shape_cast %161 : vector<8xf32> to vector<8x1xf32>
    %163 = arith.maximumf %160, %162 : vector<8x1xf32>
    %cst_95 = arith.constant 0xFF800000 : f32
    %164 = vector.broadcast %cst_95 : f32 to vector<8x1xf32>
    %165 = arith.cmpf oeq, %163, %164 : vector<8x1xf32>
    %cst_96 = arith.constant 0.000000e+00 : f32
    %166 = vector.broadcast %cst_96 : f32 to vector<8x1xf32>
    %167 = arith.select %165, %166, %163 : vector<8x1xi1>, vector<8x1xf32>
    %168 = arith.subf %160, %167 : vector<8x1xf32>
    %169 = math.exp %168 : vector<8x1xf32>
    %170 = vector.broadcast %167 : vector<8x1xf32> to vector<8x8xf32>
    %171 = arith.subf %158, %170 : vector<8x8xf32>
    %172 = math.exp %171 : vector<8x8xf32>
    %c3_97 = arith.constant 3 : index
    %c0_98 = arith.constant 0 : index
    %c0_99 = arith.constant 0 : index
    %173 = vector.load %arg9[%c3_97, %c0_98, %c0_99] : memref<4x8x1xf32, #tpu.memory_space<vmem>>, vector<1x8x1xf32>
    %174 = vector.shape_cast %173 : vector<1x8x1xf32> to vector<8x1xf32>
    %175 = arith.mulf %169, %174 : vector<8x1xf32>
    %cst_100 = arith.constant dense<0.000000e+00> : vector<8xf32>
    %176 = vector.multi_reduction <add>, %172, %cst_100 [1] : vector<8x8xf32> to vector<8xf32>
    %177 = vector.shape_cast %176 : vector<8xf32> to vector<8x1xf32>
    %178 = arith.addf %175, %177 : vector<8x1xf32>
    %c3_101 = arith.constant 3 : index
    %c0_102 = arith.constant 0 : index
    %c0_103 = arith.constant 0 : index
    %179 = vector.load %arg9[%c3_101, %c0_102, %c0_103] : memref<4x8x1xf32, #tpu.memory_space<vmem>>, vector<1x8x1xf32>
    %180 = vector.shape_cast %179 : vector<1x8x1xf32> to vector<8x1xf32>
    %181 = vector.shape_cast %178 : vector<8x1xf32> to vector<1x8x1xf32>
    tpu.vector_store %arg9[%c3_101, %c0_102, %c0_103], %181 {strides = array<i32>} : memref<4x8x1xf32, #tpu.memory_space<vmem>>, vector<1x8x1xf32>,
    %c3_104 = arith.constant 3 : index
    %c0_105 = arith.constant 0 : index
    %c0_106 = arith.constant 0 : index
    %182 = vector.load %arg10[%c3_104, %c0_105, %c0_106] : memref<4x8x8xf32, #tpu.memory_space<vmem>>, vector<1x8x8xf32>
    %183 = vector.shape_cast %182 : vector<1x8x8xf32> to vector<8x8xf32>
    %184 = vector.broadcast %169 : vector<8x1xf32> to vector<8x8xf32>
    %185 = arith.mulf %184, %183 : vector<8x8xf32>
    %186 = arith.truncf %172 : vector<8x8xf32> to vector<8x8xbf16>
    %cst_107 = arith.constant dense<0.000000e+00> : vector<8x8xf32>
    %187 = tpu.matmul %186, %154, %cst_107 {dimension_numbers = #tpu.dot_dimension_numbers<[1], [0], [0], [1], [0, 0, 1, 1], [], []>} : vector<8x8xbf16>, vector<8x8xbf16>, vector<8x8xf32> -> vector<8x8xf32>
    %188 = arith.addf %185, %187 : vector<8x8xf32>
    %c3_108 = arith.constant 3 : index
    %c0_109 = arith.constant 0 : index
    %c0_110 = arith.constant 0 : index
    %189 = vector.load %arg10[%c3_108, %c0_109, %c0_110] : memref<4x8x8xf32, #tpu.memory_space<vmem>>, vector<1x8x8xf32>
    %190 = vector.shape_cast %189 : vector<1x8x8xf32> to vector<8x8xf32>
    %191 = vector.shape_cast %188 : vector<8x8xf32> to vector<1x8x8xf32>
    tpu.vector_store %arg10[%c3_108, %c0_109, %c0_110], %191 {strides = array<i32>} : memref<4x8x8xf32, #tpu.memory_space<vmem>>, vector<1x8x8xf32>,
    %c3_111 = arith.constant 3 : index
    %c0_112 = arith.constant 0 : index
    %c0_113 = arith.constant 0 : index
    %192 = vector.load %arg8[%c3_111, %c0_112, %c0_113] : memref<4x8x1xf32, #tpu.memory_space<vmem>>, vector<1x8x1xf32>
    %193 = vector.shape_cast %192 : vector<1x8x1xf32> to vector<8x1xf32>
    %194 = vector.shape_cast %163 : vector<8x1xf32> to vector<1x8x1xf32>
    tpu.vector_store %arg8[%c3_111, %c0_112, %c0_113], %194 {strides = array<i32>} : memref<4x8x1xf32, #tpu.memory_space<vmem>>, vector<1x8x1xf32>,
    %c0_i32_114 = arith.constant 0 : i32
    %195 = arith.cmpi eq, %arg2, %c0_i32_114 : i32
    %196 = arith.extui %195 : i1 to i32
    %c0_i32_115 = arith.constant 0 : i32
    %197 = arith.cmpi ne, %196, %c0_i32_115 : i32
    scf.if %197 {
      %c0_116 = arith.constant 0 : index
      %c0_117 = arith.constant 0 : index
      %c0_118 = arith.constant 0 : index
      %198 = vector.load %arg9[%c0_116, %c0_117, %c0_118] : memref<4x8x1xf32, #tpu.memory_space<vmem>>, vector<1x8x1xf32>
      %199 = vector.shape_cast %198 : vector<1x8x1xf32> to vector<8x1xf32>
      %cst_119 = arith.constant 0.000000e+00 : f32
      %200 = vector.broadcast %cst_119 : f32 to vector<8x1xf32>
      %201 = arith.cmpf oeq, %199, %200 : vector<8x1xf32>
      %cst_120 = arith.constant 1.000000e+00 : f32
      %202 = vector.broadcast %cst_120 : f32 to vector<8x1xf32>
      %203 = arith.select %201, %202, %199 : vector<8x1xi1>, vector<8x1xf32>
      %c0_121 = arith.constant 0 : index
      %c0_122 = arith.constant 0 : index
      %c0_123 = arith.constant 0 : index
      %204 = vector.load %arg10[%c0_121, %c0_122, %c0_123] : memref<4x8x8xf32, #tpu.memory_space<vmem>>, vector<1x8x8xf32>
      %205 = vector.shape_cast %204 : vector<1x8x8xf32> to vector<8x8xf32>
      %206 = tpu.reciprocal %203 {approx = true} : vector<8x1xf32> -> vector<8x1xf32>
      %207 = vector.broadcast %206 : vector<8x1xf32> to vector<8x8xf32>
      %208 = arith.mulf %205, %207 : vector<8x8xf32>
      %209 = arith.truncf %208 : vector<8x8xf32> to vector<8x8xbf16>
      %c0_124 = arith.constant 0 : index
      %c0_125 = arith.constant 0 : index
      %c0_126 = arith.constant 0 : index
      %c0_127 = arith.constant 0 : index
      %210 = vector.load %arg7[%c0_124, %c0_125, %c0_126, %c0_127] : memref<1x8x4x8xbf16, #tpu.memory_space<vmem>>, vector<1x8x1x8xbf16>
      %211 = vector.shape_cast %210 : vector<1x8x1x8xbf16> to vector<8x8xbf16>
      %212 = vector.shape_cast %209 : vector<8x8xbf16> to vector<1x8x1x8xbf16>
      tpu.vector_store %arg7[%c0_124, %c0_125, %c0_126, %c0_127], %212 {strides = array<i32>} : memref<1x8x4x8xbf16, #tpu.memory_space<vmem>>, vector<1x8x1x8xbf16>,
      %c1_128 = arith.constant 1 : index
      %c0_129 = arith.constant 0 : index
      %c0_130 = arith.constant 0 : index
      %213 = vector.load %arg9[%c1_128, %c0_129, %c0_130] : memref<4x8x1xf32, #tpu.memory_space<vmem>>, vector<1x8x1xf32>
      %214 = vector.shape_cast %213 : vector<1x8x1xf32> to vector<8x1xf32>
      %cst_131 = arith.constant 0.000000e+00 : f32
      %215 = vector.broadcast %cst_131 : f32 to vector<8x1xf32>
      %216 = arith.cmpf oeq, %214, %215 : vector<8x1xf32>
      %cst_132 = arith.constant 1.000000e+00 : f32
      %217 = vector.broadcast %cst_132 : f32 to vector<8x1xf32>
      %218 = arith.select %216, %217, %214 : vector<8x1xi1>, vector<8x1xf32>
      %c1_133 = arith.constant 1 : index
      %c0_134 = arith.constant 0 : index
      %c0_135 = arith.constant 0 : index
      %219 = vector.load %arg10[%c1_133, %c0_134, %c0_135] : memref<4x8x8xf32, #tpu.memory_space<vmem>>, vector<1x8x8xf32>
      %220 = vector.shape_cast %219 : vector<1x8x8xf32> to vector<8x8xf32>
      %221 = tpu.reciprocal %218 {approx = true} : vector<8x1xf32> -> vector<8x1xf32>
      %222 = vector.broadcast %221 : vector<8x1xf32> to vector<8x8xf32>
      %223 = arith.mulf %220, %222 : vector<8x8xf32>
      %224 = arith.truncf %223 : vector<8x8xf32> to vector<8x8xbf16>
      %c0_136 = arith.constant 0 : index
      %c0_137 = arith.constant 0 : index
      %c1_138 = arith.constant 1 : index
      %c0_139 = arith.constant 0 : index
      %225 = vector.load %arg7[%c0_136, %c0_137, %c1_138, %c0_139] : memref<1x8x4x8xbf16, #tpu.memory_space<vmem>>, vector<1x8x1x8xbf16>
      %226 = vector.shape_cast %225 : vector<1x8x1x8xbf16> to vector<8x8xbf16>
      %227 = vector.shape_cast %224 : vector<8x8xbf16> to vector<1x8x1x8xbf16>
      tpu.vector_store %arg7[%c0_136, %c0_137, %c1_138, %c0_139], %227 {strides = array<i32>} : memref<1x8x4x8xbf16, #tpu.memory_space<vmem>>, vector<1x8x1x8xbf16>,
      %c2_140 = arith.constant 2 : index
      %c0_141 = arith.constant 0 : index
      %c0_142 = arith.constant 0 : index
      %228 = vector.load %arg9[%c2_140, %c0_141, %c0_142] : memref<4x8x1xf32, #tpu.memory_space<vmem>>, vector<1x8x1xf32>
      %229 = vector.shape_cast %228 : vector<1x8x1xf32> to vector<8x1xf32>
      %cst_143 = arith.constant 0.000000e+00 : f32
      %230 = vector.broadcast %cst_143 : f32 to vector<8x1xf32>
      %231 = arith.cmpf oeq, %229, %230 : vector<8x1xf32>
      %cst_144 = arith.constant 1.000000e+00 : f32
      %232 = vector.broadcast %cst_144 : f32 to vector<8x1xf32>
      %233 = arith.select %231, %232, %229 : vector<8x1xi1>, vector<8x1xf32>
      %c2_145 = arith.constant 2 : index
      %c0_146 = arith.constant 0 : index
      %c0_147 = arith.constant 0 : index
      %234 = vector.load %arg10[%c2_145, %c0_146, %c0_147] : memref<4x8x8xf32, #tpu.memory_space<vmem>>, vector<1x8x8xf32>
      %235 = vector.shape_cast %234 : vector<1x8x8xf32> to vector<8x8xf32>
      %236 = tpu.reciprocal %233 {approx = true} : vector<8x1xf32> -> vector<8x1xf32>
      %237 = vector.broadcast %236 : vector<8x1xf32> to vector<8x8xf32>
      %238 = arith.mulf %235, %237 : vector<8x8xf32>
      %239 = arith.truncf %238 : vector<8x8xf32> to vector<8x8xbf16>
      %c0_148 = arith.constant 0 : index
      %c0_149 = arith.constant 0 : index
      %c2_150 = arith.constant 2 : index
      %c0_151 = arith.constant 0 : index
      %240 = vector.load %arg7[%c0_148, %c0_149, %c2_150, %c0_151] : memref<1x8x4x8xbf16, #tpu.memory_space<vmem>>, vector<1x8x1x8xbf16>
      %241 = vector.shape_cast %240 : vector<1x8x1x8xbf16> to vector<8x8xbf16>
      %242 = vector.shape_cast %239 : vector<8x8xbf16> to vector<1x8x1x8xbf16>
      tpu.vector_store %arg7[%c0_148, %c0_149, %c2_150, %c0_151], %242 {strides = array<i32>} : memref<1x8x4x8xbf16, #tpu.memory_space<vmem>>, vector<1x8x1x8xbf16>,
      %c3_152 = arith.constant 3 : index
      %c0_153 = arith.constant 0 : index
      %c0_154 = arith.constant 0 : index
      %243 = vector.load %arg9[%c3_152, %c0_153, %c0_154] : memref<4x8x1xf32, #tpu.memory_space<vmem>>, vector<1x8x1xf32>
      %244 = vector.shape_cast %243 : vector<1x8x1xf32> to vector<8x1xf32>
      %cst_155 = arith.constant 0.000000e+00 : f32
      %245 = vector.broadcast %cst_155 : f32 to vector<8x1xf32>
      %246 = arith.cmpf oeq, %244, %245 : vector<8x1xf32>
      %cst_156 = arith.constant 1.000000e+00 : f32
      %247 = vector.broadcast %cst_156 : f32 to vector<8x1xf32>
      %248 = arith.select %246, %247, %244 : vector<8x1xi1>, vector<8x1xf32>
      %c3_157 = arith.constant 3 : index
      %c0_158 = arith.constant 0 : index
      %c0_159 = arith.constant 0 : index
      %249 = vector.load %arg10[%c3_157, %c0_158, %c0_159] : memref<4x8x8xf32, #tpu.memory_space<vmem>>, vector<1x8x8xf32>
      %250 = vector.shape_cast %249 : vector<1x8x8xf32> to vector<8x8xf32>
      %251 = tpu.reciprocal %248 {approx = true} : vector<8x1xf32> -> vector<8x1xf32>
      %252 = vector.broadcast %251 : vector<8x1xf32> to vector<8x8xf32>
      %253 = arith.mulf %250, %252 : vector<8x8xf32>
      %254 = arith.truncf %253 : vector<8x8xf32> to vector<8x8xbf16>
      %c0_160 = arith.constant 0 : index
      %c0_161 = arith.constant 0 : index
      %c3_162 = arith.constant 3 : index
      %c0_163 = arith.constant 0 : index
      %255 = vector.load %arg7[%c0_160, %c0_161, %c3_162, %c0_163] : memref<1x8x4x8xbf16, #tpu.memory_space<vmem>>, vector<1x8x1x8xbf16>
      %256 = vector.shape_cast %255 : vector<1x8x1x8xbf16> to vector<8x8xbf16>
      %257 = vector.shape_cast %254 : vector<8x8xbf16> to vector<1x8x1x8xbf16>
      tpu.vector_store %arg7[%c0_160, %c0_161, %c3_162, %c0_163], %257 {strides = array<i32>} : memref<1x8x4x8xbf16, #tpu.memory_space<vmem>>, vector<1x8x1x8xbf16>,
    } else {
    }
    return
  }
  func.func @transform_0(%arg0: i32, %arg1: i32, %arg2: i32) -> (i32, i32, i32, i32, i32) {
    %c0_i32 = arith.constant 0 : i32
    %c0_i32_0 = arith.constant 0 : i32
    %c0_i32_1 = arith.constant 0 : i32
    %c0_i32_2 = arith.constant 0 : i32
    return %arg1, %arg0, %c0_i32, %c0_i32_0, %c0_i32_1 : i32, i32, i32, i32, i32
  }
  func.func @transform_1(%arg0: i32, %arg1: i32, %arg2: i32) -> (i32, i32, i32, i32, i32) {
    %c1_i32 = arith.constant 1 : i32
    %c0_i32 = arith.constant 0 : i32
    %c0_i32_0 = arith.constant 0 : i32
    %c0_i32_1 = arith.constant 0 : i32
    return %arg2, %arg0, %c1_i32, %c0_i32, %c0_i32_0 : i32, i32, i32, i32, i32
  }
  func.func @transform_2(%arg0: i32, %arg1: i32, %arg2: i32) -> (i32, i32, i32, i32, i32) {
    %c2_i32 = arith.constant 2 : i32
    %c0_i32 = arith.constant 0 : i32
    %c0_i32_0 = arith.constant 0 : i32
    %c0_i32_1 = arith.constant 0 : i32
    return %arg2, %arg0, %c2_i32, %c0_i32, %c0_i32_0 : i32, i32, i32, i32, i32
  }
  func.func @transform_3(%arg0: i32, %arg1: i32, %arg2: i32) -> (i32, i32, i32) {
    %c0_i32 = arith.constant 0 : i32
    return %arg0, %arg1, %arg2 : i32, i32, i32
  }
  func.func @transform_4(%arg0: i32, %arg1: i32, %arg2: i32) -> (i32, i32, i32, i32) {
    %c0_i32 = arith.constant 0 : i32
    %c0_i32_0 = arith.constant 0 : i32
    %c0_i32_1 = arith.constant 0 : i32
    return %arg0, %arg1, %c0_i32, %c0_i32_0 : i32, i32, i32, i32
  }
}

module attributes {stable_mosaic.version = 11 : i64} {
  func.func @_linear_kernel(%arg0: i32, %arg1: i32, %arg2: i32, %arg3: memref<16x32xbf16, #tpu.memory_space<vmem>>, %arg4: memref<32x32xbf16, #tpu.memory_space<vmem>>, %arg5: memref<1x32xf32, #tpu.memory_space<vmem>>, %arg6: memref<16x32xbf16, #tpu.memory_space<vmem>>, %arg7: memref<16x32xf32, #tpu.memory_space<vmem>>) attributes {dimension_semantics = [#tpu.dimension_semantics<parallel>, #tpu.dimension_semantics<parallel>, #tpu.dimension_semantics<arbitrary>], iteration_bounds = array<i64: 1, 1, 1>, scalar_prefetch = 0 : i64, scratch_operands = 1 : i64, tpu.core_type = #tpu.core_type<tc>, window_params = [{transform_indices = @transform_0, window_bounds = array<i64: 16, 32>}, {transform_indices = @transform_1, window_bounds = array<i64: 32, 32>}, {transform_indices = @transform_2, window_bounds = array<i64: 1, 32>}, {transform_indices = @transform_3, window_bounds = array<i64: 16, 32>}]} {
    %c0_i32 = arith.constant 0 : i32
    %0 = arith.cmpi eq, %arg2, %c0_i32 : i32
    %1 = arith.extui %0 : i1 to i32
    %c0_i32_0 = arith.constant 0 : i32
    %2 = arith.cmpi ne, %1, %c0_i32_0 : i32
    scf.if %2 {
      %cst_10 = arith.constant 0.000000e+00 : f32
      %12 = vector.broadcast %cst_10 : f32 to vector<16x32xf32>
      %c0_11 = arith.constant 0 : index
      %c0_12 = arith.constant 0 : index
      %13 = vector.load %arg7[%c0_11, %c0_12] : memref<16x32xf32, #tpu.memory_space<vmem>>, vector<16x32xf32>
      tpu.vector_store %arg7[%c0_11, %c0_12], %12 {strides = array<i32>} : memref<16x32xf32, #tpu.memory_space<vmem>>, vector<16x32xf32>,
    } else {
    }
    %c0 = arith.constant 0 : index
    %c0_1 = arith.constant 0 : index
    %3 = vector.load %arg7[%c0, %c0_1] : memref<16x32xf32, #tpu.memory_space<vmem>>, vector<16x32xf32>
    %c0_2 = arith.constant 0 : index
    %c0_3 = arith.constant 0 : index
    %4 = vector.load %arg3[%c0_2, %c0_3] : memref<16x32xbf16, #tpu.memory_space<vmem>>, vector<16x32xbf16>
    %c0_4 = arith.constant 0 : index
    %c0_5 = arith.constant 0 : index
    %5 = vector.load %arg4[%c0_4, %c0_5] : memref<32x32xbf16, #tpu.memory_space<vmem>>, vector<32x32xbf16>
    %cst = arith.constant dense<0.000000e+00> : vector<16x32xf32>
    %6 = tpu.matmul %4, %5, %cst {dimension_numbers = #tpu.dot_dimension_numbers<[1], [0], [0], [1], [0, 0, 1, 1], [], []>} : vector<16x32xbf16>, vector<32x32xbf16>, vector<16x32xf32> -> vector<16x32xf32>
    %7 = arith.addf %3, %6 : vector<16x32xf32>
    %c0_6 = arith.constant 0 : index
    %c0_7 = arith.constant 0 : index
    %8 = vector.load %arg7[%c0_6, %c0_7] : memref<16x32xf32, #tpu.memory_space<vmem>>, vector<16x32xf32>
    tpu.vector_store %arg7[%c0_6, %c0_7], %7 {strides = array<i32>} : memref<16x32xf32, #tpu.memory_space<vmem>>, vector<16x32xf32>,
    %c0_i32_8 = arith.constant 0 : i32
    %9 = arith.cmpi eq, %arg2, %c0_i32_8 : i32
    %10 = arith.extui %9 : i1 to i32
    %c0_i32_9 = arith.constant 0 : i32
    %11 = arith.cmpi ne, %10, %c0_i32_9 : i32
    scf.if %11 {
      %c0_10 = arith.constant 0 : index
      %c0_11 = arith.constant 0 : index
      %12 = vector.load %arg7[%c0_10, %c0_11] : memref<16x32xf32, #tpu.memory_space<vmem>>, vector<16x32xf32>
      %c0_12 = arith.constant 0 : index
      %c0_13 = arith.constant 0 : index
      %13 = vector.load %arg5[%c0_12, %c0_13] : memref<1x32xf32, #tpu.memory_space<vmem>>, vector<1x32xf32>
      %14 = vector.broadcast %13 : vector<1x32xf32> to vector<16x32xf32>
      %15 = arith.addf %12, %14 : vector<16x32xf32>
      %16 = arith.truncf %15 : vector<16x32xf32> to vector<16x32xbf16>
      %c0_14 = arith.constant 0 : index
      %c0_15 = arith.constant 0 : index
      %17 = vector.load %arg6[%c0_14, %c0_15] : memref<16x32xbf16, #tpu.memory_space<vmem>>, vector<16x32xbf16>
      tpu.vector_store %arg6[%c0_14, %c0_15], %16 {strides = array<i32>} : memref<16x32xbf16, #tpu.memory_space<vmem>>, vector<16x32xbf16>,
    } else {
    }
    return
  }
  func.func @transform_0(%arg0: i32, %arg1: i32, %arg2: i32) -> (i32, i32) {
    %c0_i32 = arith.constant 0 : i32
    return %arg0, %arg2 : i32, i32
  }
  func.func @transform_1(%arg0: i32, %arg1: i32, %arg2: i32) -> (i32, i32) {
    %c0_i32 = arith.constant 0 : i32
    return %arg2, %arg1 : i32, i32
  }
  func.func @transform_2(%arg0: i32, %arg1: i32, %arg2: i32) -> (i32, i32) {
    %c0_i32 = arith.constant 0 : i32
    %c0_i32_0 = arith.constant 0 : i32
    return %c0_i32, %arg1 : i32, i32
  }
  func.func @transform_3(%arg0: i32, %arg1: i32, %arg2: i32) -> (i32, i32) {
    %c0_i32 = arith.constant 0 : i32
    return %arg0, %arg1 : i32, i32
  }
}

module attributes {stable_mosaic.version = 11 : i64} {
  func.func @_mlp_kernel(%arg0: i32, %arg1: i32, %arg2: memref<16x32xbf16, #tpu.memory_space<vmem>>, %arg3: memref<32x128xbf16, #tpu.memory_space<vmem>>, %arg4: memref<1x128xf32, #tpu.memory_space<vmem>>, %arg5: memref<128x32xbf16, #tpu.memory_space<vmem>>, %arg6: memref<1x32xf32, #tpu.memory_space<vmem>>, %arg7: memref<16x32xf32, #tpu.memory_space<vmem>>, %arg8: memref<16x32xf32, #tpu.memory_space<vmem>>) attributes {dimension_semantics = [#tpu.dimension_semantics<parallel>, #tpu.dimension_semantics<arbitrary>], iteration_bounds = array<i64: 1, 1>, scalar_prefetch = 0 : i64, scratch_operands = 1 : i64, tpu.core_type = #tpu.core_type<tc>, window_params = [{transform_indices = @transform_0, window_bounds = array<i64: 16, 32>}, {transform_indices = @transform_1, window_bounds = array<i64: 32, 128>}, {transform_indices = @transform_2, window_bounds = array<i64: 1, 128>}, {transform_indices = @transform_3, window_bounds = array<i64: 128, 32>}, {pipeline_mode = #tpu.pipeline_mode<synchronous>, transform_indices = @transform_4, window_bounds = array<i64: 1, 32>}, {transform_indices = @transform_5, window_bounds = array<i64: 16, 32>}]} {
    %c0_i32 = arith.constant 0 : i32
    %0 = arith.cmpi eq, %arg1, %c0_i32 : i32
    %1 = arith.extui %0 : i1 to i32
    %c0_i32_0 = arith.constant 0 : i32
    %2 = arith.cmpi ne, %1, %c0_i32_0 : i32
    scf.if %2 {
      %cst_19 = arith.constant 0.000000e+00 : f32
      %31 = vector.broadcast %cst_19 : f32 to vector<16x32xf32>
      %c0_20 = arith.constant 0 : index
      %c0_21 = arith.constant 0 : index
      %32 = vector.load %arg8[%c0_20, %c0_21] : memref<16x32xf32, #tpu.memory_space<vmem>>, vector<16x32xf32>
      tpu.vector_store %arg8[%c0_20, %c0_21], %31 {strides = array<i32>} : memref<16x32xf32, #tpu.memory_space<vmem>>, vector<16x32xf32>,
    } else {
    }
    %c0 = arith.constant 0 : index
    %c0_1 = arith.constant 0 : index
    %3 = vector.load %arg2[%c0, %c0_1] : memref<16x32xbf16, #tpu.memory_space<vmem>>, vector<16x32xbf16>
    %c0_2 = arith.constant 0 : index
    %c0_3 = arith.constant 0 : index
    %4 = vector.load %arg3[%c0_2, %c0_3] : memref<32x128xbf16, #tpu.memory_space<vmem>>, vector<32x128xbf16>
    %cst = arith.constant dense<0.000000e+00> : vector<16x128xf32>
    %5 = tpu.matmul %3, %4, %cst {dimension_numbers = #tpu.dot_dimension_numbers<[1], [0], [0], [1], [0, 0, 1, 1], [], []>} : vector<16x32xbf16>, vector<32x128xbf16>, vector<16x128xf32> -> vector<16x128xf32>
    %c0_4 = arith.constant 0 : index
    %c0_5 = arith.constant 0 : index
    %6 = vector.load %arg4[%c0_4, %c0_5] : memref<1x128xf32, #tpu.memory_space<vmem>>, vector<1x128xf32>
    %7 = vector.broadcast %6 : vector<1x128xf32> to vector<16x128xf32>
    %8 = arith.addf %5, %7 : vector<16x128xf32>
    %9 = arith.mulf %8, %8 : vector<16x128xf32>
    %10 = arith.mulf %8, %9 : vector<16x128xf32>
    %cst_6 = arith.constant 4.471500e-02 : f32
    %11 = vector.broadcast %cst_6 : f32 to vector<16x128xf32>
    %12 = arith.mulf %11, %10 : vector<16x128xf32>
    %13 = arith.addf %8, %12 : vector<16x128xf32>
    %cst_7 = arith.constant 0.797884583 : f32
    %14 = vector.broadcast %cst_7 : f32 to vector<16x128xf32>
    %15 = arith.mulf %14, %13 : vector<16x128xf32>
    %16 = math.tanh %15 : vector<16x128xf32>
    %cst_8 = arith.constant 1.000000e+00 : f32
    %17 = vector.broadcast %cst_8 : f32 to vector<16x128xf32>
    %18 = arith.addf %17, %16 : vector<16x128xf32>
    %cst_9 = arith.constant 5.000000e-01 : f32
    %19 = vector.broadcast %cst_9 : f32 to vector<16x128xf32>
    %20 = arith.mulf %19, %18 : vector<16x128xf32>
    %21 = arith.mulf %8, %20 : vector<16x128xf32>
    %c0_10 = arith.constant 0 : index
    %c0_11 = arith.constant 0 : index
    %22 = vector.load %arg8[%c0_10, %c0_11] : memref<16x32xf32, #tpu.memory_space<vmem>>, vector<16x32xf32>
    %23 = arith.truncf %21 : vector<16x128xf32> to vector<16x128xbf16>
    %c0_12 = arith.constant 0 : index
    %c0_13 = arith.constant 0 : index
    %24 = vector.load %arg5[%c0_12, %c0_13] : memref<128x32xbf16, #tpu.memory_space<vmem>>, vector<128x32xbf16>
    %cst_14 = arith.constant dense<0.000000e+00> : vector<16x32xf32>
    %25 = tpu.matmul %23, %24, %cst_14 {dimension_numbers = #tpu.dot_dimension_numbers<[1], [0], [0], [1], [0, 0, 1, 1], [], []>} : vector<16x128xbf16>, vector<128x32xbf16>, vector<16x32xf32> -> vector<16x32xf32>
    %26 = arith.addf %22, %25 : vector<16x32xf32>
    %c0_15 = arith.constant 0 : index
    %c0_16 = arith.constant 0 : index
    %27 = vector.load %arg8[%c0_15, %c0_16] : memref<16x32xf32, #tpu.memory_space<vmem>>, vector<16x32xf32>
    tpu.vector_store %arg8[%c0_15, %c0_16], %26 {strides = array<i32>} : memref<16x32xf32, #tpu.memory_space<vmem>>, vector<16x32xf32>,
    %c0_i32_17 = arith.constant 0 : i32
    %28 = arith.cmpi eq, %arg1, %c0_i32_17 : i32
    %29 = arith.extui %28 : i1 to i32
    %c0_i32_18 = arith.constant 0 : i32
    %30 = arith.cmpi ne, %29, %c0_i32_18 : i32
    scf.if %30 {
      %c0_19 = arith.constant 0 : index
      %c0_20 = arith.constant 0 : index
      %31 = vector.load %arg8[%c0_19, %c0_20] : memref<16x32xf32, #tpu.memory_space<vmem>>, vector<16x32xf32>
      %c0_21 = arith.constant 0 : index
      %c0_22 = arith.constant 0 : index
      %32 = vector.load %arg6[%c0_21, %c0_22] : memref<1x32xf32, #tpu.memory_space<vmem>>, vector<1x32xf32>
      %33 = vector.broadcast %32 : vector<1x32xf32> to vector<16x32xf32>
      %34 = arith.addf %31, %33 : vector<16x32xf32>
      %c0_23 = arith.constant 0 : index
      %c0_24 = arith.constant 0 : index
      %35 = vector.load %arg7[%c0_23, %c0_24] : memref<16x32xf32, #tpu.memory_space<vmem>>, vector<16x32xf32>
      tpu.vector_store %arg7[%c0_23, %c0_24], %34 {strides = array<i32>} : memref<16x32xf32, #tpu.memory_space<vmem>>, vector<16x32xf32>,
    } else {
    }
    return
  }
  func.func @transform_0(%arg0: i32, %arg1: i32) -> (i32, i32) {
    %c0_i32 = arith.constant 0 : i32
    %c0_i32_0 = arith.constant 0 : i32
    return %arg0, %c0_i32 : i32, i32
  }
  func.func @transform_1(%arg0: i32, %arg1: i32) -> (i32, i32) {
    %c0_i32 = arith.constant 0 : i32
    %c0_i32_0 = arith.constant 0 : i32
    return %c0_i32, %arg1 : i32, i32
  }
  func.func @transform_2(%arg0: i32, %arg1: i32) -> (i32, i32) {
    %c0_i32 = arith.constant 0 : i32
    %c0_i32_0 = arith.constant 0 : i32
    return %c0_i32, %arg1 : i32, i32
  }
  func.func @transform_3(%arg0: i32, %arg1: i32) -> (i32, i32) {
    %c0_i32 = arith.constant 0 : i32
    %c0_i32_0 = arith.constant 0 : i32
    return %arg1, %c0_i32 : i32, i32
  }
  func.func @transform_4(%arg0: i32, %arg1: i32) -> (i32, i32) {
    %c0_i32 = arith.constant 0 : i32
    %c0_i32_0 = arith.constant 0 : i32
    %c0_i32_1 = arith.constant 0 : i32
    return %c0_i32, %c0_i32_0 : i32, i32
  }
  func.func @transform_5(%arg0: i32, %arg1: i32) -> (i32, i32) {
    %c0_i32 = arith.constant 0 : i32
    %c0_i32_0 = arith.constant 0 : i32
    return %arg0, %c0_i32 : i32, i32
  }
}

</mosaic_0001>

<llo_original>
// kernel: transformer_layer.4
$region0: #{transformer_layer.4}
  #allocation0 [shape = 'u32[]', space=smem, size = 0x4, offset = 0x4, fixed_abs, tag = 'smem constant byte address 0x4 - core index']
  #allocation1 [shape = 'u32[144,128]{1,0:T(1,128)}', space=vmem, size = 0x12000, scoped, tag = 'internal scratch']
  #allocation2 [shape = 'f32[16,96]{1,0:T(8,128)}', space=vmem, size = 0x2000, scoped, tag = 'scratch operand']
  %s0 = inlined_call_operand.vmem [shape: f32[16,32], index: 0, kind: input, shape index: {}]
  %s1 = inlined_call_operand.hbm [shape: bf16[32,96], index: 1, kind: input, shape index: {}]
  %s2 = inlined_call_operand.vmem [shape: f32[1,96], index: 2, kind: input, shape index: {}]
  %s3 = inlined_call_operand.vmem [shape: bf16[16,96], index: 3, kind: output, shape index: {}]
  %s4 = sld [smem:[#allocation0]]
  $region34: #{transformer_layer.4} parent=0
    _
  %s6 = ssub.s32 1, %s4
  %s7 = scalar_select 0, %s6, %s4
  $region1: #{transformer_layer.4} parent=0
    #allocation3 [shape = 'u8[8192]{0}', space=vmem, size = 0x2000, scoped, tag = 'input window, operand 1, single buffered']
    #allocation4 [shape = 's32[1]{0}', space=sflag, size = 0x4, scoped, tag = 'scoped memory for transformer_layer.4']
    %8 = vsyncpa [#allocation4], 0
    // Predicated region
    $region2: #{transformer_layer.4} parent=1 // pred_check
      _
    $region3: #{transformer_layer.4} parent=1 // pred_check_branch
      %10 = sbr.rel (0) target = $region5
    $region4: #{transformer_layer.4} parent=1 // pred_region
      _
    $region5: #{transformer_layer.4} parent=1 // pred_fallthru
      _
    // Predicated region
    $region6: #{transformer_layer.4} parent=1 // pred_check
      _
    $region7: #{transformer_layer.4} parent=1 // pred_check_branch
      %12 = sbr.rel (0) target = $region9
    $region8: #{transformer_layer.4} parent=1 // pred_region
      %s14 = ssub.s32 256, 256
      %15 = vsyncadd [#allocation4], %s14
      %s16 = sshll.u32 [#allocation3], 4
      %s17 = int_to_ptr.vmem [resolvable:$true] %s16
      %22 = dma.hbm_to_vmem [thread:$0]  %s1, 256, %s17, [#allocation4], 64, 64, 4
    $region9: #{transformer_layer.4} parent=1 // pred_fallthru
      _
    // Predicated region
    $region10: #{transformer_layer.4} parent=1 // pred_check
      _
    $region11: #{transformer_layer.4} parent=1 // pred_check_branch
      %24 = sbr.rel (0) target = $region13
    $region12: #{transformer_layer.4} parent=1 // pred_region
      _
    $region13: #{transformer_layer.4} parent=1 // pred_fallthru
      _
    // Predicated region
    $region14: #{transformer_layer.4} parent=1 // pred_check
      _
    $region15: #{transformer_layer.4} parent=1 // pred_check_branch
      %26 = sbr.rel (0) target = $region17
    $region16: #{transformer_layer.4} parent=1 // pred_region
      %27 = dma.done [#allocation4], 256
    $region17: #{transformer_layer.4} parent=1 // pred_fallthru
      _
    %p29 = scmp.eq.s32.totalorder 0, 0
    // Predicated region
    $region18: #{transformer_layer.4} parent=1 // pred_check
      %p30 = pneg %p29
    $region19: #{transformer_layer.4} parent=1 // pred_check_branch
      %32 = sbr.rel (%p30) target = $region21
    $region20: #{transformer_layer.4} parent=1 // pred_region
      %vm33 = vcmask 785408
      %34 = vst.msk [vmem:[#allocation2] sm:$0xff] %vm33, 0.0
      %35 = vst.msk [vmem:[#allocation2 + $0x8] sm:$0xff] %vm33, 0.0
    $region21: #{transformer_layer.4} parent=1 // pred_fallthru
      _
    %v36 = vld [vmem:[#allocation2] sm:$0xff]
    %v37 = vld [vmem:[#allocation2 + $0x8] sm:$0xff]
    %v38 = vld [vmem:[%s0] sm:$0xff]
    %v39 = vld [vmem:[%s0 + $0x8] sm:$0xff]
    %v40 = vpack.c.bf16 %v39, %v38
    %v41 = vld [vmem:[#allocation3] sm:$0xf]
    %v42 = vld [vmem:[#allocation3 + $0x4] sm:$0xf]
    %v43 = vld [vmem:[#allocation3 + $0x8] sm:$0xf]
    %v44 = vld [vmem:[#allocation3 + $0xc] sm:$0xf]
    %v49 = vunpack.c.l.b16 %v41
    %v50 = vunpack.c.l.b16 %v42
    %v51 = vunpack.c.l.b16 %v43
    %v52 = vunpack.c.l.b16 %v44
    %v53 = vpack.c.b16 %v50, %v49
    %v54 = vpack.c.b16 %v52, %v51
    %vm57 = vcmask 261120
    %v59 = vsel %vm57, %v40, 0
    %61 = vmatprep.subr.bf16.mxu0 0
    %62 = vmatpush1.bf16.msra.mxu0 0
    %63 = vmatprep.subr.bf16.mxu0 0
    %64 = vmatpush1.bf16.msra.mxu0 0
    %65 = vmatprep.subr.bf16.mxu0 0
    %66 = vmatpush1.bf16.msra.mxu0 0
    %67 = vmatprep.subr.bf16.mxu0 0
    %68 = vmatpush1.bf16.msra.mxu0 0
    %69 = vmatprep.subr.bf16.mxu0 0
    %70 = vmatpush1.bf16.msra.mxu0 0
    %71 = vmatprep.subr.bf16.mxu0 0
    %72 = vmatpush1.bf16.msra.mxu0 0
    %73 = vmatprep.subr.bf16.mxu0 0
    %74 = vmatpush1.bf16.msra.mxu0 %v54
    %75 = vmatprep.subr.bf16.mxu0 0
    %76 = vmatpush1.bf16.msra.mxu0 %v53
    %77 = vmatprep.subr.bf16.mxu0 0
    %78 = vmatpush2.bf16.msra.mxu0 0
    %79 = vmatprep.subr.bf16.mxu0 0
    %80 = vmatpush2.bf16.msra.mxu0 0
    %81 = vmatprep.subr.bf16.mxu0 0
    %82 = vmatpush2.bf16.msra.mxu0 0
    %83 = vmatprep.subr.bf16.mxu0 0
    %84 = vmatpush2.bf16.msra.mxu0 0
    %85 = vmatprep.subr.bf16.mxu0 0
    %86 = vmatpush2.bf16.msra.mxu0 0
    %87 = vmatprep.subr.bf16.mxu0 0
    %88 = vmatpush2.bf16.msra.mxu0 0
    %89 = vmatprep.subr.bf16.mxu0 0
    %90 = vmatpush2.bf16.msra.mxu0 0
    %91 = vmatprep.subr.bf16.mxu0 0
    %92 = vmatpush2.bf16.msra.mxu0 0
    %93 = vmatprep.mubr.bf16.mxu0 0
    %94 = vmatmul.mubr.bf16.gmra.mxu0 %v59
    %v95 = vpop.f32.mrf.mxu0
    %v96 = vadd.f32 0.0, %v95
    %v97 = vpop.f32.mrf.mxu0
    %v98 = vpop.f32.mrf.mxu0
    %v99 = vadd.f32 0.0, %v98
    %v100 = vpop.f32.mrf.mxu0
    %101 = vdwg.mxu0
    %v102 = vadd.f32 %v36, %v96
    %v103 = vadd.f32 %v37, %v99
    %vm104 = vcmask 785408
    %105 = vst.msk [vmem:[#allocation2] sm:$0xff] %vm104, %v102
    %106 = vst.msk [vmem:[#allocation2 + $0x8] sm:$0xff] %vm104, %v103
    // Predicated region
    $region22: #{transformer_layer.4} parent=1 // pred_check
      %p107 = pneg %p29
    $region23: #{transformer_layer.4} parent=1 // pred_check_branch
      %109 = sbr.rel (%p107) target = $region25
    $region24: #{transformer_layer.4} parent=1 // pred_region
      %v110 = vld [vmem:[#allocation2] sm:$0xff]
      %v111 = vld [vmem:[#allocation2 + $0x8] sm:$0xff]
      %v112 = vld [vmem:[%s2] sm:$0x1]
      %v114 = vlaneseq
      %v115 = vshrl.u32 %v114, 7
      %v116 = vsub.s32 0, %v115
      %v117 = vrot.slane %v112, %v116
      %v119 = vadd.f32 %v110, %v117
      %v120 = vadd.f32 %v111, %v117
      %v121 = vpack.c.bf16 %v120, %v119
      %v123 = vunpack.c.l.b16 %v121
      %v124 = vunpack.c.h.b16 %v121
      %v125 = vpack.c.b16 %v123, %v123
      %v126 = vpack.c.b16 %v124, %v124
      %vm129 = vcmask 781312
      %130 = vst.msk [vmem:[%s3] sm:$0xf] %vm129, %v125
      %131 = vst.msk [vmem:[%s3 + $0x4] sm:$0xf] %vm129, %v126
    $region25: #{transformer_layer.4} parent=1 // pred_fallthru
      _
    // Predicated region
    $region26: #{transformer_layer.4} parent=1 // pred_check
      _
    $region27: #{transformer_layer.4} parent=1 // pred_check_branch
      %133 = sbr.rel (0) target = $region29
    $region28: #{transformer_layer.4} parent=1 // pred_region
      _
    $region29: #{transformer_layer.4} parent=1 // pred_fallthru
      _
    // Predicated region
    $region30: #{transformer_layer.4} parent=1 // pred_check
      _
    $region31: #{transformer_layer.4} parent=1 // pred_check_branch
      %135 = sbr.rel (0) target = $region33
    $region32: #{transformer_layer.4} parent=1 // pred_region
      _
    $region33: #{transformer_layer.4} parent=1 // pred_fallthru
      _
    %136 = vsyncpa [#allocation4], 1

// kernel: transformer_layer.6
$region0: #{transformer_layer.6}
  #allocation0 [shape = 'u32[]', space=smem, size = 0x4, offset = 0x4, fixed_abs, tag = 'smem constant byte address 0x4 - core index']
  #allocation1 [shape = 'u32[144,128]{1,0:T(1,128)}', space=vmem, size = 0x12000, scoped, tag = 'internal scratch']
  #allocation2 [shape = 'f32[16,32]{1,0:T(8,128)}', space=vmem, size = 0x2000, scoped, tag = 'scratch operand']
  %s0 = inlined_call_operand.vmem [shape: bf16[16,32], index: 0, kind: input, shape index: {}]
  %s1 = inlined_call_operand.vmem [shape: bf16[32,32], index: 1, kind: input, shape index: {}]
  %s2 = inlined_call_operand.vmem [shape: f32[1,32], index: 2, kind: input, shape index: {}]
  %s3 = inlined_call_operand.vmem [shape: bf16[16,32], index: 3, kind: output, shape index: {}]
  %s4 = sld [smem:[#allocation0]]
  $region30: #{transformer_layer.6} parent=0
    _
  %s6 = ssub.s32 1, %s4
  %s7 = scalar_select 0, %s6, %s4
  // Predicated region
  $region2: #{transformer_layer.6} parent=0 // pred_check
    _
  $region3: #{transformer_layer.6} parent=0 // pred_check_branch
    %9 = sbr.rel (0) target = $region5
  $region4: #{transformer_layer.6} parent=0 // pred_region
    _
  $region5: #{transformer_layer.6} parent=0 // pred_fallthru
    _
  // Predicated region
  $region6: #{transformer_layer.6} parent=0 // pred_check
    _
  $region7: #{transformer_layer.6} parent=0 // pred_check_branch
    %11 = sbr.rel (0) target = $region9
  $region8: #{transformer_layer.6} parent=0 // pred_region
    _
  $region9: #{transformer_layer.6} parent=0 // pred_fallthru
    _
  // Predicated region
  $region10: #{transformer_layer.6} parent=0 // pred_check
    _
  $region11: #{transformer_layer.6} parent=0 // pred_check_branch
    %13 = sbr.rel (0) target = $region13
  $region12: #{transformer_layer.6} parent=0 // pred_region
    _
  $region13: #{transformer_layer.6} parent=0 // pred_fallthru
    _
  %p15 = scmp.eq.s32.totalorder 0, 0
  // Predicated region
  $region14: #{transformer_layer.6} parent=0 // pred_check
    %p16 = pneg %p15
  $region15: #{transformer_layer.6} parent=0 // pred_check_branch
    %18 = sbr.rel (%p16) target = $region17
  $region16: #{transformer_layer.6} parent=0 // pred_region
    %vm19 = vcmask 261120
    %20 = vst.msk [vmem:[#allocation2] sm:$0xff] %vm19, 0.0
    %21 = vst.msk [vmem:[#allocation2 + $0x8] sm:$0xff] %vm19, 0.0
  $region17: #{transformer_layer.6} parent=0 // pred_fallthru
    _
  %v22 = vld [vmem:[#allocation2] sm:$0xff]
  %v23 = vld [vmem:[#allocation2 + $0x8] sm:$0xff]
  %v24 = vld [vmem:[%s0] sm:$0xf]
  %v25 = vld [vmem:[%s0 + $0x4] sm:$0xf]
  %v26 = vld [vmem:[%s1] sm:$0xf]
  %v27 = vld [vmem:[%s1 + $0x4] sm:$0xf]
  %v28 = vld [vmem:[%s1 + $0x8] sm:$0xf]
  %v29 = vld [vmem:[%s1 + $0xc] sm:$0xf]
  %v32 = vunpack.c.l.b16 %v24
  %v33 = vunpack.c.l.b16 %v25
  %v34 = vpack.c.b16 %v33, %v32
  %v39 = vunpack.c.l.b16 %v26
  %v40 = vunpack.c.l.b16 %v27
  %v41 = vunpack.c.l.b16 %v28
  %v42 = vunpack.c.l.b16 %v29
  %v43 = vpack.c.b16 %v40, %v39
  %v44 = vpack.c.b16 %v42, %v41
  %vm47 = vcmask 261120
  %v49 = vsel %vm47, %v34, 0
  %51 = vmatprep.subr.bf16.mxu0 0
  %52 = vmatpush1.bf16.msra.mxu0 0
  %53 = vmatprep.subr.bf16.mxu0 0
  %54 = vmatpush1.bf16.msra.mxu0 0
  %55 = vmatprep.subr.bf16.mxu0 0
  %56 = vmatpush1.bf16.msra.mxu0 0
  %57 = vmatprep.subr.bf16.mxu0 0
  %58 = vmatpush1.bf16.msra.mxu0 0
  %59 = vmatprep.subr.bf16.mxu0 0
  %60 = vmatpush1.bf16.msra.mxu0 0
  %61 = vmatprep.subr.bf16.mxu0 0
  %62 = vmatpush1.bf16.msra.mxu0 0
  %63 = vmatprep.subr.bf16.mxu0 0
  %64 = vmatpush1.bf16.msra.mxu0 %v44
  %65 = vmatprep.subr.bf16.mxu0 0
  %66 = vmatpush1.bf16.msra.mxu0 %v43
  %67 = vmatprep.subr.bf16.mxu0 0
  %68 = vmatpush2.bf16.msra.mxu0 0
  %69 = vmatprep.subr.bf16.mxu0 0
  %70 = vmatpush2.bf16.msra.mxu0 0
  %71 = vmatprep.subr.bf16.mxu0 0
  %72 = vmatpush2.bf16.msra.mxu0 0
  %73 = vmatprep.subr.bf16.mxu0 0
  %74 = vmatpush2.bf16.msra.mxu0 0
  %75 = vmatprep.subr.bf16.mxu0 0
  %76 = vmatpush2.bf16.msra.mxu0 0
  %77 = vmatprep.subr.bf16.mxu0 0
  %78 = vmatpush2.bf16.msra.mxu0 0
  %79 = vmatprep.subr.bf16.mxu0 0
  %80 = vmatpush2.bf16.msra.mxu0 0
  %81 = vmatprep.subr.bf16.mxu0 0
  %82 = vmatpush2.bf16.msra.mxu0 0
  %83 = vmatprep.mubr.bf16.mxu0 0
  %84 = vmatmul.mubr.bf16.gmra.mxu0 %v49
  %v85 = vpop.f32.mrf.mxu0
  %v86 = vadd.f32 0.0, %v85
  %v87 = vpop.f32.mrf.mxu0
  %v88 = vpop.f32.mrf.mxu0
  %v89 = vadd.f32 0.0, %v88
  %v90 = vpop.f32.mrf.mxu0
  %91 = vdwg.mxu0
  %v92 = vadd.f32 %v22, %v86
  %v93 = vadd.f32 %v23, %v89
  %94 = vst.msk [vmem:[#allocation2] sm:$0xff] %vm47, %v92
  %95 = vst.msk [vmem:[#allocation2 + $0x8] sm:$0xff] %vm47, %v93
  // Predicated region
  $region18: #{transformer_layer.6} parent=0 // pred_check
    %p96 = pneg %p15
  $region19: #{transformer_layer.6} parent=0 // pred_check_branch
    %98 = sbr.rel (%p96) target = $region21
  $region20: #{transformer_layer.6} parent=0 // pred_region
    %v99 = vld [vmem:[#allocation2] sm:$0xff]
    %v100 = vld [vmem:[#allocation2 + $0x8] sm:$0xff]
    %v101 = vld [vmem:[%s2] sm:$0x1]
    %v103 = vlaneseq
    %v104 = vshrl.u32 %v103, 7
    %v105 = vsub.s32 0, %v104
    %v106 = vrot.slane %v101, %v105
    %v108 = vadd.f32 %v99, %v106
    %v109 = vadd.f32 %v100, %v106
    %v110 = vpack.c.bf16 %v109, %v108
    %v112 = vunpack.c.l.b16 %v110
    %v113 = vunpack.c.h.b16 %v110
    %v114 = vpack.c.b16 %v112, %v112
    %v115 = vpack.c.b16 %v113, %v113
    %vm118 = vcmask 257024
    %119 = vst.msk [vmem:[%s3] sm:$0xf] %vm118, %v114
    %120 = vst.msk [vmem:[%s3 + $0x4] sm:$0xf] %vm118, %v115
  $region21: #{transformer_layer.6} parent=0 // pred_fallthru
    _
  // Predicated region
  $region22: #{transformer_layer.6} parent=0 // pred_check
    _
  $region23: #{transformer_layer.6} parent=0 // pred_check_branch
    %122 = sbr.rel (0) target = $region25
  $region24: #{transformer_layer.6} parent=0 // pred_region
    _
  $region25: #{transformer_layer.6} parent=0 // pred_fallthru
    _
  // Predicated region
  $region26: #{transformer_layer.6} parent=0 // pred_check
    _
  $region27: #{transformer_layer.6} parent=0 // pred_check_branch
    %124 = sbr.rel (0) target = $region29
  $region28: #{transformer_layer.6} parent=0 // pred_region
    _
  $region29: #{transformer_layer.6} parent=0 // pred_fallthru
    _

// kernel: transformer_layer.7
$region0: #{transformer_layer.7}
  #allocation0 [shape = 'u32[]', space=smem, size = 0x4, offset = 0x4, fixed_abs, tag = 'smem constant byte address 0x4 - core index']
  #allocation1 [shape = 'u32[144,128]{1,0:T(1,128)}', space=vmem, size = 0x12000, scoped, tag = 'internal scratch']
  #allocation2 [shape = 'f32[16,32]{1,0:T(8,128)}', space=vmem, size = 0x2000, scoped, tag = 'scratch operand']
  %s0 = inlined_call_operand.vmem [shape: bf16[16,32], index: 0, kind: input, shape index: {}]
  %s1 = inlined_call_operand.vmem [shape: bf16[32,128], index: 1, kind: input, shape index: {}]
  %s2 = inlined_call_operand.vmem [shape: f32[1,128], index: 2, kind: input, shape index: {}]
  %s3 = inlined_call_operand.vmem [shape: bf16[128,32], index: 3, kind: input, shape index: {}]
  %s4 = inlined_call_operand.vmem [shape: f32[1,32], index: 4, kind: input, shape index: {}]
  %s5 = inlined_call_operand.hbm [shape: f32[16,32], index: 5, kind: output, shape index: {}]
  %s6 = sld [smem:[#allocation0]]
  $region38: #{transformer_layer.7} parent=0
    _
  %s8 = ssub.s32 1, %s6
  %s9 = scalar_select 0, %s8, %s6
  $region1: #{transformer_layer.7} parent=0
    #allocation3 [shape = 'u8[8192]{0}', space=vmem, size = 0x2000, scoped, tag = 'output window, operand 0, single buffered']
    #allocation4 [shape = 's32[1]{0}', space=sflag, size = 0x4, scoped, tag = 'scoped memory for transformer_layer.7']
    %10 = vsyncpa [#allocation4], 0
    // Predicated region
    $region2: #{transformer_layer.7} parent=1 // pred_check
      _
    $region3: #{transformer_layer.7} parent=1 // pred_check_branch
      %12 = sbr.rel (0) target = $region5
    $region4: #{transformer_layer.7} parent=1 // pred_region
      _
    $region5: #{transformer_layer.7} parent=1 // pred_fallthru
      _
    // Predicated region
    $region6: #{transformer_layer.7} parent=1 // pred_check
      _
    $region7: #{transformer_layer.7} parent=1 // pred_check_branch
      %14 = sbr.rel (0) target = $region9
    $region8: #{transformer_layer.7} parent=1 // pred_region
      _
    $region9: #{transformer_layer.7} parent=1 // pred_fallthru
      _
    // Predicated region
    $region10: #{transformer_layer.7} parent=1 // pred_check
      _
    $region11: #{transformer_layer.7} parent=1 // pred_check_branch
      %16 = sbr.rel (0) target = $region13
    $region12: #{transformer_layer.7} parent=1 // pred_region
      _
    $region13: #{transformer_layer.7} parent=1 // pred_fallthru
      _
    // Predicated region
    $region14: #{transformer_layer.7} parent=1 // pred_check
      _
    $region15: #{transformer_layer.7} parent=1 // pred_check_branch
      %18 = sbr.rel (0) target = $region17
    $region16: #{transformer_layer.7} parent=1 // pred_region
      _
    $region17: #{transformer_layer.7} parent=1 // pred_fallthru
      _
    // Predicated region
    $region18: #{transformer_layer.7} parent=1 // pred_check
      _
    $region19: #{transformer_layer.7} parent=1 // pred_check_branch
      %20 = sbr.rel (0) target = $region21
    $region20: #{transformer_layer.7} parent=1 // pred_region
      _
    $region21: #{transformer_layer.7} parent=1 // pred_fallthru
      _
    %p22 = scmp.eq.s32.totalorder 0, 0
    // Predicated region
    $region22: #{transformer_layer.7} parent=1 // pred_check
      %p23 = pneg %p22
    $region23: #{transformer_layer.7} parent=1 // pred_check_branch
      %25 = sbr.rel (%p23) target = $region25
    $region24: #{transformer_layer.7} parent=1 // pred_region
      %vm26 = vcmask 261120
      %27 = vst.msk [vmem:[#allocation2] sm:$0xff] %vm26, 0.0
      %28 = vst.msk [vmem:[#allocation2 + $0x8] sm:$0xff] %vm26, 0.0
    $region25: #{transformer_layer.7} parent=1 // pred_fallthru
      _
    %v29 = vld [vmem:[%s0] sm:$0xf]
    %v30 = vld [vmem:[%s0 + $0x4] sm:$0xf]
    %v31 = vld [vmem:[%s1] sm:$0xf]
    %v32 = vld [vmem:[%s1 + $0x4] sm:$0xf]
    %v33 = vld [vmem:[%s1 + $0x8] sm:$0xf]
    %v34 = vld [vmem:[%s1 + $0xc] sm:$0xf]
    %v35 = vld [vmem:[%s2] sm:$0x1]
    %v37 = vlaneseq
    %v38 = vshrl.u32 %v37, 7
    %v39 = vsub.s32 0, %v38
    %v40 = vrot.slane %v35, %v39
    %v44 = vunpack.c.l.b16 %v29
    %v45 = vunpack.c.l.b16 %v30
    %v46 = vpack.c.b16 %v45, %v44
    %v51 = vunpack.c.l.b16 %v31
    %v52 = vunpack.c.l.b16 %v32
    %v53 = vunpack.c.l.b16 %v33
    %v54 = vunpack.c.l.b16 %v34
    %v55 = vpack.c.b16 %v52, %v51
    %v56 = vpack.c.b16 %v54, %v53
    %vm59 = vcmask 261120
    %v61 = vsel %vm59, %v46, 0
    %63 = vmatprep.subr.bf16.mxu0 0
    %64 = vmatpush1.bf16.msra.mxu0 0
    %65 = vmatprep.subr.bf16.mxu0 0
    %66 = vmatpush1.bf16.msra.mxu0 0
    %67 = vmatprep.subr.bf16.mxu0 0
    %68 = vmatpush1.bf16.msra.mxu0 0
    %69 = vmatprep.subr.bf16.mxu0 0
    %70 = vmatpush1.bf16.msra.mxu0 0
    %71 = vmatprep.subr.bf16.mxu0 0
    %72 = vmatpush1.bf16.msra.mxu0 0
    %73 = vmatprep.subr.bf16.mxu0 0
    %74 = vmatpush1.bf16.msra.mxu0 0
    %75 = vmatprep.subr.bf16.mxu0 0
    %76 = vmatpush1.bf16.msra.mxu0 %v56
    %77 = vmatprep.subr.bf16.mxu0 0
    %78 = vmatpush1.bf16.msra.mxu0 %v55
    %79 = vmatprep.subr.bf16.mxu0 0
    %80 = vmatpush2.bf16.msra.mxu0 0
    %81 = vmatprep.subr.bf16.mxu0 0
    %82 = vmatpush2.bf16.msra.mxu0 0
    %83 = vmatprep.subr.bf16.mxu0 0
    %84 = vmatpush2.bf16.msra.mxu0 0
    %85 = vmatprep.subr.bf16.mxu0 0
    %86 = vmatpush2.bf16.msra.mxu0 0
    %87 = vmatprep.subr.bf16.mxu0 0
    %88 = vmatpush2.bf16.msra.mxu0 0
    %89 = vmatprep.subr.bf16.mxu0 0
    %90 = vmatpush2.bf16.msra.mxu0 0
    %91 = vmatprep.subr.bf16.mxu0 0
    %92 = vmatpush2.bf16.msra.mxu0 0
    %93 = vmatprep.subr.bf16.mxu0 0
    %94 = vmatpush2.bf16.msra.mxu0 0
    %95 = vmatprep.mubr.bf16.mxu0 0
    %96 = vmatmul.mubr.bf16.gmra.mxu0 %v61
    %v97 = vpop.f32.mrf.mxu0
    %v98 = vadd.f32 %v40, %v97
    %v99 = vpop.f32.mrf.mxu0
    %v100 = vpop.f32.mrf.mxu0
    %v101 = vadd.f32 %v40, %v100
    %v102 = vpop.f32.mrf.mxu0
    %103 = vdwg.mxu0
    %v104 = vmul.f32 %v98, %v98
    %v105 = vmul.f32 %v101, %v101
    %v106 = vmul.f32 %v98, %v104
    %v107 = vmul.f32 %v101, %v105
    %v108 = vmul.f32 %v106, 0.044715
    %v109 = vmul.f32 %v107, 0.044715
    %v110 = vadd.f32 %v98, %v108
    %v111 = vadd.f32 %v101, %v109
    %v112 = vmul.f32 %v110, 0.7978846
    %v113 = vmul.f32 %v111, 0.7978846
    %v114 = vtanh.pop %v112
    %v115 = vtanh.pop %v113
    %v116 = vadd.f32 %v114, 1.0
    %v117 = vadd.f32 %v115, 1.0
    %v118 = vmul.f32 %v116, 0.5
    %v119 = vmul.f32 %v117, 0.5
    %v120 = vmul.f32 %v98, %v118
    %v121 = vmul.f32 %v101, %v119
    %v122 = vld [vmem:[#allocation2] sm:$0xff]
    %v123 = vld [vmem:[#allocation2 + $0x8] sm:$0xff]
    %v124 = vpack.c.bf16 %v121, %v120
    %v125 = vld [vmem:[%s3] sm:$0xf]
    %v126 = vld [vmem:[%s3 + $0x4] sm:$0xf]
    %v127 = vld [vmem:[%s3 + $0x8] sm:$0xf]
    %v128 = vld [vmem:[%s3 + $0xc] sm:$0xf]
    %v129 = vld [vmem:[%s3 + $0x10] sm:$0xf]
    %v130 = vld [vmem:[%s3 + $0x14] sm:$0xf]
    %v131 = vld [vmem:[%s3 + $0x18] sm:$0xf]
    %v132 = vld [vmem:[%s3 + $0x1c] sm:$0xf]
    %v133 = vld [vmem:[%s3 + $0x20] sm:$0xf]
    %v134 = vld [vmem:[%s3 + $0x24] sm:$0xf]
    %v135 = vld [vmem:[%s3 + $0x28] sm:$0xf]
    %v136 = vld [vmem:[%s3 + $0x2c] sm:$0xf]
    %v137 = vld [vmem:[%s3 + $0x30] sm:$0xf]
    %v138 = vld [vmem:[%s3 + $0x34] sm:$0xf]
    %v139 = vld [vmem:[%s3 + $0x38] sm:$0xf]
    %v140 = vld [vmem:[%s3 + $0x3c] sm:$0xf]
    %v157 = vunpack.c.l.b16 %v125
    %v158 = vunpack.c.l.b16 %v126
    %v159 = vunpack.c.l.b16 %v127
    %v160 = vunpack.c.l.b16 %v128
    %v161 = vunpack.c.l.b16 %v129
    %v162 = vunpack.c.l.b16 %v130
    %v163 = vunpack.c.l.b16 %v131
    %v164 = vunpack.c.l.b16 %v132
    %v165 = vunpack.c.l.b16 %v133
    %v166 = vunpack.c.l.b16 %v134
    %v167 = vunpack.c.l.b16 %v135
    %v168 = vunpack.c.l.b16 %v136
    %v169 = vunpack.c.l.b16 %v137
    %v170 = vunpack.c.l.b16 %v138
    %v171 = vunpack.c.l.b16 %v139
    %v172 = vunpack.c.l.b16 %v140
    %v173 = vpack.c.b16 %v158, %v157
    %v174 = vpack.c.b16 %v160, %v159
    %v175 = vpack.c.b16 %v162, %v161
    %v176 = vpack.c.b16 %v164, %v163
    %v177 = vpack.c.b16 %v166, %v165
    %v178 = vpack.c.b16 %v168, %v167
    %v179 = vpack.c.b16 %v170, %v169
    %v180 = vpack.c.b16 %v172, %v171
    %189 = vmatprep.subr.bf16.mxu0 0
    %190 = vmatpush1.bf16.msra.mxu0 %v180
    %191 = vmatprep.subr.bf16.mxu0 0
    %192 = vmatpush1.bf16.msra.mxu0 %v179
    %193 = vmatprep.subr.bf16.mxu0 0
    %194 = vmatpush1.bf16.msra.mxu0 %v178
    %195 = vmatprep.subr.bf16.mxu0 0
    %196 = vmatpush1.bf16.msra.mxu0 %v177
    %197 = vmatprep.subr.bf16.mxu0 0
    %198 = vmatpush1.bf16.msra.mxu0 %v176
    %199 = vmatprep.subr.bf16.mxu0 0
    %200 = vmatpush1.bf16.msra.mxu0 %v175
    %201 = vmatprep.subr.bf16.mxu0 0
    %202 = vmatpush1.bf16.msra.mxu0 %v174
    %203 = vmatprep.subr.bf16.mxu0 0
    %204 = vmatpush1.bf16.msra.mxu0 %v173
    %205 = vmatprep.subr.bf16.mxu0 0
    %206 = vmatpush2.bf16.msra.mxu0 0
    %207 = vmatprep.subr.bf16.mxu0 0
    %208 = vmatpush2.bf16.msra.mxu0 0
    %209 = vmatprep.subr.bf16.mxu0 0
    %210 = vmatpush2.bf16.msra.mxu0 0
    %211 = vmatprep.subr.bf16.mxu0 0
    %212 = vmatpush2.bf16.msra.mxu0 0
    %213 = vmatprep.subr.bf16.mxu0 0
    %214 = vmatpush2.bf16.msra.mxu0 0
    %215 = vmatprep.subr.bf16.mxu0 0
    %216 = vmatpush2.bf16.msra.mxu0 0
    %217 = vmatprep.subr.bf16.mxu0 0
    %218 = vmatpush2.bf16.msra.mxu0 0
    %219 = vmatprep.subr.bf16.mxu0 0
    %220 = vmatpush2.bf16.msra.mxu0 0
    %221 = vmatprep.mubr.bf16.mxu0 0
    %222 = vmatmul.mubr.bf16.gmra.mxu0 %v124
    %v223 = vpop.f32.mrf.mxu0
    %v224 = vadd.f32 0.0, %v223
    %v225 = vpop.f32.mrf.mxu0
    %v226 = vpop.f32.mrf.mxu0
    %v227 = vadd.f32 0.0, %v226
    %v228 = vpop.f32.mrf.mxu0
    %229 = vdwg.mxu0
    %v230 = vadd.f32 %v122, %v224
    %v231 = vadd.f32 %v123, %v227
    %232 = vst.msk [vmem:[#allocation2] sm:$0xff] %vm59, %v230
    %233 = vst.msk [vmem:[#allocation2 + $0x8] sm:$0xff] %vm59, %v231
    // Predicated region
    $region26: #{transformer_layer.7} parent=1 // pred_check
      %p234 = pneg %p22
    $region27: #{transformer_layer.7} parent=1 // pred_check_branch
      %236 = sbr.rel (%p234) target = $region29
    $region28: #{transformer_layer.7} parent=1 // pred_region
      %v237 = vld [vmem:[#allocation2] sm:$0xff]
      %v238 = vld [vmem:[#allocation2 + $0x8] sm:$0xff]
      %v239 = vld [vmem:[%s4] sm:$0x1]
      %v241 = vlaneseq
      %v242 = vshrl.u32 %v241, 7
      %v243 = vsub.s32 0, %v242
      %v244 = vrot.slane %v239, %v243
      %v246 = vadd.f32 %v237, %v244
      %v247 = vadd.f32 %v238, %v244
      %248 = vst.msk [vmem:[#allocation3] sm:$0xff] %vm59, %v246
      %249 = vst.msk [vmem:[#allocation3 + $0x8] sm:$0xff] %vm59, %v247
    $region29: #{transformer_layer.7} parent=1 // pred_fallthru
      _
    // Predicated region
    $region30: #{transformer_layer.7} parent=1 // pred_check
      _
    $region31: #{transformer_layer.7} parent=1 // pred_check_branch
      %251 = sbr.rel (0) target = $region33
    $region32: #{transformer_layer.7} parent=1 // pred_region
      %s253 = ssub.s32 256, 256
      %254 = vsyncadd [#allocation4], %s253
      %s255 = sshll.u32 [#allocation3], 4
      %s256 = int_to_ptr.vmem [resolvable:$true] %s255
      %261 = dma.vmem_to_hbm [thread:$0]  %s256, 256, %s5, [#allocation4], 128, 128, 8
    $region33: #{transformer_layer.7} parent=1 // pred_fallthru
      _
    // Predicated region
    $region34: #{transformer_layer.7} parent=1 // pred_check
      _
    $region35: #{transformer_layer.7} parent=1 // pred_check_branch
      %263 = sbr.rel (0) target = $region37
    $region36: #{transformer_layer.7} parent=1 // pred_region
      %264 = dma.done [#allocation4], 256
    $region37: #{transformer_layer.7} parent=1 // pred_fallthru
      _
    %265 = vsyncpa [#allocation4], 1

// kernel: transformer_layer.5
$region0: #{transformer_layer.5}
  #allocation0 [shape = 'u32[]', space=smem, size = 0x4, offset = 0x4, fixed_abs, tag = 'smem constant byte address 0x4 - core index']
  #allocation1 [shape = 'u32[144,128]{1,0:T(1,128)}', space=vmem, size = 0x12000, scoped, tag = 'internal scratch']
  #allocation2 [shape = 'f32[4,8,1]{2,1,0:T(8,128)}', space=vmem, size = 0x4000, scoped, tag = 'scratch operand']
  #allocation3 [shape = 'f32[4,8,1]{2,1,0:T(8,128)}', space=vmem, size = 0x4000, scoped, tag = 'scratch operand']
  #allocation4 [shape = 'f32[4,8,8]{2,1,0:T(8,128)}', space=vmem, size = 0x4000, scoped, tag = 'scratch operand']
  %s0 = inlined_call_operand.vmem [shape: bf16[8,2,3,4,8], index: 0, kind: input, shape index: {}, may-alias: {0,1,2}]
  %s1 = inlined_call_operand.vmem [shape: bf16[8,2,3,4,8], index: 1, kind: input, shape index: {}, may-alias: {0,1,2}]
  %s2 = inlined_call_operand.vmem [shape: bf16[8,2,3,4,8], index: 2, kind: input, shape index: {}, may-alias: {0,1,2}]
  %s3 = inlined_call_operand.vmem [shape: f32[2,8,8], index: 3, kind: input, shape index: {}]
  %s4 = inlined_call_operand.vmem [shape: bf16[2,8,4,8], index: 4, kind: output, shape index: {}]
  %s5 = sld [smem:[#allocation0]]
  $region180: #{transformer_layer.5} parent=0
    _
  %s7 = ssub.s32 1, %s5
  %s8 = scalar_select 0, %s7, %s5
  $region1: #{transformer_layer.5} parent=0
    #allocation5 [shape = 'u8[16384]{0}', space=vmem, size = 0x4000, scoped, tag = 'input window, operand 0']
    #allocation6 [shape = 'u8[16384]{0}', space=vmem, size = 0x4000, scoped, tag = 'input window, operand 1']
    #allocation7 [shape = 'u8[16384]{0}', space=vmem, size = 0x4000, scoped, tag = 'input window, operand 2']
    loop: start=0, step=1, limit=4
    $region2: #{transformer_layer.5} parent=1 // loop_pre_header
      _
    $region3: #{transformer_layer.5} parent=1 // loop_header
      %s10 = sphi 0, %s14
      %p11 = scmp.ge.s32.totalorder %s10, 4
      %s17 = sphi 0, %s36
      %s18 = sphi 0, %s32
      %s19 = sphi 0, %s28
      %s20 = sphi 0, %s17
      %s21 = sphi 0, %s18
      %s22 = sphi 0, %s19
      %s23 = sphi 0, %s20
      %s24 = sphi 0, %s21
      %s25 = sphi 0, %s22
      %s41 = sphi 0, %s43
      %s44 = sphi 0, %s41
      %s45 = sphi 0, %s44
      %s61 = sphi 0, %s45
      %s69 = sphi 0, %s71
      %s72 = sphi 0, %s69
      %s73 = sphi 0, %s72
      %s89 = sphi 0, %s73
      %s97 = sphi 0, %s99
      %s100 = sphi 0, %s97
      %s101 = sphi 0, %s100
      %s117 = sphi 0, %s101
      %s127 = sphi 0, %s129
      %s130 = sphi 0, %s127
      %s131 = sphi 0, %s130
      %s147 = sphi 0, %s131
      %s155 = sphi 0, %s157
      %s158 = sphi 0, %s155
      %s159 = sphi 0, %s158
      %s175 = sphi 0, %s159
    $region4: #{transformer_layer.5} parent=1 // loop_header_branch
      %13 = sbr.rel (%p11) target = $region8
    $region5: #{transformer_layer.5} parent=1 // loop_body
      %s15 = ssub.s32 %s10, 1
      %s16 = ssub.s32 %s10, 2
      %s26 = sadd.s32 1, %s19
      %p27 = scmp.ge.s32.totalorder %s26, 1
      %s28 = scalar_select %p27, 0, %s26
      %s29 = sadd.s32 1, %s18
      %s30 = scalar_select %p27, %s29, %s18
      %p31 = scmp.ge.s32.totalorder %s30, 1
      %s32 = scalar_select %p31, 0, %s30
      %s33 = sadd.s32 1, %s17
      %s34 = scalar_select %p31, %s33, %s17
      %p35 = scmp.ge.s32.totalorder %s34, 2
      %s36 = scalar_select %p35, 0, %s34
      %s37 = ssub.s32 %s18, %s32
      %s38 = ssub.s32 %s17, %s36
      %s39 = sor.u32 %s37, %s38
      %p40 = scmp.eq.s32.totalorder %s39, 0
      %s42 = sadd.s32 %s41, 1
      %s43 = scalar_select %p40, %s41, %s42
      %p46 = pneg %p40
      %p47 = scmp.eq.s32.totalorder %s10, 1
      %p48 = por %p46, %p47
      %p49 = scmp.ne.s32.totalorder %s41, %s44
      %p50 = scmp.eq.s32.totalorder %s10, 0
      %p51 = por %p49, %p50
      %p52 = scmp.ne.s32.totalorder %s41, %s44
      %p53 = scmp.eq.s32.totalorder %s15, 1
      %p54 = por %p52, %p53
      %p55 = scmp.ne.s32.totalorder %s44, %s45
      %p56 = scmp.eq.s32.totalorder %s15, 0
      %p57 = por %p55, %p56
      %p58 = scmp.ne.s32.totalorder %s44, %s45
      %p59 = scmp.eq.s32.totalorder %s16, 1
      %p60 = por %p58, %p59
      %p62 = scmp.ne.s32.totalorder %s45, %s61
      %p63 = scmp.eq.s32.totalorder %s16, 0
      %p64 = por %p62, %p63
      %s65 = ssub.s32 %s19, %s28
      %s66 = ssub.s32 %s17, %s36
      %s67 = sor.u32 %s65, %s66
      %p68 = scmp.eq.s32.totalorder %s67, 0
      %s70 = sadd.s32 %s69, 1
      %s71 = scalar_select %p68, %s69, %s70
      %p74 = pneg %p68
      %p75 = scmp.eq.s32.totalorder %s10, 1
      %p76 = por %p74, %p75
      %p77 = scmp.ne.s32.totalorder %s69, %s72
      %p78 = scmp.eq.s32.totalorder %s10, 0
      %p79 = por %p77, %p78
      %p80 = scmp.ne.s32.totalorder %s69, %s72
      %p81 = scmp.eq.s32.totalorder %s15, 1
      %p82 = por %p80, %p81
      %p83 = scmp.ne.s32.totalorder %s72, %s73
      %p84 = scmp.eq.s32.totalorder %s15, 0
      %p85 = por %p83, %p84
      %p86 = scmp.ne.s32.totalorder %s72, %s73
      %p87 = scmp.eq.s32.totalorder %s16, 1
      %p88 = por %p86, %p87
      %p90 = scmp.ne.s32.totalorder %s73, %s89
      %p91 = scmp.eq.s32.totalorder %s16, 0
      %p92 = por %p90, %p91
      %s93 = ssub.s32 %s19, %s28
      %s94 = ssub.s32 %s17, %s36
      %s95 = sor.u32 %s93, %s94
      %p96 = scmp.eq.s32.totalorder %s95, 0
      %s98 = sadd.s32 %s97, 1
      %s99 = scalar_select %p96, %s97, %s98
      %p102 = pneg %p96
      %p103 = scmp.eq.s32.totalorder %s10, 1
      %p104 = por %p102, %p103
      %p105 = scmp.ne.s32.totalorder %s97, %s100
      %p106 = scmp.eq.s32.totalorder %s10, 0
      %p107 = por %p105, %p106
      %p108 = scmp.ne.s32.totalorder %s97, %s100
      %p109 = scmp.eq.s32.totalorder %s15, 1
      %p110 = por %p108, %p109
      %p111 = scmp.ne.s32.totalorder %s100, %s101
      %p112 = scmp.eq.s32.totalorder %s15, 0
      %p113 = por %p111, %p112
      %p114 = scmp.ne.s32.totalorder %s100, %s101
      %p115 = scmp.eq.s32.totalorder %s16, 1
      %p116 = por %p114, %p115
      %p118 = scmp.ne.s32.totalorder %s101, %s117
      %p119 = scmp.eq.s32.totalorder %s16, 0
      %p120 = por %p118, %p119
      %s121 = ssub.s32 %s17, %s36
      %s122 = ssub.s32 %s18, %s32
      %s123 = sor.u32 %s121, %s122
      %s124 = ssub.s32 %s19, %s28
      %s125 = sor.u32 %s123, %s124
      %p126 = scmp.eq.s32.totalorder %s125, 0
      %s128 = sadd.s32 %s127, 1
      %s129 = scalar_select %p126, %s127, %s128
      %p132 = pneg %p126
      %p133 = scmp.eq.s32.totalorder %s10, 1
      %p134 = por %p132, %p133
      %p135 = scmp.ne.s32.totalorder %s127, %s130
      %p136 = scmp.eq.s32.totalorder %s10, 0
      %p137 = por %p135, %p136
      %p138 = scmp.ne.s32.totalorder %s127, %s130
      %p139 = scmp.eq.s32.totalorder %s15, 1
      %p140 = por %p138, %p139
      %p141 = scmp.ne.s32.totalorder %s130, %s131
      %p142 = scmp.eq.s32.totalorder %s15, 0
      %p143 = por %p141, %p142
      %p144 = scmp.ne.s32.totalorder %s130, %s131
      %p145 = scmp.eq.s32.totalorder %s16, 1
      %p146 = por %p144, %p145
      %p148 = scmp.ne.s32.totalorder %s131, %s147
      %p149 = scmp.eq.s32.totalorder %s16, 0
      %p150 = por %p148, %p149
      %s151 = ssub.s32 %s17, %s36
      %s152 = ssub.s32 %s18, %s32
      %s153 = sor.u32 %s151, %s152
      %p154 = scmp.eq.s32.totalorder %s153, 0
      %s156 = sadd.s32 %s155, 1
      %s157 = scalar_select %p154, %s155, %s156
      %p160 = pneg %p154
      %p161 = scmp.eq.s32.totalorder %s10, 1
      %p162 = por %p160, %p161
      %p163 = scmp.ne.s32.totalorder %s155, %s158
      %p164 = scmp.eq.s32.totalorder %s10, 0
      %p165 = por %p163, %p164
      %p166 = scmp.ne.s32.totalorder %s155, %s158
      %p167 = scmp.eq.s32.totalorder %s15, 1
      %p168 = por %p166, %p167
      %p169 = scmp.ne.s32.totalorder %s158, %s159
      %p170 = scmp.eq.s32.totalorder %s15, 0
      %p171 = por %p169, %p170
      %p172 = scmp.ne.s32.totalorder %s158, %s159
      %p173 = scmp.eq.s32.totalorder %s16, 1
      %p174 = por %p172, %p173
      %p176 = scmp.ne.s32.totalorder %s159, %s175
      %p177 = scmp.eq.s32.totalorder %s16, 0
      %p178 = por %p176, %p177
      %p179 = scmp.le.s32.totalorder 1, %s10
      %p180 = scmp.lt.s32.totalorder %s10, 3
      %p181 = pnand %p179, %p180
      %p182 = pneg %p181
      // Predicated region
      $region9: #{transformer_layer.5} parent=5 // pred_check
        _
      $region10: #{transformer_layer.5} parent=5 // pred_check_branch
        %184 = sbr.rel (%p181) target = $region12
      $region11: #{transformer_layer.5} parent=5 // pred_region
        %s185 = ssub.s32 %s10, 1
      $region12: #{transformer_layer.5} parent=5 // pred_fallthru
        _
      %p186 = scmp.lt.s32.totalorder %s10, 2
      // Predicated region
      $region13: #{transformer_layer.5} parent=5 // pred_check
        %p187 = pneg %p186
      $region14: #{transformer_layer.5} parent=5 // pred_check_branch
        %189 = sbr.rel (%p187) target = $region16
      $region15: #{transformer_layer.5} parent=5 // pred_region
        // Predicated region
        $region17: #{transformer_layer.5} parent=15 // pred_check
          %p190 = pneg %p51
        $region18: #{transformer_layer.5} parent=15 // pred_check_branch
          %192 = sbr.rel (%p190) target = $region20
        $region19: #{transformer_layer.5} parent=15 // pred_region
          %s193 = sand.u32 %s41, 1
          %s194 = sand.u32 %s41, 1
          %s195 = smul.addr %s194, 16
          %s196 = scalar_lea.vmem [#allocation5], %s195
          %s197 = smul.u32 8, %s18
          %s198 = smul.addr %s17, 3
          %s199 = smul.addr %s197, 6
          %s200 = sadd.s32 %s198, %s199
          %s201 = smul.addr %s200, 2
          %s202 = scalar_lea.vmem %s0, %s201
          // Predicated region
          $region21: #{transformer_layer.5} parent=19 // pred_check
            _
          $region22: #{transformer_layer.5} parent=19 // pred_check_branch
            %204 = sbr.rel (0) target = $region24
          $region23: #{transformer_layer.5} parent=19 // pred_region
            // Predicated region
            $region25: #{transformer_layer.5} parent=23 // pred_check
              _
            $region26: #{transformer_layer.5} parent=23 // pred_check_branch
              %206 = sbr.rel target = $region28
            $region27: #{transformer_layer.5} parent=23 // pred_region
              // Predicated region
              $region40: #{transformer_layer.5} parent=27 // pred_check
                _
              $region41: #{transformer_layer.5} parent=27 // pred_check_branch
                %236 = sbr.rel (0) target = $region43
              $region42: #{transformer_layer.5} parent=27 // pred_region
                loop: start=0, step=1, limit=1
                $region44: #{transformer_layer.5} parent=42 // loop_pre_header
                  _
                $region45: #{transformer_layer.5} parent=42 // loop_header
                  %s238 = sphi 0, %s242
                  %p239 = scmp.ge.s32.totalorder %s238, 1
                  %s243 = sphi %s202, %s202
                  %s244 = sphi %s196, %s196
                $region46: #{transformer_layer.5} parent=42 // loop_header_branch
                  %241 = sbr.rel (%p239) target = $region50
                $region47: #{transformer_layer.5} parent=42 // loop_body
                  _
                $region48: #{transformer_layer.5} parent=42 // loop_footer
                  %s242 = sadd.s32 1, %s238
                $region49: #{transformer_layer.5} parent=42 // loop_footer_branch
                  %237 = sbr.rel target = $region45
                $region50: #{transformer_layer.5} parent=42 // loop_exit
                  _
                %s246 = ssub.s32 4, 1
                loop: start=0, step=1, limit=1
                $region51: #{transformer_layer.5} parent=42 // loop_pre_header
                  _
                $region52: #{transformer_layer.5} parent=42 // loop_header
                  %s248 = sphi 0, %s252
                  %p249 = scmp.ge.s32.totalorder %s248, 1
                  %s253 = sphi %s202, %s202
                  %s254 = sphi %s196, %s196
                $region53: #{transformer_layer.5} parent=42 // loop_header_branch
                  %251 = sbr.rel (%p249) target = $region57
                $region54: #{transformer_layer.5} parent=42 // loop_body
                  %v255 = vld [vmem:[%s253] sm:%s246]
                  %256 = vst [vmem:[%s254] sm:%s246] %v255
                  %v257 = vld [vmem:[%s253 + $0xc] sm:%s246]
                  %258 = vst [vmem:[%s254 + $0x2] sm:%s246] %v257
                  %v259 = vld [vmem:[%s253 + $0x18] sm:%s246]
                  %260 = vst [vmem:[%s254 + $0x4] sm:%s246] %v259
                  %v261 = vld [vmem:[%s253 + $0x24] sm:%s246]
                  %262 = vst [vmem:[%s254 + $0x6] sm:%s246] %v261
                  %v263 = vld [vmem:[%s253 + $0x30] sm:%s246]
                  %264 = vst [vmem:[%s254 + $0x8] sm:%s246] %v263
                  %v265 = vld [vmem:[%s253 + $0x3c] sm:%s246]
                  %266 = vst [vmem:[%s254 + $0xa] sm:%s246] %v265
                  %v267 = vld [vmem:[%s253 + $0x48] sm:%s246]
                  %268 = vst [vmem:[%s254 + $0xc] sm:%s246] %v267
                  %v269 = vld [vmem:[%s253 + $0x54] sm:%s246]
                  %270 = vst [vmem:[%s254 + $0xe] sm:%s246] %v269
                $region55: #{transformer_layer.5} parent=42 // loop_footer
                  %s252 = sadd.s32 1, %s248
                $region56: #{transformer_layer.5} parent=42 // loop_footer_branch
                  %247 = sbr.rel target = $region52
                $region57: #{transformer_layer.5} parent=42 // loop_exit
                  _
              $region43: #{transformer_layer.5} parent=27 // pred_fallthru
                _
            $region28: #{transformer_layer.5} parent=23 // pred_fallthru
              _
            // Predicated region
            $region29: #{transformer_layer.5} parent=23 // pred_check
              _
            $region30: #{transformer_layer.5} parent=23 // pred_check_branch
              %208 = sbr.rel (0) target = $region32
            $region31: #{transformer_layer.5} parent=23 // pred_region
              %s210 = ssub.s32 4, 1
              loop: start=0, step=1, limit=1
              $region33: #{transformer_layer.5} parent=31 // loop_pre_header
                _
              $region34: #{transformer_layer.5} parent=31 // loop_header
                %s212 = sphi 0, %s216
                %p213 = scmp.ge.s32.totalorder %s212, 1
                %s217 = sphi %s202, %s202
                %s218 = sphi %s196, %s196
              $region35: #{transformer_layer.5} parent=31 // loop_header_branch
                %215 = sbr.rel (%p213) target = $region39
              $region36: #{transformer_layer.5} parent=31 // loop_body
                %v219 = vld [vmem:[%s217] sm:%s210]
                %220 = vst [vmem:[%s218] sm:%s210] %v219
                %v221 = vld [vmem:[%s217 + $0xc] sm:%s210]
                %222 = vst [vmem:[%s218 + $0x2] sm:%s210] %v221
                %v223 = vld [vmem:[%s217 + $0x18] sm:%s210]
                %224 = vst [vmem:[%s218 + $0x4] sm:%s210] %v223
                %v225 = vld [vmem:[%s217 + $0x24] sm:%s210]
                %226 = vst [vmem:[%s218 + $0x6] sm:%s210] %v225
                %v227 = vld [vmem:[%s217 + $0x30] sm:%s210]
                %228 = vst [vmem:[%s218 + $0x8] sm:%s210] %v227
                %v229 = vld [vmem:[%s217 + $0x3c] sm:%s210]
                %230 = vst [vmem:[%s218 + $0xa] sm:%s210] %v229
                %v231 = vld [vmem:[%s217 + $0x48] sm:%s210]
                %232 = vst [vmem:[%s218 + $0xc] sm:%s210] %v231
                %v233 = vld [vmem:[%s217 + $0x54] sm:%s210]
                %234 = vst [vmem:[%s218 + $0xe] sm:%s210] %v233
              $region37: #{transformer_layer.5} parent=31 // loop_footer
                %s216 = sadd.s32 1, %s212
              $region38: #{transformer_layer.5} parent=31 // loop_footer_branch
                %211 = sbr.rel target = $region34
              $region39: #{transformer_layer.5} parent=31 // loop_exit
                _
            $region32: #{transformer_layer.5} parent=23 // pred_fallthru
              _
          $region24: #{transformer_layer.5} parent=19 // pred_fallthru
            _
          %271 = vnop
        $region20: #{transformer_layer.5} parent=15 // pred_fallthru
          _
        // Predicated region
        $region58: #{transformer_layer.5} parent=15 // pred_check
          %p272 = pneg %p79
        $region59: #{transformer_layer.5} parent=15 // pred_check_branch
          %274 = sbr.rel (%p272) target = $region61
        $region60: #{transformer_layer.5} parent=15 // pred_region
          %s275 = sand.u32 %s69, 1
          %s276 = sand.u32 %s69, 1
          %s277 = smul.addr %s276, 16
          %s278 = scalar_lea.vmem [#allocation6], %s277
          %s279 = smul.u32 8, %s19
          %s280 = smul.addr %s17, 3
          %s281 = sadd.s32 1, %s280
          %s282 = smul.addr %s279, 6
          %s283 = sadd.s32 %s281, %s282
          %s284 = smul.addr %s283, 2
          %s285 = scalar_lea.vmem %s1, %s284
          // Predicated region
          $region62: #{transformer_layer.5} parent=60 // pred_check
            _
          $region63: #{transformer_layer.5} parent=60 // pred_check_branch
            %287 = sbr.rel (0) target = $region65
          $region64: #{transformer_layer.5} parent=60 // pred_region
            // Predicated region
            $region66: #{transformer_layer.5} parent=64 // pred_check
              _
            $region67: #{transformer_layer.5} parent=64 // pred_check_branch
              %289 = sbr.rel target = $region69
            $region68: #{transformer_layer.5} parent=64 // pred_region
              // Predicated region
              $region81: #{transformer_layer.5} parent=68 // pred_check
                _
              $region82: #{transformer_layer.5} parent=68 // pred_check_branch
                %319 = sbr.rel (0) target = $region84
              $region83: #{transformer_layer.5} parent=68 // pred_region
                loop: start=0, step=1, limit=1
                $region85: #{transformer_layer.5} parent=83 // loop_pre_header
                  _
                $region86: #{transformer_layer.5} parent=83 // loop_header
                  %s321 = sphi 0, %s325
                  %p322 = scmp.ge.s32.totalorder %s321, 1
                  %s326 = sphi %s285, %s285
                  %s327 = sphi %s278, %s278
                $region87: #{transformer_layer.5} parent=83 // loop_header_branch
                  %324 = sbr.rel (%p322) target = $region91
                $region88: #{transformer_layer.5} parent=83 // loop_body
                  _
                $region89: #{transformer_layer.5} parent=83 // loop_footer
                  %s325 = sadd.s32 1, %s321
                $region90: #{transformer_layer.5} parent=83 // loop_footer_branch
                  %320 = sbr.rel target = $region86
                $region91: #{transformer_layer.5} parent=83 // loop_exit
                  _
                %s329 = ssub.s32 4, 1
                loop: start=0, step=1, limit=1
                $region92: #{transformer_layer.5} parent=83 // loop_pre_header
                  _
                $region93: #{transformer_layer.5} parent=83 // loop_header
                  %s331 = sphi 0, %s335
                  %p332 = scmp.ge.s32.totalorder %s331, 1
                  %s336 = sphi %s285, %s285
                  %s337 = sphi %s278, %s278
                $region94: #{transformer_layer.5} parent=83 // loop_header_branch
                  %334 = sbr.rel (%p332) target = $region98
                $region95: #{transformer_layer.5} parent=83 // loop_body
                  %v338 = vld [vmem:[%s336] sm:%s329]
                  %339 = vst [vmem:[%s337] sm:%s329] %v338
                  %v340 = vld [vmem:[%s336 + $0xc] sm:%s329]
                  %341 = vst [vmem:[%s337 + $0x2] sm:%s329] %v340
                  %v342 = vld [vmem:[%s336 + $0x18] sm:%s329]
                  %343 = vst [vmem:[%s337 + $0x4] sm:%s329] %v342
                  %v344 = vld [vmem:[%s336 + $0x24] sm:%s329]
                  %345 = vst [vmem:[%s337 + $0x6] sm:%s329] %v344
                  %v346 = vld [vmem:[%s336 + $0x30] sm:%s329]
                  %347 = vst [vmem:[%s337 + $0x8] sm:%s329] %v346
                  %v348 = vld [vmem:[%s336 + $0x3c] sm:%s329]
                  %349 = vst [vmem:[%s337 + $0xa] sm:%s329] %v348
                  %v350 = vld [vmem:[%s336 + $0x48] sm:%s329]
                  %351 = vst [vmem:[%s337 + $0xc] sm:%s329] %v350
                  %v352 = vld [vmem:[%s336 + $0x54] sm:%s329]
                  %353 = vst [vmem:[%s337 + $0xe] sm:%s329] %v352
                $region96: #{transformer_layer.5} parent=83 // loop_footer
                  %s335 = sadd.s32 1, %s331
                $region97: #{transformer_layer.5} parent=83 // loop_footer_branch
                  %330 = sbr.rel target = $region93
                $region98: #{transformer_layer.5} parent=83 // loop_exit
                  _
              $region84: #{transformer_layer.5} parent=68 // pred_fallthru
                _
            $region69: #{transformer_layer.5} parent=64 // pred_fallthru
              _
            // Predicated region
            $region70: #{transformer_layer.5} parent=64 // pred_check
              _
            $region71: #{transformer_layer.5} parent=64 // pred_check_branch
              %291 = sbr.rel (0) target = $region73
            $region72: #{transformer_layer.5} parent=64 // pred_region
              %s293 = ssub.s32 4, 1
              loop: start=0, step=1, limit=1
              $region74: #{transformer_layer.5} parent=72 // loop_pre_header
                _
              $region75: #{transformer_layer.5} parent=72 // loop_header
                %s295 = sphi 0, %s299
                %p296 = scmp.ge.s32.totalorder %s295, 1
                %s300 = sphi %s285, %s285
                %s301 = sphi %s278, %s278
              $region76: #{transformer_layer.5} parent=72 // loop_header_branch
                %298 = sbr.rel (%p296) target = $region80
              $region77: #{transformer_layer.5} parent=72 // loop_body
                %v302 = vld [vmem:[%s300] sm:%s293]
                %303 = vst [vmem:[%s301] sm:%s293] %v302
                %v304 = vld [vmem:[%s300 + $0xc] sm:%s293]
                %305 = vst [vmem:[%s301 + $0x2] sm:%s293] %v304
                %v306 = vld [vmem:[%s300 + $0x18] sm:%s293]
                %307 = vst [vmem:[%s301 + $0x4] sm:%s293] %v306
                %v308 = vld [vmem:[%s300 + $0x24] sm:%s293]
                %309 = vst [vmem:[%s301 + $0x6] sm:%s293] %v308
                %v310 = vld [vmem:[%s300 + $0x30] sm:%s293]
                %311 = vst [vmem:[%s301 + $0x8] sm:%s293] %v310
                %v312 = vld [vmem:[%s300 + $0x3c] sm:%s293]
                %313 = vst [vmem:[%s301 + $0xa] sm:%s293] %v312
                %v314 = vld [vmem:[%s300 + $0x48] sm:%s293]
                %315 = vst [vmem:[%s301 + $0xc] sm:%s293] %v314
                %v316 = vld [vmem:[%s300 + $0x54] sm:%s293]
                %317 = vst [vmem:[%s301 + $0xe] sm:%s293] %v316
              $region78: #{transformer_layer.5} parent=72 // loop_footer
                %s299 = sadd.s32 1, %s295
              $region79: #{transformer_layer.5} parent=72 // loop_footer_branch
                %294 = sbr.rel target = $region75
              $region80: #{transformer_layer.5} parent=72 // loop_exit
                _
            $region73: #{transformer_layer.5} parent=64 // pred_fallthru
              _
          $region65: #{transformer_layer.5} parent=60 // pred_fallthru
            _
          %354 = vnop
        $region61: #{transformer_layer.5} parent=15 // pred_fallthru
          _
        // Predicated region
        $region99: #{transformer_layer.5} parent=15 // pred_check
          %p355 = pneg %p107
        $region100: #{transformer_layer.5} parent=15 // pred_check_branch
          %357 = sbr.rel (%p355) target = $region102
        $region101: #{transformer_layer.5} parent=15 // pred_region
          %s358 = sand.u32 %s97, 1
          %s359 = sand.u32 %s97, 1
          %s360 = smul.addr %s359, 16
          %s361 = scalar_lea.vmem [#allocation7], %s360
          %s362 = smul.u32 8, %s19
          %s363 = smul.addr %s17, 3
          %s364 = sadd.s32 2, %s363
          %s365 = smul.addr %s362, 6
          %s366 = sadd.s32 %s364, %s365
          %s367 = smul.addr %s366, 2
          %s368 = scalar_lea.vmem %s2, %s367
          // Predicated region
          $region103: #{transformer_layer.5} parent=101 // pred_check
            _
          $region104: #{transformer_layer.5} parent=101 // pred_check_branch
            %370 = sbr.rel (0) target = $region106
          $region105: #{transformer_layer.5} parent=101 // pred_region
            // Predicated region
            $region107: #{transformer_layer.5} parent=105 // pred_check
              _
            $region108: #{transformer_layer.5} parent=105 // pred_check_branch
              %372 = sbr.rel target = $region110
            $region109: #{transformer_layer.5} parent=105 // pred_region
              // Predicated region
              $region122: #{transformer_layer.5} parent=109 // pred_check
                _
              $region123: #{transformer_layer.5} parent=109 // pred_check_branch
                %402 = sbr.rel (0) target = $region125
              $region124: #{transformer_layer.5} parent=109 // pred_region
                loop: start=0, step=1, limit=1
                $region126: #{transformer_layer.5} parent=124 // loop_pre_header
                  _
                $region127: #{transformer_layer.5} parent=124 // loop_header
                  %s404 = sphi 0, %s408
                  %p405 = scmp.ge.s32.totalorder %s404, 1
                  %s409 = sphi %s368, %s368
                  %s410 = sphi %s361, %s361
                $region128: #{transformer_layer.5} parent=124 // loop_header_branch
                  %407 = sbr.rel (%p405) target = $region132
                $region129: #{transformer_layer.5} parent=124 // loop_body
                  _
                $region130: #{transformer_layer.5} parent=124 // loop_footer
                  %s408 = sadd.s32 1, %s404
                $region131: #{transformer_layer.5} parent=124 // loop_footer_branch
                  %403 = sbr.rel target = $region127
                $region132: #{transformer_layer.5} parent=124 // loop_exit
                  _
                %s412 = ssub.s32 4, 1
                loop: start=0, step=1, limit=1
                $region133: #{transformer_layer.5} parent=124 // loop_pre_header
                  _
                $region134: #{transformer_layer.5} parent=124 // loop_header
                  %s414 = sphi 0, %s418
                  %p415 = scmp.ge.s32.totalorder %s414, 1
                  %s419 = sphi %s368, %s368
                  %s420 = sphi %s361, %s361
                $region135: #{transformer_layer.5} parent=124 // loop_header_branch
                  %417 = sbr.rel (%p415) target = $region139
                $region136: #{transformer_layer.5} parent=124 // loop_body
                  %v421 = vld [vmem:[%s419] sm:%s412]
                  %422 = vst [vmem:[%s420] sm:%s412] %v421
                  %v423 = vld [vmem:[%s419 + $0xc] sm:%s412]
                  %424 = vst [vmem:[%s420 + $0x2] sm:%s412] %v423
                  %v425 = vld [vmem:[%s419 + $0x18] sm:%s412]
                  %426 = vst [vmem:[%s420 + $0x4] sm:%s412] %v425
                  %v427 = vld [vmem:[%s419 + $0x24] sm:%s412]
                  %428 = vst [vmem:[%s420 + $0x6] sm:%s412] %v427
                  %v429 = vld [vmem:[%s419 + $0x30] sm:%s412]
                  %430 = vst [vmem:[%s420 + $0x8] sm:%s412] %v429
                  %v431 = vld [vmem:[%s419 + $0x3c] sm:%s412]
                  %432 = vst [vmem:[%s420 + $0xa] sm:%s412] %v431
                  %v433 = vld [vmem:[%s419 + $0x48] sm:%s412]
                  %434 = vst [vmem:[%s420 + $0xc] sm:%s412] %v433
                  %v435 = vld [vmem:[%s419 + $0x54] sm:%s412]
                  %436 = vst [vmem:[%s420 + $0xe] sm:%s412] %v435
                $region137: #{transformer_layer.5} parent=124 // loop_footer
                  %s418 = sadd.s32 1, %s414
                $region138: #{transformer_layer.5} parent=124 // loop_footer_branch
                  %413 = sbr.rel target = $region134
                $region139: #{transformer_layer.5} parent=124 // loop_exit
                  _
              $region125: #{transformer_layer.5} parent=109 // pred_fallthru
                _
            $region110: #{transformer_layer.5} parent=105 // pred_fallthru
              _
            // Predicated region
            $region111: #{transformer_layer.5} parent=105 // pred_check
              _
            $region112: #{transformer_layer.5} parent=105 // pred_check_branch
              %374 = sbr.rel (0) target = $region114
            $region113: #{transformer_layer.5} parent=105 // pred_region
              %s376 = ssub.s32 4, 1
              loop: start=0, step=1, limit=1
              $region115: #{transformer_layer.5} parent=113 // loop_pre_header
                _
              $region116: #{transformer_layer.5} parent=113 // loop_header
                %s378 = sphi 0, %s382
                %p379 = scmp.ge.s32.totalorder %s378, 1
                %s383 = sphi %s368, %s368
                %s384 = sphi %s361, %s361
              $region117: #{transformer_layer.5} parent=113 // loop_header_branch
                %381 = sbr.rel (%p379) target = $region121
              $region118: #{transformer_layer.5} parent=113 // loop_body
                %v385 = vld [vmem:[%s383] sm:%s376]
                %386 = vst [vmem:[%s384] sm:%s376] %v385
                %v387 = vld [vmem:[%s383 + $0xc] sm:%s376]
                %388 = vst [vmem:[%s384 + $0x2] sm:%s376] %v387
                %v389 = vld [vmem:[%s383 + $0x18] sm:%s376]
                %390 = vst [vmem:[%s384 + $0x4] sm:%s376] %v389
                %v391 = vld [vmem:[%s383 + $0x24] sm:%s376]
                %392 = vst [vmem:[%s384 + $0x6] sm:%s376] %v391
                %v393 = vld [vmem:[%s383 + $0x30] sm:%s376]
                %394 = vst [vmem:[%s384 + $0x8] sm:%s376] %v393
                %v395 = vld [vmem:[%s383 + $0x3c] sm:%s376]
                %396 = vst [vmem:[%s384 + $0xa] sm:%s376] %v395
                %v397 = vld [vmem:[%s383 + $0x48] sm:%s376]
                %398 = vst [vmem:[%s384 + $0xc] sm:%s376] %v397
                %v399 = vld [vmem:[%s383 + $0x54] sm:%s376]
                %400 = vst [vmem:[%s384 + $0xe] sm:%s376] %v399
              $region119: #{transformer_layer.5} parent=113 // loop_footer
                %s382 = sadd.s32 1, %s378
              $region120: #{transformer_layer.5} parent=113 // loop_footer_branch
                %377 = sbr.rel target = $region116
              $region121: #{transformer_layer.5} parent=113 // loop_exit
                _
            $region114: #{transformer_layer.5} parent=105 // pred_fallthru
              _
          $region106: #{transformer_layer.5} parent=101 // pred_fallthru
            _
          %437 = vnop
        $region102: #{transformer_layer.5} parent=15 // pred_fallthru
          _
        // Predicated region
        $region140: #{transformer_layer.5} parent=15 // pred_check
          %p438 = pneg %p137
        $region141: #{transformer_layer.5} parent=15 // pred_check_branch
          %440 = sbr.rel (%p438) target = $region143
        $region142: #{transformer_layer.5} parent=15 // pred_region
          %p441 = scmp.lt.s32.totalorder %s17, 1
          %s442 = scalar_select %p441, %s17, 1
          %p443 = scmp.lt.s32.totalorder %s18, 0
          %s444 = scalar_select %p443, %s18, 0
          %p445 = scmp.lt.s32.totalorder %s19, 0
          %s446 = scalar_select %p445, %s19, 0
          %s447 = sadd.s32 %s446, %s444
          %s448 = sadd.s32 %s447, %s442
          %s449 = smul.addr %s448, 8
          %s450 = scalar_lea.vmem %s3, %s449
        $region143: #{transformer_layer.5} parent=15 // pred_fallthru
          _
      $region16: #{transformer_layer.5} parent=5 // pred_fallthru
        _
      %p451 = scmp.le.s32.totalorder 1, %s10
      %p452 = scmp.lt.s32.totalorder %s10, 3
      %p453 = pnand %p451, %p452
      %p454 = pneg %p453
      // Predicated region
      $region144: #{transformer_layer.5} parent=5 // pred_check
        _
      $region145: #{transformer_layer.5} parent=5 // pred_check_branch
        %456 = sbr.rel (%p453) target = $region147
      $region146: #{transformer_layer.5} parent=5 // pred_region
        %s457 = ssub.s32 %s10, 1
        %s458 = sand.u32 %s44, 1
        %s459 = sand.u32 %s44, 1
        %s460 = smul.addr %s459, 16
        %s461 = scalar_lea.vmem [#allocation5], %s460
        // Predicated region
        $region148: #{transformer_layer.5} parent=146 // pred_check
          %p462 = pneg %p57
        $region149: #{transformer_layer.5} parent=146 // pred_check_branch
          %464 = sbr.rel (%p462) target = $region151
        $region150: #{transformer_layer.5} parent=146 // pred_region
          _
        $region151: #{transformer_layer.5} parent=146 // pred_fallthru
          _
        %s465 = sand.u32 %s72, 1
        %s466 = sand.u32 %s72, 1
        %s467 = smul.addr %s466, 16
        %s468 = scalar_lea.vmem [#allocation6], %s467
        // Predicated region
        $region152: #{transformer_layer.5} parent=146 // pred_check
          %p469 = pneg %p85
        $region153: #{transformer_layer.5} parent=146 // pred_check_branch
          %471 = sbr.rel (%p469) target = $region155
        $region154: #{transformer_layer.5} parent=146 // pred_region
          _
        $region155: #{transformer_layer.5} parent=146 // pred_fallthru
          _
        %s472 = sand.u32 %s100, 1
        %s473 = sand.u32 %s100, 1
        %s474 = smul.addr %s473, 16
        %s475 = scalar_lea.vmem [#allocation7], %s474
        // Predicated region
        $region156: #{transformer_layer.5} parent=146 // pred_check
          %p476 = pneg %p113
        $region157: #{transformer_layer.5} parent=146 // pred_check_branch
          %478 = sbr.rel (%p476) target = $region159
        $region158: #{transformer_layer.5} parent=146 // pred_region
          _
        $region159: #{transformer_layer.5} parent=146 // pred_fallthru
          _
        %s479 = sand.u32 %s44, 1
        %s480 = sand.u32 %s44, 1
        %s481 = smul.addr %s480, 16
        %s482 = scalar_lea.vmem [#allocation5], %s481
        %p483 = pneg %p57
        %p484 = pneg %p54
        %s485 = sand.u32 %s72, 1
        %s486 = sand.u32 %s72, 1
        %s487 = smul.addr %s486, 16
        %s488 = scalar_lea.vmem [#allocation6], %s487
        %p489 = pneg %p85
        %p490 = pneg %p82
        %s491 = sand.u32 %s100, 1
        %s492 = sand.u32 %s100, 1
        %s493 = smul.addr %s492, 16
        %s494 = scalar_lea.vmem [#allocation7], %s493
        %p495 = pneg %p113
        %p496 = pneg %p110
        %p497 = scmp.lt.s32.totalorder %s20, 1
        %s498 = scalar_select %p497, %s20, 1
        %p499 = scmp.lt.s32.totalorder %s21, 0
        %s500 = scalar_select %p499, %s21, 0
        %p501 = scmp.lt.s32.totalorder %s22, 0
        %s502 = scalar_select %p501, %s22, 0
        %s503 = sadd.s32 %s502, %s500
        %s504 = sadd.s32 %s503, %s498
        %s505 = smul.addr %s504, 8
        %s506 = scalar_lea.vmem %s3, %s505
        %p507 = pneg %p143
        %p508 = pneg %p140
        %p509 = pneg %p171
        %p510 = pneg %p168
        %s511 = smul.u32 8, %s21
        %p512 = scmp.lt.s32.totalorder %s20, 1
        %s513 = scalar_select %p512, %s20, 1
        %p514 = scmp.lt.s32.totalorder %s511, 7
        %s515 = scalar_select %p514, %s511, 7
        %s516 = smul.addr %s513, 8
        %s517 = sadd.s32 %s515, %s516
        %s518 = smul.addr %s517, 2
        %s519 = scalar_lea.vmem %s4, %s518
        %s520 = smul.u32 8, %s21
        %s521 = smul.u32 8, %s22
        %s522 = smul.u32 8, %s22
        %p523 = scmp.lt.s32.totalorder %s20, 1
        %s524 = scalar_select %p523, %s20, 1
        %p525 = scmp.lt.s32.totalorder %s21, 0
        %s526 = scalar_select %p525, %s21, 0
        %p527 = scmp.lt.s32.totalorder %s22, 0
        %s528 = scalar_select %p527, %s22, 0
        %s529 = sadd.s32 %s528, %s526
        %s530 = sadd.s32 %s529, %s524
        %s531 = smul.addr %s530, 8
        %s532 = scalar_lea.vmem %s3, %s531
        %s533 = smul.u32 8, %s21
        %p534 = scmp.lt.s32.totalorder %s20, 1
        %s535 = scalar_select %p534, %s20, 1
        %p536 = scmp.lt.s32.totalorder %s533, 7
        %s537 = scalar_select %p536, %s533, 7
        %s538 = smul.addr %s535, 8
        %s539 = sadd.s32 %s537, %s538
        %s540 = smul.addr %s539, 2
        %s541 = scalar_lea.vmem %s4, %s540
        %s542 = smul.u32 8, %s21
        %p544 = scmp.eq.s32.totalorder %s22, 0
        // Predicated region
        $region160: #{transformer_layer.5} parent=146 // pred_check
          %p545 = pneg %p544
        $region161: #{transformer_layer.5} parent=146 // pred_check_branch
          %547 = sbr.rel (%p545) target = $region163
        $region162: #{transformer_layer.5} parent=146 // pred_region
          %vm548 = vcmask 7168
          %549 = vst.msk [vmem:[#allocation2] sm:$0xff] %vm548, -inf
          %550 = vst.msk [vmem:[#allocation2 + $0x8] sm:$0xff] %vm548, -inf
          %551 = vst.msk [vmem:[#allocation2 + $0x10] sm:$0xff] %vm548, -inf
          %552 = vst.msk [vmem:[#allocation2 + $0x18] sm:$0xff] %vm548, -inf
          %553 = vst.msk [vmem:[#allocation3] sm:$0xff] %vm548, 0.0
          %554 = vst.msk [vmem:[#allocation3 + $0x8] sm:$0xff] %vm548, 0.0
          %555 = vst.msk [vmem:[#allocation3 + $0x10] sm:$0xff] %vm548, 0.0
          %556 = vst.msk [vmem:[#allocation3 + $0x18] sm:$0xff] %vm548, 0.0
          %vm557 = vcmask 64512
          %558 = vst.msk [vmem:[#allocation4] sm:$0xff] %vm557, 0.0
          %559 = vst.msk [vmem:[#allocation4 + $0x8] sm:$0xff] %vm557, 0.0
          %560 = vst.msk [vmem:[#allocation4 + $0x10] sm:$0xff] %vm557, 0.0
          %561 = vst.msk [vmem:[#allocation4 + $0x18] sm:$0xff] %vm557, 0.0
        $region163: #{transformer_layer.5} parent=146 // pred_fallthru
          _
        %v562 = vld [vmem:[%s461] sm:$0x3]
        %v563 = vld [vmem:[%s461 + $0x2] sm:$0x3]
        %v564 = vld [vmem:[%s461 + $0x4] sm:$0x3]
        %v565 = vld [vmem:[%s461 + $0x6] sm:$0x3]
        %v566 = vld [vmem:[%s461 + $0x8] sm:$0x3]
        %v567 = vld [vmem:[%s461 + $0xa] sm:$0x3]
        %v568 = vld [vmem:[%s461 + $0xc] sm:$0x3]
        %v569 = vld [vmem:[%s461 + $0xe] sm:$0x3]
        %v570 = vld [vmem:[%s468] sm:$0x3]
        %v571 = vld [vmem:[%s468 + $0x2] sm:$0x3]
        %v572 = vld [vmem:[%s468 + $0x4] sm:$0x3]
        %v573 = vld [vmem:[%s468 + $0x6] sm:$0x3]
        %v574 = vld [vmem:[%s468 + $0x8] sm:$0x3]
        %v575 = vld [vmem:[%s468 + $0xa] sm:$0x3]
        %v576 = vld [vmem:[%s468 + $0xc] sm:$0x3]
        %v577 = vld [vmem:[%s468 + $0xe] sm:$0x3]
        %v578 = vld [vmem:[%s475] sm:$0x3]
        %v579 = vld [vmem:[%s475 + $0x2] sm:$0x3]
        %v580 = vld [vmem:[%s475 + $0x4] sm:$0x3]
        %v581 = vld [vmem:[%s475 + $0x6] sm:$0x3]
        %v582 = vld [vmem:[%s475 + $0x8] sm:$0x3]
        %v583 = vld [vmem:[%s475 + $0xa] sm:$0x3]
        %v584 = vld [vmem:[%s475 + $0xc] sm:$0x3]
        %v585 = vld [vmem:[%s475 + $0xe] sm:$0x3]
        %v586 = vld [vmem:[%s532] sm:$0xff]
        %v596 = vunpack.c.l.s4 1983009808
        %v597 = vunpack.c.0.s8 %v596
        %v598 = vlaneseq
        %v599 = vshrl.u32 %v598, 7
        %v600 = vsub.s32 %v597, %v599
        %v601 = vrot.slane %v562, %v600
        %v603 = vunpack.c.l.s4 1983009808
        %v604 = vunpack.c.0.s8 %v603
        %v605 = vlaneseq
        %v606 = vshrl.u32 %v605, 7
        %v607 = vsub.s32 %v604, %v606
        %v608 = vrot.slane %v563, %v607
        %v610 = vunpack.c.l.s4 1983009808
        %v611 = vunpack.c.0.s8 %v610
        %v612 = vlaneseq
        %v613 = vshrl.u32 %v612, 7
        %v614 = vsub.s32 %v611, %v613
        %v615 = vrot.slane %v564, %v614
        %v617 = vunpack.c.l.s4 1983009808
        %v618 = vunpack.c.0.s8 %v617
        %v619 = vlaneseq
        %v620 = vshrl.u32 %v619, 7
        %v621 = vsub.s32 %v618, %v620
        %v622 = vrot.slane %v565, %v621
        %v624 = vunpack.c.l.s4 1983009808
        %v625 = vunpack.c.0.s8 %v624
        %v626 = vlaneseq
        %v627 = vshrl.u32 %v626, 7
        %v628 = vsub.s32 %v625, %v627
        %v629 = vrot.slane %v566, %v628
        %v631 = vunpack.c.l.s4 1983009808
        %v632 = vunpack.c.0.s8 %v631
        %v633 = vlaneseq
        %v634 = vshrl.u32 %v633, 7
        %v635 = vsub.s32 %v632, %v634
        %v636 = vrot.slane %v567, %v635
        %v638 = vunpack.c.l.s4 1983009808
        %v639 = vunpack.c.0.s8 %v638
        %v640 = vlaneseq
        %v641 = vshrl.u32 %v640, 7
        %v642 = vsub.s32 %v639, %v641
        %v643 = vrot.slane %v568, %v642
        %v645 = vunpack.c.l.s4 1983009808
        %v646 = vunpack.c.0.s8 %v645
        %v647 = vlaneseq
        %v648 = vshrl.u32 %v647, 7
        %v649 = vsub.s32 %v646, %v648
        %v650 = vrot.slane %v569, %v649
        %v651 = vunpack.c.l.b16 %v601
        %v652 = vunpack.c.l.b16 %v608
        %v653 = vunpack.c.l.b16 %v615
        %v654 = vunpack.c.l.b16 %v622
        %v655 = vunpack.c.l.b16 %v629
        %v656 = vunpack.c.l.b16 %v636
        %v657 = vunpack.c.l.b16 %v643
        %v658 = vunpack.c.l.b16 %v650
        %v659 = vrot.slane %v652, 7
        %vm660 = vcmask 1041409
        %v661 = vsel %vm660, %v659, %v651
        %v662 = vrot.slane %v653, 6
        %vm663 = vcmask 1042434
        %v664 = vsel %vm663, %v662, %v661
        %v665 = vrot.slane %v654, 5
        %vm666 = vcmask 1043459
        %v667 = vsel %vm666, %v665, %v664
        %v668 = vrot.slane %v655, 4
        %vm669 = vcmask 1044484
        %v670 = vsel %vm669, %v668, %v667
        %v671 = vrot.slane %v656, 3
        %vm672 = vcmask 1045509
        %v673 = vsel %vm672, %v671, %v670
        %v674 = vrot.slane %v657, 2
        %vm675 = vcmask 1046534
        %v676 = vsel %vm675, %v674, %v673
        %v677 = vrot.slane %v658, 1
        %vm678 = vcmask 1047559
        %v679 = vsel %vm678, %v677, %v676
        %v680 = vpack.c.b16 %v679, %v679
        %v690 = vunpack.c.l.s4 1983009808
        %v691 = vunpack.c.0.s8 %v690
        %v692 = vlaneseq
        %v693 = vshrl.u32 %v692, 7
        %v694 = vsub.s32 %v691, %v693
        %v695 = vrot.slane %v570, %v694
        %v697 = vunpack.c.l.s4 1983009808
        %v698 = vunpack.c.0.s8 %v697
        %v699 = vlaneseq
        %v700 = vshrl.u32 %v699, 7
        %v701 = vsub.s32 %v698, %v700
        %v702 = vrot.slane %v571, %v701
        %v704 = vunpack.c.l.s4 1983009808
        %v705 = vunpack.c.0.s8 %v704
        %v706 = vlaneseq
        %v707 = vshrl.u32 %v706, 7
        %v708 = vsub.s32 %v705, %v707
        %v709 = vrot.slane %v572, %v708
        %v711 = vunpack.c.l.s4 1983009808
        %v712 = vunpack.c.0.s8 %v711
        %v713 = vlaneseq
        %v714 = vshrl.u32 %v713, 7
        %v715 = vsub.s32 %v712, %v714
        %v716 = vrot.slane %v573, %v715
        %v718 = vunpack.c.l.s4 1983009808
        %v719 = vunpack.c.0.s8 %v718
        %v720 = vlaneseq
        %v721 = vshrl.u32 %v720, 7
        %v722 = vsub.s32 %v719, %v721
        %v723 = vrot.slane %v574, %v722
        %v725 = vunpack.c.l.s4 1983009808
        %v726 = vunpack.c.0.s8 %v725
        %v727 = vlaneseq
        %v728 = vshrl.u32 %v727, 7
        %v729 = vsub.s32 %v726, %v728
        %v730 = vrot.slane %v575, %v729
        %v732 = vunpack.c.l.s4 1983009808
        %v733 = vunpack.c.0.s8 %v732
        %v734 = vlaneseq
        %v735 = vshrl.u32 %v734, 7
        %v736 = vsub.s32 %v733, %v735
        %v737 = vrot.slane %v576, %v736
        %v739 = vunpack.c.l.s4 1983009808
        %v740 = vunpack.c.0.s8 %v739
        %v741 = vlaneseq
        %v742 = vshrl.u32 %v741, 7
        %v743 = vsub.s32 %v740, %v742
        %v744 = vrot.slane %v577, %v743
        %v745 = vunpack.c.l.b16 %v695
        %v746 = vunpack.c.l.b16 %v702
        %v747 = vunpack.c.l.b16 %v709
        %v748 = vunpack.c.l.b16 %v716
        %v749 = vunpack.c.l.b16 %v723
        %v750 = vunpack.c.l.b16 %v730
        %v751 = vunpack.c.l.b16 %v737
        %v752 = vunpack.c.l.b16 %v744
        %v753 = vrot.slane %v746, 7
        %v754 = vsel %vm660, %v753, %v745
        %v755 = vrot.slane %v747, 6
        %v756 = vsel %vm663, %v755, %v754
        %v757 = vrot.slane %v748, 5
        %v758 = vsel %vm666, %v757, %v756
        %v759 = vrot.slane %v749, 4
        %v760 = vsel %vm669, %v759, %v758
        %v761 = vrot.slane %v750, 3
        %v762 = vsel %vm672, %v761, %v760
        %v763 = vrot.slane %v751, 2
        %v764 = vsel %vm675, %v763, %v762
        %v765 = vrot.slane %v752, 1
        %v766 = vsel %vm678, %v765, %v764
        %v767 = vpack.c.b16 %v766, %v766
        %vm768 = vcmask 64512
        %v770 = vsel %vm768, %v680, 0
        %v773 = vsel %vm768, %v767, 0
        %775 = vmatprep.subr.bf16.mxu0 0
        %776 = vmatpush1.bf16.xpose.msra.mxu0 0
        %777 = vmatprep.subr.bf16.mxu0 0
        %778 = vmatpush1.bf16.xpose.msra.mxu0 0
        %779 = vmatprep.subr.bf16.mxu0 0
        %780 = vmatpush1.bf16.xpose.msra.mxu0 0
        %781 = vmatprep.subr.bf16.mxu0 0
        %782 = vmatpush1.bf16.xpose.msra.mxu0 0
        %783 = vmatprep.subr.bf16.mxu0 0
        %784 = vmatpush1.bf16.xpose.msra.mxu0 0
        %785 = vmatprep.subr.bf16.mxu0 0
        %786 = vmatpush1.bf16.xpose.msra.mxu0 0
        %787 = vmatprep.subr.bf16.mxu0 0
        %788 = vmatpush1.bf16.xpose.msra.mxu0 0
        %789 = vmatprep.subr.bf16.mxu0 0
        %790 = vmatpush1.bf16.xpose.msra.mxu0 %v773
        %791 = vmatprep.subr.bf16.mxu0 0
        %792 = vmatpush2.bf16.xpose.msra.mxu0 0
        %793 = vmatprep.subr.bf16.mxu0 0
        %794 = vmatpush2.bf16.xpose.msra.mxu0 0
        %795 = vmatprep.subr.bf16.mxu0 0
        %796 = vmatpush2.bf16.xpose.msra.mxu0 0
        %797 = vmatprep.subr.bf16.mxu0 0
        %798 = vmatpush2.bf16.xpose.msra.mxu0 0
        %799 = vmatprep.subr.bf16.mxu0 0
        %800 = vmatpush2.bf16.xpose.msra.mxu0 0
        %801 = vmatprep.subr.bf16.mxu0 0
        %802 = vmatpush2.bf16.xpose.msra.mxu0 0
        %803 = vmatprep.subr.bf16.mxu0 0
        %804 = vmatpush2.bf16.xpose.msra.mxu0 0
        %805 = vmatprep.subr.bf16.mxu0 0
        %806 = vmatpush2.bf16.xpose.msra.mxu0 0
        %807 = vmatprep.mubr.bf16.mxu0 0
        %808 = vmatmul.mubr.bf16.gmra.mxu0 %v770
        %v809 = vpop.f32.mrf.mxu0
        %v810 = vadd.f32 0.0, %v809
        %v811 = vpop.f32.mrf.mxu0
        %v812 = vpop.f32.mrf.mxu0
        %v813 = vpop.f32.mrf.mxu0
        %814 = vdwg.mxu0
        %v815 = vmul.f32 %v810, 0.35355338
        %v816 = vadd.f32 %v815, %v586
        %v817 = vld [vmem:[#allocation2] sm:$0xff]
        %v818 = vsel %vm768, %v816, -inf
        %819 = vmax.xlane.f32.xlu0 %v818
        %v820 = vpop.xlane.xlu0 %819
        %v821 = vmax.f32 %v817, %v820
        %vm822 = vcmp.eq.f32.partialorder %v821, -inf
        %v823 = vsel %vm822, 0.0, %v821
        %v824 = vsub.f32 %v817, %v823
        %v825 = vmul.f32 %v824, 1.442695
        %v826 = vpow.pop %v825
        %828 = vset.pattern.permute.xlu0 0
        %829 = vperm.xlu0 %828, %v823
        %v830 = vpop.permute.xlu0 %829
        %v832 = vsub.f32 %v816, %v830
        %v833 = vmul.f32 %v832, 1.442695
        %v834 = vpow.pop %v833
        %v835 = vld [vmem:[#allocation3] sm:$0xff]
        %v836 = vmul.f32 %v826, %v835
        %v837 = vsel %vm768, %v834, 0.0
        %838 = vadd.xlane.f32.xlu0 %v837
        %v839 = vpop.xlane.xlu0 %838
        %v840 = vadd.f32 %v836, %v839
        %vm841 = vcmask 7168
        %842 = vst.msk [vmem:[#allocation3] sm:$0xff] %vm841, %v840
        %v843 = vld [vmem:[#allocation4] sm:$0xff]
        %845 = vset.pattern.permute.xlu0 0
        %846 = vperm.xlu0 %845, %v826
        %v847 = vpop.permute.xlu0 %846
        %v849 = vmul.f32 %v847, %v843
        %v850 = vpack.c.bf16 %v834, %v834
        %v860 = vunpack.c.l.s4 1983009808
        %v861 = vunpack.c.0.s8 %v860
        %v862 = vlaneseq
        %v863 = vshrl.u32 %v862, 7
        %v864 = vsub.s32 %v861, %v863
        %v865 = vrot.slane %v578, %v864
        %v867 = vunpack.c.l.s4 1983009808
        %v868 = vunpack.c.0.s8 %v867
        %v869 = vlaneseq
        %v870 = vshrl.u32 %v869, 7
        %v871 = vsub.s32 %v868, %v870
        %v872 = vrot.slane %v579, %v871
        %v874 = vunpack.c.l.s4 1983009808
        %v875 = vunpack.c.0.s8 %v874
        %v876 = vlaneseq
        %v877 = vshrl.u32 %v876, 7
        %v878 = vsub.s32 %v875, %v877
        %v879 = vrot.slane %v580, %v878
        %v881 = vunpack.c.l.s4 1983009808
        %v882 = vunpack.c.0.s8 %v881
        %v883 = vlaneseq
        %v884 = vshrl.u32 %v883, 7
        %v885 = vsub.s32 %v882, %v884
        %v886 = vrot.slane %v581, %v885
        %v888 = vunpack.c.l.s4 1983009808
        %v889 = vunpack.c.0.s8 %v888
        %v890 = vlaneseq
        %v891 = vshrl.u32 %v890, 7
        %v892 = vsub.s32 %v889, %v891
        %v893 = vrot.slane %v582, %v892
        %v895 = vunpack.c.l.s4 1983009808
        %v896 = vunpack.c.0.s8 %v895
        %v897 = vlaneseq
        %v898 = vshrl.u32 %v897, 7
        %v899 = vsub.s32 %v896, %v898
        %v900 = vrot.slane %v583, %v899
        %v902 = vunpack.c.l.s4 1983009808
        %v903 = vunpack.c.0.s8 %v902
        %v904 = vlaneseq
        %v905 = vshrl.u32 %v904, 7
        %v906 = vsub.s32 %v903, %v905
        %v907 = vrot.slane %v584, %v906
        %v909 = vunpack.c.l.s4 1983009808
        %v910 = vunpack.c.0.s8 %v909
        %v911 = vlaneseq
        %v912 = vshrl.u32 %v911, 7
        %v913 = vsub.s32 %v910, %v912
        %v914 = vrot.slane %v585, %v913
        %v915 = vunpack.c.l.b16 %v865
        %v916 = vunpack.c.l.b16 %v872
        %v917 = vunpack.c.l.b16 %v879
        %v918 = vunpack.c.l.b16 %v886
        %v919 = vunpack.c.l.b16 %v893
        %v920 = vunpack.c.l.b16 %v900
        %v921 = vunpack.c.l.b16 %v907
        %v922 = vunpack.c.l.b16 %v914
        %v923 = vrot.slane %v916, 7
        %v924 = vsel %vm660, %v923, %v915
        %v925 = vrot.slane %v917, 6
        %v926 = vsel %vm663, %v925, %v924
        %v927 = vrot.slane %v918, 5
        %v928 = vsel %vm666, %v927, %v926
        %v929 = vrot.slane %v919, 4
        %v930 = vsel %vm669, %v929, %v928
        %v931 = vrot.slane %v920, 3
        %v932 = vsel %vm672, %v931, %v930
        %v933 = vrot.slane %v921, 2
        %v934 = vsel %vm675, %v933, %v932
        %v935 = vrot.slane %v922, 1
        %v936 = vsel %vm678, %v935, %v934
        %v937 = vpack.c.b16 %v936, %v936
        %v939 = vsel %vm768, %v850, 0
        %vm941 = vcmask 1043456
        %v943 = vsel %vm941, %v937, 0
        %945 = vmatprep.subr.bf16.mxu0 0
        %946 = vmatpush1.bf16.msra.mxu0 0
        %947 = vmatprep.subr.bf16.mxu0 0
        %948 = vmatpush1.bf16.msra.mxu0 0
        %949 = vmatprep.subr.bf16.mxu0 0
        %950 = vmatpush1.bf16.msra.mxu0 0
        %951 = vmatprep.subr.bf16.mxu0 0
        %952 = vmatpush1.bf16.msra.mxu0 0
        %953 = vmatprep.subr.bf16.mxu0 0
        %954 = vmatpush1.bf16.msra.mxu0 0
        %955 = vmatprep.subr.bf16.mxu0 0
        %956 = vmatpush1.bf16.msra.mxu0 0
        %957 = vmatprep.subr.bf16.mxu0 0
        %958 = vmatpush1.bf16.msra.mxu0 0
        %959 = vmatprep.subr.bf16.mxu0 0
        %960 = vmatpush1.bf16.msra.mxu0 %v943
        %961 = vmatprep.subr.bf16.mxu0 0
        %962 = vmatpush2.bf16.msra.mxu0 0
        %963 = vmatprep.subr.bf16.mxu0 0
        %964 = vmatpush2.bf16.msra.mxu0 0
        %965 = vmatprep.subr.bf16.mxu0 0
        %966 = vmatpush2.bf16.msra.mxu0 0
        %967 = vmatprep.subr.bf16.mxu0 0
        %968 = vmatpush2.bf16.msra.mxu0 0
        %969 = vmatprep.subr.bf16.mxu0 0
        %970 = vmatpush2.bf16.msra.mxu0 0
        %971 = vmatprep.subr.bf16.mxu0 0
        %972 = vmatpush2.bf16.msra.mxu0 0
        %973 = vmatprep.subr.bf16.mxu0 0
        %974 = vmatpush2.bf16.msra.mxu0 0
        %975 = vmatprep.subr.bf16.mxu0 0
        %976 = vmatpush2.bf16.msra.mxu0 0
        %977 = vmatprep.mubr.bf16.mxu0 0
        %978 = vmatmul.mubr.bf16.gmra.mxu0 %v939
        %v979 = vpop.f32.mrf.mxu0
        %v980 = vadd.f32 0.0, %v979
        %v981 = vpop.f32.mrf.mxu0
        %v982 = vpop.f32.mrf.mxu0
        %v983 = vpop.f32.mrf.mxu0
        %984 = vdwg.mxu0
        %v985 = vadd.f32 %v849, %v980
        %986 = vst.msk [vmem:[#allocation4] sm:$0xff] %vm768, %v985
        %987 = vst.msk [vmem:[#allocation2] sm:$0xff] %vm841, %v821
        %v988 = vrot.slane %v651, 1
        %v989 = vsel %vm660, %v652, %v988
        %v990 = vrot.slane %v653, 7
        %v991 = vsel %vm663, %v990, %v989
        %v992 = vrot.slane %v654, 6
        %v993 = vsel %vm666, %v992, %v991
        %v994 = vrot.slane %v655, 5
        %v995 = vsel %vm669, %v994, %v993
        %v996 = vrot.slane %v656, 4
        %v997 = vsel %vm672, %v996, %v995
        %v998 = vrot.slane %v657, 3
        %v999 = vsel %vm675, %v998, %v997
        %v1000 = vrot.slane %v658, 2
        %v1001 = vsel %vm678, %v1000, %v999
        %v1002 = vpack.c.b16 %v1001, %v1001
        %v1003 = vrot.slane %v745, 1
        %v1004 = vsel %vm660, %v746, %v1003
        %v1005 = vrot.slane %v747, 7
        %v1006 = vsel %vm663, %v1005, %v1004
        %v1007 = vrot.slane %v748, 6
        %v1008 = vsel %vm666, %v1007, %v1006
        %v1009 = vrot.slane %v749, 5
        %v1010 = vsel %vm669, %v1009, %v1008
        %v1011 = vrot.slane %v750, 4
        %v1012 = vsel %vm672, %v1011, %v1010
        %v1013 = vrot.slane %v751, 3
        %v1014 = vsel %vm675, %v1013, %v1012
        %v1015 = vrot.slane %v752, 2
        %v1016 = vsel %vm678, %v1015, %v1014
        %v1017 = vpack.c.b16 %v1016, %v1016
        %v1019 = vsel %vm768, %v1002, 0
        %v1022 = vsel %vm768, %v1017, 0
        %1024 = vmatprep.subr.bf16.mxu0 0
        %1025 = vmatpush1.bf16.xpose.msra.mxu0 0
        %1026 = vmatprep.subr.bf16.mxu0 0
        %1027 = vmatpush1.bf16.xpose.msra.mxu0 0
        %1028 = vmatprep.subr.bf16.mxu0 0
        %1029 = vmatpush1.bf16.xpose.msra.mxu0 0
        %1030 = vmatprep.subr.bf16.mxu0 0
        %1031 = vmatpush1.bf16.xpose.msra.mxu0 0
        %1032 = vmatprep.subr.bf16.mxu0 0
        %1033 = vmatpush1.bf16.xpose.msra.mxu0 0
        %1034 = vmatprep.subr.bf16.mxu0 0
        %1035 = vmatpush1.bf16.xpose.msra.mxu0 0
        %1036 = vmatprep.subr.bf16.mxu0 0
        %1037 = vmatpush1.bf16.xpose.msra.mxu0 0
        %1038 = vmatprep.subr.bf16.mxu0 0
        %1039 = vmatpush1.bf16.xpose.msra.mxu0 %v1022
        %1040 = vmatprep.subr.bf16.mxu0 0
        %1041 = vmatpush2.bf16.xpose.msra.mxu0 0
        %1042 = vmatprep.subr.bf16.mxu0 0
        %1043 = vmatpush2.bf16.xpose.msra.mxu0 0
        %1044 = vmatprep.subr.bf16.mxu0 0
        %1045 = vmatpush2.bf16.xpose.msra.mxu0 0
        %1046 = vmatprep.subr.bf16.mxu0 0
        %1047 = vmatpush2.bf16.xpose.msra.mxu0 0
        %1048 = vmatprep.subr.bf16.mxu0 0
        %1049 = vmatpush2.bf16.xpose.msra.mxu0 0
        %1050 = vmatprep.subr.bf16.mxu0 0
        %1051 = vmatpush2.bf16.xpose.msra.mxu0 0
        %1052 = vmatprep.subr.bf16.mxu0 0
        %1053 = vmatpush2.bf16.xpose.msra.mxu0 0
        %1054 = vmatprep.subr.bf16.mxu0 0
        %1055 = vmatpush2.bf16.xpose.msra.mxu0 0
        %1056 = vmatprep.mubr.bf16.mxu0 0
        %1057 = vmatmul.mubr.bf16.gmra.mxu0 %v1019
        %v1058 = vpop.f32.mrf.mxu0
        %v1059 = vadd.f32 0.0, %v1058
        %v1060 = vpop.f32.mrf.mxu0
        %v1061 = vpop.f32.mrf.mxu0
        %v1062 = vpop.f32.mrf.mxu0
        %1063 = vdwg.mxu0
        %v1064 = vmul.f32 %v1059, 0.35355338
        %v1065 = vadd.f32 %v1064, %v586
        %s1066 = scalar_lea.vmem [#allocation2], 8
        %v1067 = vld [vmem:[%s1066] sm:$0xff]
        %v1068 = vsel %vm768, %v1065, -inf
        %1069 = vmax.xlane.f32.xlu0 %v1068
        %v1070 = vpop.xlane.xlu0 %1069
        %v1071 = vmax.f32 %v1067, %v1070
        %vm1072 = vcmp.eq.f32.partialorder %v1071, -inf
        %v1073 = vsel %vm1072, 0.0, %v1071
        %v1074 = vsub.f32 %v1067, %v1073
        %v1075 = vmul.f32 %v1074, 1.442695
        %v1076 = vpow.pop %v1075
        %1078 = vset.pattern.permute.xlu0 0
        %1079 = vperm.xlu0 %1078, %v1073
        %v1080 = vpop.permute.xlu0 %1079
        %v1082 = vsub.f32 %v1065, %v1080
        %v1083 = vmul.f32 %v1082, 1.442695
        %v1084 = vpow.pop %v1083
        %s1085 = scalar_lea.vmem [#allocation3], 8
        %v1086 = vld [vmem:[%s1085] sm:$0xff]
        %v1087 = vmul.f32 %v1076, %v1086
        %v1088 = vsel %vm768, %v1084, 0.0
        %1089 = vadd.xlane.f32.xlu0 %v1088
        %v1090 = vpop.xlane.xlu0 %1089
        %v1091 = vadd.f32 %v1087, %v1090
        %1092 = vst.msk [vmem:[%s1085] sm:$0xff] %vm841, %v1091
        %s1093 = scalar_lea.vmem [#allocation4], 8
        %v1094 = vld [vmem:[%s1093] sm:$0xff]
        %1096 = vset.pattern.permute.xlu0 0
        %1097 = vperm.xlu0 %1096, %v1076
        %v1098 = vpop.permute.xlu0 %1097
        %v1100 = vmul.f32 %v1098, %v1094
        %v1101 = vpack.c.bf16 %v1084, %v1084
        %v1102 = vrot.slane %v915, 1
        %v1103 = vsel %vm660, %v916, %v1102
        %v1104 = vrot.slane %v917, 7
        %v1105 = vsel %vm663, %v1104, %v1103
        %v1106 = vrot.slane %v918, 6
        %v1107 = vsel %vm666, %v1106, %v1105
        %v1108 = vrot.slane %v919, 5
        %v1109 = vsel %vm669, %v1108, %v1107
        %v1110 = vrot.slane %v920, 4
        %v1111 = vsel %vm672, %v1110, %v1109
        %v1112 = vrot.slane %v921, 3
        %v1113 = vsel %vm675, %v1112, %v1111
        %v1114 = vrot.slane %v922, 2
        %v1115 = vsel %vm678, %v1114, %v1113
        %v1116 = vpack.c.b16 %v1115, %v1115
        %v1118 = vsel %vm768, %v1101, 0
        %v1121 = vsel %vm941, %v1116, 0
        %1123 = vmatprep.subr.bf16.mxu0 0
        %1124 = vmatpush1.bf16.msra.mxu0 0
        %1125 = vmatprep.subr.bf16.mxu0 0
        %1126 = vmatpush1.bf16.msra.mxu0 0
        %1127 = vmatprep.subr.bf16.mxu0 0
        %1128 = vmatpush1.bf16.msra.mxu0 0
        %1129 = vmatprep.subr.bf16.mxu0 0
        %1130 = vmatpush1.bf16.msra.mxu0 0
        %1131 = vmatprep.subr.bf16.mxu0 0
        %1132 = vmatpush1.bf16.msra.mxu0 0
        %1133 = vmatprep.subr.bf16.mxu0 0
        %1134 = vmatpush1.bf16.msra.mxu0 0
        %1135 = vmatprep.subr.bf16.mxu0 0
        %1136 = vmatpush1.bf16.msra.mxu0 0
        %1137 = vmatprep.subr.bf16.mxu0 0
        %1138 = vmatpush1.bf16.msra.mxu0 %v1121
        %1139 = vmatprep.subr.bf16.mxu0 0
        %1140 = vmatpush2.bf16.msra.mxu0 0
        %1141 = vmatprep.subr.bf16.mxu0 0
        %1142 = vmatpush2.bf16.msra.mxu0 0
        %1143 = vmatprep.subr.bf16.mxu0 0
        %1144 = vmatpush2.bf16.msra.mxu0 0
        %1145 = vmatprep.subr.bf16.mxu0 0
        %1146 = vmatpush2.bf16.msra.mxu0 0
        %1147 = vmatprep.subr.bf16.mxu0 0
        %1148 = vmatpush2.bf16.msra.mxu0 0
        %1149 = vmatprep.subr.bf16.mxu0 0
        %1150 = vmatpush2.bf16.msra.mxu0 0
        %1151 = vmatprep.subr.bf16.mxu0 0
        %1152 = vmatpush2.bf16.msra.mxu0 0
        %1153 = vmatprep.subr.bf16.mxu0 0
        %1154 = vmatpush2.bf16.msra.mxu0 0
        %1155 = vmatprep.mubr.bf16.mxu0 0
        %1156 = vmatmul.mubr.bf16.gmra.mxu0 %v1118
        %v1157 = vpop.f32.mrf.mxu0
        %v1158 = vadd.f32 0.0, %v1157
        %v1159 = vpop.f32.mrf.mxu0
        %v1160 = vpop.f32.mrf.mxu0
        %v1161 = vpop.f32.mrf.mxu0
        %1162 = vdwg.mxu0
        %v1163 = vadd.f32 %v1100, %v1158
        %1164 = vst.msk [vmem:[%s1093] sm:$0xff] %vm768, %v1163
        %1165 = vst.msk [vmem:[%s1066] sm:$0xff] %vm841, %v1071
        %v1166 = vrot.slane %v651, 2
        %v1167 = vrot.slane %v652, 1
        %v1168 = vsel %vm660, %v1167, %v1166
        %v1169 = vsel %vm663, %v653, %v1168
        %v1170 = vrot.slane %v654, 7
        %v1171 = vsel %vm666, %v1170, %v1169
        %v1172 = vrot.slane %v655, 6
        %v1173 = vsel %vm669, %v1172, %v1171
        %v1174 = vrot.slane %v656, 5
        %v1175 = vsel %vm672, %v1174, %v1173
        %v1176 = vrot.slane %v657, 4
        %v1177 = vsel %vm675, %v1176, %v1175
        %v1178 = vrot.slane %v658, 3
        %v1179 = vsel %vm678, %v1178, %v1177
        %v1180 = vpack.c.b16 %v1179, %v1179
        %v1181 = vrot.slane %v745, 2
        %v1182 = vrot.slane %v746, 1
        %v1183 = vsel %vm660, %v1182, %v1181
        %v1184 = vsel %vm663, %v747, %v1183
        %v1185 = vrot.slane %v748, 7
        %v1186 = vsel %vm666, %v1185, %v1184
        %v1187 = vrot.slane %v749, 6
        %v1188 = vsel %vm669, %v1187, %v1186
        %v1189 = vrot.slane %v750, 5
        %v1190 = vsel %vm672, %v1189, %v1188
        %v1191 = vrot.slane %v751, 4
        %v1192 = vsel %vm675, %v1191, %v1190
        %v1193 = vrot.slane %v752, 3
        %v1194 = vsel %vm678, %v1193, %v1192
        %v1195 = vpack.c.b16 %v1194, %v1194
        %v1197 = vsel %vm768, %v1180, 0
        %v1200 = vsel %vm768, %v1195, 0
        %1202 = vmatprep.subr.bf16.mxu0 0
        %1203 = vmatpush1.bf16.xpose.msra.mxu0 0
        %1204 = vmatprep.subr.bf16.mxu0 0
        %1205 = vmatpush1.bf16.xpose.msra.mxu0 0
        %1206 = vmatprep.subr.bf16.mxu0 0
        %1207 = vmatpush1.bf16.xpose.msra.mxu0 0
        %1208 = vmatprep.subr.bf16.mxu0 0
        %1209 = vmatpush1.bf16.xpose.msra.mxu0 0
        %1210 = vmatprep.subr.bf16.mxu0 0
        %1211 = vmatpush1.bf16.xpose.msra.mxu0 0
        %1212 = vmatprep.subr.bf16.mxu0 0
        %1213 = vmatpush1.bf16.xpose.msra.mxu0 0
        %1214 = vmatprep.subr.bf16.mxu0 0
        %1215 = vmatpush1.bf16.xpose.msra.mxu0 0
        %1216 = vmatprep.subr.bf16.mxu0 0
        %1217 = vmatpush1.bf16.xpose.msra.mxu0 %v1200
        %1218 = vmatprep.subr.bf16.mxu0 0
        %1219 = vmatpush2.bf16.xpose.msra.mxu0 0
        %1220 = vmatprep.subr.bf16.mxu0 0
        %1221 = vmatpush2.bf16.xpose.msra.mxu0 0
        %1222 = vmatprep.subr.bf16.mxu0 0
        %1223 = vmatpush2.bf16.xpose.msra.mxu0 0
        %1224 = vmatprep.subr.bf16.mxu0 0
        %1225 = vmatpush2.bf16.xpose.msra.mxu0 0
        %1226 = vmatprep.subr.bf16.mxu0 0
        %1227 = vmatpush2.bf16.xpose.msra.mxu0 0
        %1228 = vmatprep.subr.bf16.mxu0 0
        %1229 = vmatpush2.bf16.xpose.msra.mxu0 0
        %1230 = vmatprep.subr.bf16.mxu0 0
        %1231 = vmatpush2.bf16.xpose.msra.mxu0 0
        %1232 = vmatprep.subr.bf16.mxu0 0
        %1233 = vmatpush2.bf16.xpose.msra.mxu0 0
        %1234 = vmatprep.mubr.bf16.mxu0 0
        %1235 = vmatmul.mubr.bf16.gmra.mxu0 %v1197
        %v1236 = vpop.f32.mrf.mxu0
        %v1237 = vadd.f32 0.0, %v1236
        %v1238 = vpop.f32.mrf.mxu0
        %v1239 = vpop.f32.mrf.mxu0
        %v1240 = vpop.f32.mrf.mxu0
        %1241 = vdwg.mxu0
        %v1242 = vmul.f32 %v1237, 0.35355338
        %v1243 = vadd.f32 %v1242, %v586
        %s1244 = scalar_lea.vmem [#allocation2], 16
        %v1245 = vld [vmem:[%s1244] sm:$0xff]
        %v1246 = vsel %vm768, %v1243, -inf
        %1247 = vmax.xlane.f32.xlu0 %v1246
        %v1248 = vpop.xlane.xlu0 %1247
        %v1249 = vmax.f32 %v1245, %v1248
        %vm1250 = vcmp.eq.f32.partialorder %v1249, -inf
        %v1251 = vsel %vm1250, 0.0, %v1249
        %v1252 = vsub.f32 %v1245, %v1251
        %v1253 = vmul.f32 %v1252, 1.442695
        %v1254 = vpow.pop %v1253
        %1256 = vset.pattern.permute.xlu0 0
        %1257 = vperm.xlu0 %1256, %v1251
        %v1258 = vpop.permute.xlu0 %1257
        %v1260 = vsub.f32 %v1243, %v1258
        %v1261 = vmul.f32 %v1260, 1.442695
        %v1262 = vpow.pop %v1261
        %s1263 = scalar_lea.vmem [#allocation3], 16
        %v1264 = vld [vmem:[%s1263] sm:$0xff]
        %v1265 = vmul.f32 %v1254, %v1264
        %v1266 = vsel %vm768, %v1262, 0.0
        %1267 = vadd.xlane.f32.xlu0 %v1266
        %v1268 = vpop.xlane.xlu0 %1267
        %v1269 = vadd.f32 %v1265, %v1268
        %1270 = vst.msk [vmem:[%s1263] sm:$0xff] %vm841, %v1269
        %s1271 = scalar_lea.vmem [#allocation4], 16
        %v1272 = vld [vmem:[%s1271] sm:$0xff]
        %1274 = vset.pattern.permute.xlu0 0
        %1275 = vperm.xlu0 %1274, %v1254
        %v1276 = vpop.permute.xlu0 %1275
        %v1278 = vmul.f32 %v1276, %v1272
        %v1279 = vpack.c.bf16 %v1262, %v1262
        %v1280 = vrot.slane %v915, 2
        %v1281 = vrot.slane %v916, 1
        %v1282 = vsel %vm660, %v1281, %v1280
        %v1283 = vsel %vm663, %v917, %v1282
        %v1284 = vrot.slane %v918, 7
        %v1285 = vsel %vm666, %v1284, %v1283
        %v1286 = vrot.slane %v919, 6
        %v1287 = vsel %vm669, %v1286, %v1285
        %v1288 = vrot.slane %v920, 5
        %v1289 = vsel %vm672, %v1288, %v1287
        %v1290 = vrot.slane %v921, 4
        %v1291 = vsel %vm675, %v1290, %v1289
        %v1292 = vrot.slane %v922, 3
        %v1293 = vsel %vm678, %v1292, %v1291
        %v1294 = vpack.c.b16 %v1293, %v1293
        %v1296 = vsel %vm768, %v1279, 0
        %v1299 = vsel %vm941, %v1294, 0
        %1301 = vmatprep.subr.bf16.mxu0 0
        %1302 = vmatpush1.bf16.msra.mxu0 0
        %1303 = vmatprep.subr.bf16.mxu0 0
        %1304 = vmatpush1.bf16.msra.mxu0 0
        %1305 = vmatprep.subr.bf16.mxu0 0
        %1306 = vmatpush1.bf16.msra.mxu0 0
        %1307 = vmatprep.subr.bf16.mxu0 0
        %1308 = vmatpush1.bf16.msra.mxu0 0
        %1309 = vmatprep.subr.bf16.mxu0 0
        %1310 = vmatpush1.bf16.msra.mxu0 0
        %1311 = vmatprep.subr.bf16.mxu0 0
        %1312 = vmatpush1.bf16.msra.mxu0 0
        %1313 = vmatprep.subr.bf16.mxu0 0
        %1314 = vmatpush1.bf16.msra.mxu0 0
        %1315 = vmatprep.subr.bf16.mxu0 0
        %1316 = vmatpush1.bf16.msra.mxu0 %v1299
        %1317 = vmatprep.subr.bf16.mxu0 0
        %1318 = vmatpush2.bf16.msra.mxu0 0
        %1319 = vmatprep.subr.bf16.mxu0 0
        %1320 = vmatpush2.bf16.msra.mxu0 0
        %1321 = vmatprep.subr.bf16.mxu0 0
        %1322 = vmatpush2.bf16.msra.mxu0 0
        %1323 = vmatprep.subr.bf16.mxu0 0
        %1324 = vmatpush2.bf16.msra.mxu0 0
        %1325 = vmatprep.subr.bf16.mxu0 0
        %1326 = vmatpush2.bf16.msra.mxu0 0
        %1327 = vmatprep.subr.bf16.mxu0 0
        %1328 = vmatpush2.bf16.msra.mxu0 0
        %1329 = vmatprep.subr.bf16.mxu0 0
        %1330 = vmatpush2.bf16.msra.mxu0 0
        %1331 = vmatprep.subr.bf16.mxu0 0
        %1332 = vmatpush2.bf16.msra.mxu0 0
        %1333 = vmatprep.mubr.bf16.mxu0 0
        %1334 = vmatmul.mubr.bf16.gmra.mxu0 %v1296
        %v1335 = vpop.f32.mrf.mxu0
        %v1336 = vadd.f32 0.0, %v1335
        %v1337 = vpop.f32.mrf.mxu0
        %v1338 = vpop.f32.mrf.mxu0
        %v1339 = vpop.f32.mrf.mxu0
        %1340 = vdwg.mxu0
        %v1341 = vadd.f32 %v1278, %v1336
        %1342 = vst.msk [vmem:[%s1271] sm:$0xff] %vm768, %v1341
        %1343 = vst.msk [vmem:[%s1244] sm:$0xff] %vm841, %v1249
        %v1344 = vrot.slane %v651, 3
        %v1345 = vrot.slane %v652, 2
        %v1346 = vsel %vm660, %v1345, %v1344
        %v1347 = vrot.slane %v653, 1
        %v1348 = vsel %vm663, %v1347, %v1346
        %v1349 = vsel %vm666, %v654, %v1348
        %v1350 = vrot.slane %v655, 7
        %v1351 = vsel %vm669, %v1350, %v1349
        %v1352 = vrot.slane %v656, 6
        %v1353 = vsel %vm672, %v1352, %v1351
        %v1354 = vrot.slane %v657, 5
        %v1355 = vsel %vm675, %v1354, %v1353
        %v1356 = vrot.slane %v658, 4
        %v1357 = vsel %vm678, %v1356, %v1355
        %v1358 = vpack.c.b16 %v1357, %v1357
        %v1359 = vrot.slane %v745, 3
        %v1360 = vrot.slane %v746, 2
        %v1361 = vsel %vm660, %v1360, %v1359
        %v1362 = vrot.slane %v747, 1
        %v1363 = vsel %vm663, %v1362, %v1361
        %v1364 = vsel %vm666, %v748, %v1363
        %v1365 = vrot.slane %v749, 7
        %v1366 = vsel %vm669, %v1365, %v1364
        %v1367 = vrot.slane %v750, 6
        %v1368 = vsel %vm672, %v1367, %v1366
        %v1369 = vrot.slane %v751, 5
        %v1370 = vsel %vm675, %v1369, %v1368
        %v1371 = vrot.slane %v752, 4
        %v1372 = vsel %vm678, %v1371, %v1370
        %v1373 = vpack.c.b16 %v1372, %v1372
        %v1375 = vsel %vm768, %v1358, 0
        %v1378 = vsel %vm768, %v1373, 0
        %1380 = vmatprep.subr.bf16.mxu0 0
        %1381 = vmatpush1.bf16.xpose.msra.mxu0 0
        %1382 = vmatprep.subr.bf16.mxu0 0
        %1383 = vmatpush1.bf16.xpose.msra.mxu0 0
        %1384 = vmatprep.subr.bf16.mxu0 0
        %1385 = vmatpush1.bf16.xpose.msra.mxu0 0
        %1386 = vmatprep.subr.bf16.mxu0 0
        %1387 = vmatpush1.bf16.xpose.msra.mxu0 0
        %1388 = vmatprep.subr.bf16.mxu0 0
        %1389 = vmatpush1.bf16.xpose.msra.mxu0 0
        %1390 = vmatprep.subr.bf16.mxu0 0
        %1391 = vmatpush1.bf16.xpose.msra.mxu0 0
        %1392 = vmatprep.subr.bf16.mxu0 0
        %1393 = vmatpush1.bf16.xpose.msra.mxu0 0
        %1394 = vmatprep.subr.bf16.mxu0 0
        %1395 = vmatpush1.bf16.xpose.msra.mxu0 %v1378
        %1396 = vmatprep.subr.bf16.mxu0 0
        %1397 = vmatpush2.bf16.xpose.msra.mxu0 0
        %1398 = vmatprep.subr.bf16.mxu0 0
        %1399 = vmatpush2.bf16.xpose.msra.mxu0 0
        %1400 = vmatprep.subr.bf16.mxu0 0
        %1401 = vmatpush2.bf16.xpose.msra.mxu0 0
        %1402 = vmatprep.subr.bf16.mxu0 0
        %1403 = vmatpush2.bf16.xpose.msra.mxu0 0
        %1404 = vmatprep.subr.bf16.mxu0 0
        %1405 = vmatpush2.bf16.xpose.msra.mxu0 0
        %1406 = vmatprep.subr.bf16.mxu0 0
        %1407 = vmatpush2.bf16.xpose.msra.mxu0 0
        %1408 = vmatprep.subr.bf16.mxu0 0
        %1409 = vmatpush2.bf16.xpose.msra.mxu0 0
        %1410 = vmatprep.subr.bf16.mxu0 0
        %1411 = vmatpush2.bf16.xpose.msra.mxu0 0
        %1412 = vmatprep.mubr.bf16.mxu0 0
        %1413 = vmatmul.mubr.bf16.gmra.mxu0 %v1375
        %v1414 = vpop.f32.mrf.mxu0
        %v1415 = vadd.f32 0.0, %v1414
        %v1416 = vpop.f32.mrf.mxu0
        %v1417 = vpop.f32.mrf.mxu0
        %v1418 = vpop.f32.mrf.mxu0
        %1419 = vdwg.mxu0
        %v1420 = vmul.f32 %v1415, 0.35355338
        %v1421 = vadd.f32 %v1420, %v586
        %s1422 = scalar_lea.vmem [#allocation2], 24
        %v1423 = vld [vmem:[%s1422] sm:$0xff]
        %v1424 = vsel %vm768, %v1421, -inf
        %1425 = vmax.xlane.f32.xlu0 %v1424
        %v1426 = vpop.xlane.xlu0 %1425
        %v1427 = vmax.f32 %v1423, %v1426
        %vm1428 = vcmp.eq.f32.partialorder %v1427, -inf
        %v1429 = vsel %vm1428, 0.0, %v1427
        %v1430 = vsub.f32 %v1423, %v1429
        %v1431 = vmul.f32 %v1430, 1.442695
        %v1432 = vpow.pop %v1431
        %1434 = vset.pattern.permute.xlu0 0
        %1435 = vperm.xlu0 %1434, %v1429
        %v1436 = vpop.permute.xlu0 %1435
        %v1438 = vsub.f32 %v1421, %v1436
        %v1439 = vmul.f32 %v1438, 1.442695
        %v1440 = vpow.pop %v1439
        %s1441 = scalar_lea.vmem [#allocation3], 24
        %v1442 = vld [vmem:[%s1441] sm:$0xff]
        %v1443 = vmul.f32 %v1432, %v1442
        %v1444 = vsel %vm768, %v1440, 0.0
        %1445 = vadd.xlane.f32.xlu0 %v1444
        %v1446 = vpop.xlane.xlu0 %1445
        %v1447 = vadd.f32 %v1443, %v1446
        %1448 = vst.msk [vmem:[%s1441] sm:$0xff] %vm841, %v1447
        %s1449 = scalar_lea.vmem [#allocation4], 24
        %v1450 = vld [vmem:[%s1449] sm:$0xff]
        %1452 = vset.pattern.permute.xlu0 0
        %1453 = vperm.xlu0 %1452, %v1432
        %v1454 = vpop.permute.xlu0 %1453
        %v1456 = vmul.f32 %v1454, %v1450
        %v1457 = vpack.c.bf16 %v1440, %v1440
        %v1458 = vrot.slane %v915, 3
        %v1459 = vrot.slane %v916, 2
        %v1460 = vsel %vm660, %v1459, %v1458
        %v1461 = vrot.slane %v917, 1
        %v1462 = vsel %vm663, %v1461, %v1460
        %v1463 = vsel %vm666, %v918, %v1462
        %v1464 = vrot.slane %v919, 7
        %v1465 = vsel %vm669, %v1464, %v1463
        %v1466 = vrot.slane %v920, 6
        %v1467 = vsel %vm672, %v1466, %v1465
        %v1468 = vrot.slane %v921, 5
        %v1469 = vsel %vm675, %v1468, %v1467
        %v1470 = vrot.slane %v922, 4
        %v1471 = vsel %vm678, %v1470, %v1469
        %v1472 = vpack.c.b16 %v1471, %v1471
        %v1474 = vsel %vm768, %v1457, 0
        %v1477 = vsel %vm941, %v1472, 0
        %1479 = vmatprep.subr.bf16.mxu0 0
        %1480 = vmatpush1.bf16.msra.mxu0 0
        %1481 = vmatprep.subr.bf16.mxu0 0
        %1482 = vmatpush1.bf16.msra.mxu0 0
        %1483 = vmatprep.subr.bf16.mxu0 0
        %1484 = vmatpush1.bf16.msra.mxu0 0
        %1485 = vmatprep.subr.bf16.mxu0 0
        %1486 = vmatpush1.bf16.msra.mxu0 0
        %1487 = vmatprep.subr.bf16.mxu0 0
        %1488 = vmatpush1.bf16.msra.mxu0 0
        %1489 = vmatprep.subr.bf16.mxu0 0
        %1490 = vmatpush1.bf16.msra.mxu0 0
        %1491 = vmatprep.subr.bf16.mxu0 0
        %1492 = vmatpush1.bf16.msra.mxu0 0
        %1493 = vmatprep.subr.bf16.mxu0 0
        %1494 = vmatpush1.bf16.msra.mxu0 %v1477
        %1495 = vmatprep.subr.bf16.mxu0 0
        %1496 = vmatpush2.bf16.msra.mxu0 0
        %1497 = vmatprep.subr.bf16.mxu0 0
        %1498 = vmatpush2.bf16.msra.mxu0 0
        %1499 = vmatprep.subr.bf16.mxu0 0
        %1500 = vmatpush2.bf16.msra.mxu0 0
        %1501 = vmatprep.subr.bf16.mxu0 0
        %1502 = vmatpush2.bf16.msra.mxu0 0
        %1503 = vmatprep.subr.bf16.mxu0 0
        %1504 = vmatpush2.bf16.msra.mxu0 0
        %1505 = vmatprep.subr.bf16.mxu0 0
        %1506 = vmatpush2.bf16.msra.mxu0 0
        %1507 = vmatprep.subr.bf16.mxu0 0
        %1508 = vmatpush2.bf16.msra.mxu0 0
        %1509 = vmatprep.subr.bf16.mxu0 0
        %1510 = vmatpush2.bf16.msra.mxu0 0
        %1511 = vmatprep.mubr.bf16.mxu0 0
        %1512 = vmatmul.mubr.bf16.gmra.mxu0 %v1474
        %v1513 = vpop.f32.mrf.mxu0
        %v1514 = vadd.f32 0.0, %v1513
        %v1515 = vpop.f32.mrf.mxu0
        %v1516 = vpop.f32.mrf.mxu0
        %v1517 = vpop.f32.mrf.mxu0
        %1518 = vdwg.mxu0
        %v1519 = vadd.f32 %v1456, %v1514
        %1520 = vst.msk [vmem:[%s1449] sm:$0xff] %vm768, %v1519
        %1521 = vst.msk [vmem:[%s1422] sm:$0xff] %vm841, %v1427
        // Predicated region
        $region164: #{transformer_layer.5} parent=146 // pred_check
          %p1522 = pneg %p544
        $region165: #{transformer_layer.5} parent=146 // pred_check_branch
          %1524 = sbr.rel (%p1522) target = $region167
        $region166: #{transformer_layer.5} parent=146 // pred_region
          %v1525 = vld [vmem:[#allocation3] sm:$0xff]
          %vm1526 = vcmp.eq.f32.partialorder %v1525, 0.0
          %v1527 = vsel %vm1526, 1.0, %v1525
          %v1528 = vld [vmem:[#allocation4] sm:$0xff]
          %v1529 = vrcp.pop %v1527
          %1531 = vset.pattern.permute.xlu0 0
          %1532 = vperm.xlu0 %1531, %v1529
          %v1533 = vpop.permute.xlu0 %1532
          %v1535 = vmul.f32 %v1528, %v1533
          %v1536 = vpack.c.bf16 %v1535, %v1535
          %v1539 = vunpack.c.l.s4 1966171168
          %v1540 = vunpack.c.0.s8 %v1539
          %v1541 = vlaneseq
          %v1542 = vshrl.u32 %v1541, 7
          %v1543 = vsub.s32 %v1540, %v1542
          %v1544 = vrot.slane %v1536, %v1543
          %v1545 = vcombine.high %v1544, %v1544
          %v1547 = vunpack.c.l.s4 1966171168
          %v1548 = vunpack.c.0.s8 %v1547
          %v1549 = vlaneseq
          %v1550 = vshrl.u32 %v1549, 7
          %v1551 = vsub.s32 %v1548, %v1550
          %v1552 = vrot.slane %v1544, %v1551
          %v1554 = vunpack.c.l.s4 1966171168
          %v1555 = vunpack.c.0.s8 %v1554
          %v1556 = vlaneseq
          %v1557 = vshrl.u32 %v1556, 7
          %v1558 = vsub.s32 %v1555, %v1557
          %v1559 = vrot.slane %v1545, %v1558
          %v1560 = vcombine.high %v1552, %v1552
          %v1561 = vcombine.high %v1559, %v1559
          %v1562 = vunpack.i.l.s16 %v1552
          %v1563 = vunpack.i.h.s16 %v1552
          %v1564 = vunpack.i.l.s16 %v1559
          %v1565 = vunpack.i.h.s16 %v1559
          %v1566 = vunpack.i.l.s16 %v1560
          %v1567 = vunpack.i.h.s16 %v1560
          %v1568 = vunpack.i.l.s16 %v1561
          %v1569 = vunpack.i.h.s16 %v1561
          %v1570 = vpack.i.b16 %v1562, %v1562
          %v1571 = vpack.i.b16 %v1563, %v1563
          %v1572 = vpack.i.b16 %v1564, %v1564
          %v1573 = vpack.i.b16 %v1565, %v1565
          %v1574 = vpack.i.b16 %v1566, %v1566
          %v1575 = vpack.i.b16 %v1567, %v1567
          %v1576 = vpack.i.b16 %v1568, %v1568
          %v1577 = vpack.i.b16 %v1569, %v1569
          %v1579 = vunpack.c.l.s4 857870592
          %v1580 = vunpack.c.0.s8 %v1579
          %v1581 = vlaneseq
          %v1582 = vshrl.u32 %v1581, 7
          %v1583 = vsub.s32 %v1580, %v1582
          %v1584 = vrot.slane %v1570, %v1583
          %v1586 = vunpack.c.l.s4 857870592
          %v1587 = vunpack.c.0.s8 %v1586
          %v1588 = vlaneseq
          %v1589 = vshrl.u32 %v1588, 7
          %v1590 = vsub.s32 %v1587, %v1589
          %v1591 = vrot.slane %v1571, %v1590
          %v1593 = vunpack.c.l.s4 857870592
          %v1594 = vunpack.c.0.s8 %v1593
          %v1595 = vlaneseq
          %v1596 = vshrl.u32 %v1595, 7
          %v1597 = vsub.s32 %v1594, %v1596
          %v1598 = vrot.slane %v1572, %v1597
          %v1600 = vunpack.c.l.s4 857870592
          %v1601 = vunpack.c.0.s8 %v1600
          %v1602 = vlaneseq
          %v1603 = vshrl.u32 %v1602, 7
          %v1604 = vsub.s32 %v1601, %v1603
          %v1605 = vrot.slane %v1573, %v1604
          %v1607 = vunpack.c.l.s4 857870592
          %v1608 = vunpack.c.0.s8 %v1607
          %v1609 = vlaneseq
          %v1610 = vshrl.u32 %v1609, 7
          %v1611 = vsub.s32 %v1608, %v1610
          %v1612 = vrot.slane %v1574, %v1611
          %v1614 = vunpack.c.l.s4 857870592
          %v1615 = vunpack.c.0.s8 %v1614
          %v1616 = vlaneseq
          %v1617 = vshrl.u32 %v1616, 7
          %v1618 = vsub.s32 %v1615, %v1617
          %v1619 = vrot.slane %v1575, %v1618
          %v1621 = vunpack.c.l.s4 857870592
          %v1622 = vunpack.c.0.s8 %v1621
          %v1623 = vlaneseq
          %v1624 = vshrl.u32 %v1623, 7
          %v1625 = vsub.s32 %v1622, %v1624
          %v1626 = vrot.slane %v1576, %v1625
          %v1628 = vunpack.c.l.s4 857870592
          %v1629 = vunpack.c.0.s8 %v1628
          %v1630 = vlaneseq
          %v1631 = vshrl.u32 %v1630, 7
          %v1632 = vsub.s32 %v1629, %v1631
          %v1633 = vrot.slane %v1577, %v1632
          %vm1642 = vcmask 57344
          %vm1643 = vsmask.f32 256
          %vm1644 = vmand %vm1642, %vm1643
          %v1645 = vld [vmem:[%s541] sm:$0x1]
          %v1646 = vsel %vm1644, %v1584, %v1645
          %1647 = vst [vmem:[%s541] sm:$0x1] %v1646
          %v1648 = vld [vmem:[%s541 + $0x2] sm:$0x1]
          %v1649 = vsel %vm1644, %v1591, %v1648
          %1650 = vst [vmem:[%s541 + $0x2] sm:$0x1] %v1649
          %v1651 = vld [vmem:[%s541 + $0x4] sm:$0x1]
          %v1652 = vsel %vm1644, %v1598, %v1651
          %1653 = vst [vmem:[%s541 + $0x4] sm:$0x1] %v1652
          %v1654 = vld [vmem:[%s541 + $0x6] sm:$0x1]
          %v1655 = vsel %vm1644, %v1605, %v1654
          %1656 = vst [vmem:[%s541 + $0x6] sm:$0x1] %v1655
          %v1657 = vld [vmem:[%s541 + $0x8] sm:$0x1]
          %v1658 = vsel %vm1644, %v1612, %v1657
          %1659 = vst [vmem:[%s541 + $0x8] sm:$0x1] %v1658
          %v1660 = vld [vmem:[%s541 + $0xa] sm:$0x1]
          %v1661 = vsel %vm1644, %v1619, %v1660
          %1662 = vst [vmem:[%s541 + $0xa] sm:$0x1] %v1661
          %v1663 = vld [vmem:[%s541 + $0xc] sm:$0x1]
          %v1664 = vsel %vm1644, %v1626, %v1663
          %1665 = vst [vmem:[%s541 + $0xc] sm:$0x1] %v1664
          %v1666 = vld [vmem:[%s541 + $0xe] sm:$0x1]
          %v1667 = vsel %vm1644, %v1633, %v1666
          %1668 = vst [vmem:[%s541 + $0xe] sm:$0x1] %v1667
          %v1669 = vld [vmem:[%s1085] sm:$0xff]
          %vm1670 = vcmp.eq.f32.partialorder %v1669, 0.0
          %v1671 = vsel %vm1670, 1.0, %v1669
          %v1672 = vld [vmem:[%s1093] sm:$0xff]
          %v1673 = vrcp.pop %v1671
          %1675 = vset.pattern.permute.xlu0 0
          %1676 = vperm.xlu0 %1675, %v1673
          %v1677 = vpop.permute.xlu0 %1676
          %v1679 = vmul.f32 %v1672, %v1677
          %v1680 = vpack.c.bf16 %v1679, %v1679
          %v1683 = vunpack.c.l.s4 1966171168
          %v1684 = vunpack.c.0.s8 %v1683
          %v1685 = vlaneseq
          %v1686 = vshrl.u32 %v1685, 7
          %v1687 = vsub.s32 %v1684, %v1686
          %v1688 = vrot.slane %v1680, %v1687
          %v1689 = vcombine.high %v1688, %v1688
          %v1691 = vunpack.c.l.s4 1966171168
          %v1692 = vunpack.c.0.s8 %v1691
          %v1693 = vlaneseq
          %v1694 = vshrl.u32 %v1693, 7
          %v1695 = vsub.s32 %v1692, %v1694
          %v1696 = vrot.slane %v1688, %v1695
          %v1698 = vunpack.c.l.s4 1966171168
          %v1699 = vunpack.c.0.s8 %v1698
          %v1700 = vlaneseq
          %v1701 = vshrl.u32 %v1700, 7
          %v1702 = vsub.s32 %v1699, %v1701
          %v1703 = vrot.slane %v1689, %v1702
          %v1704 = vcombine.high %v1696, %v1696
          %v1705 = vcombine.high %v1703, %v1703
          %v1706 = vunpack.i.l.s16 %v1696
          %v1707 = vunpack.i.h.s16 %v1696
          %v1708 = vunpack.i.l.s16 %v1703
          %v1709 = vunpack.i.h.s16 %v1703
          %v1710 = vunpack.i.l.s16 %v1704
          %v1711 = vunpack.i.h.s16 %v1704
          %v1712 = vunpack.i.l.s16 %v1705
          %v1713 = vunpack.i.h.s16 %v1705
          %v1714 = vpack.i.b16 %v1706, %v1706
          %v1715 = vpack.i.b16 %v1707, %v1707
          %v1716 = vpack.i.b16 %v1708, %v1708
          %v1717 = vpack.i.b16 %v1709, %v1709
          %v1718 = vpack.i.b16 %v1710, %v1710
          %v1719 = vpack.i.b16 %v1711, %v1711
          %v1720 = vpack.i.b16 %v1712, %v1712
          %v1721 = vpack.i.b16 %v1713, %v1713
          %v1723 = vunpack.c.l.s4 857870592
          %v1724 = vunpack.c.0.s8 %v1723
          %v1725 = vlaneseq
          %v1726 = vshrl.u32 %v1725, 7
          %v1727 = vsub.s32 %v1724, %v1726
          %v1728 = vrot.slane %v1714, %v1727
          %v1730 = vunpack.c.l.s4 857870592
          %v1731 = vunpack.c.0.s8 %v1730
          %v1732 = vlaneseq
          %v1733 = vshrl.u32 %v1732, 7
          %v1734 = vsub.s32 %v1731, %v1733
          %v1735 = vrot.slane %v1715, %v1734
          %v1737 = vunpack.c.l.s4 857870592
          %v1738 = vunpack.c.0.s8 %v1737
          %v1739 = vlaneseq
          %v1740 = vshrl.u32 %v1739, 7
          %v1741 = vsub.s32 %v1738, %v1740
          %v1742 = vrot.slane %v1716, %v1741
          %v1744 = vunpack.c.l.s4 857870592
          %v1745 = vunpack.c.0.s8 %v1744
          %v1746 = vlaneseq
          %v1747 = vshrl.u32 %v1746, 7
          %v1748 = vsub.s32 %v1745, %v1747
          %v1749 = vrot.slane %v1717, %v1748
          %v1751 = vunpack.c.l.s4 857870592
          %v1752 = vunpack.c.0.s8 %v1751
          %v1753 = vlaneseq
          %v1754 = vshrl.u32 %v1753, 7
          %v1755 = vsub.s32 %v1752, %v1754
          %v1756 = vrot.slane %v1718, %v1755
          %v1758 = vunpack.c.l.s4 857870592
          %v1759 = vunpack.c.0.s8 %v1758
          %v1760 = vlaneseq
          %v1761 = vshrl.u32 %v1760, 7
          %v1762 = vsub.s32 %v1759, %v1761
          %v1763 = vrot.slane %v1719, %v1762
          %v1765 = vunpack.c.l.s4 857870592
          %v1766 = vunpack.c.0.s8 %v1765
          %v1767 = vlaneseq
          %v1768 = vshrl.u32 %v1767, 7
          %v1769 = vsub.s32 %v1766, %v1768
          %v1770 = vrot.slane %v1720, %v1769
          %v1772 = vunpack.c.l.s4 857870592
          %v1773 = vunpack.c.0.s8 %v1772
          %v1774 = vlaneseq
          %v1775 = vshrl.u32 %v1774, 7
          %v1776 = vsub.s32 %v1773, %v1775
          %v1777 = vrot.slane %v1721, %v1776
          %vm1786 = vsmask.f32 7938
          %vm1787 = vmand %vm1642, %vm1786
          %v1788 = vld [vmem:[%s541] sm:$0x1]
          %v1789 = vsel %vm1787, %v1728, %v1788
          %1790 = vst [vmem:[%s541] sm:$0x1] %v1789
          %v1791 = vld [vmem:[%s541 + $0x2] sm:$0x1]
          %v1792 = vsel %vm1787, %v1735, %v1791
          %1793 = vst [vmem:[%s541 + $0x2] sm:$0x1] %v1792
          %v1794 = vld [vmem:[%s541 + $0x4] sm:$0x1]
          %v1795 = vsel %vm1787, %v1742, %v1794
          %1796 = vst [vmem:[%s541 + $0x4] sm:$0x1] %v1795
          %v1797 = vld [vmem:[%s541 + $0x6] sm:$0x1]
          %v1798 = vsel %vm1787, %v1749, %v1797
          %1799 = vst [vmem:[%s541 + $0x6] sm:$0x1] %v1798
          %v1800 = vld [vmem:[%s541 + $0x8] sm:$0x1]
          %v1801 = vsel %vm1787, %v1756, %v1800
          %1802 = vst [vmem:[%s541 + $0x8] sm:$0x1] %v1801
          %v1803 = vld [vmem:[%s541 + $0xa] sm:$0x1]
          %v1804 = vsel %vm1787, %v1763, %v1803
          %1805 = vst [vmem:[%s541 + $0xa] sm:$0x1] %v1804
          %v1806 = vld [vmem:[%s541 + $0xc] sm:$0x1]
          %v1807 = vsel %vm1787, %v1770, %v1806
          %1808 = vst [vmem:[%s541 + $0xc] sm:$0x1] %v1807
          %v1809 = vld [vmem:[%s541 + $0xe] sm:$0x1]
          %v1810 = vsel %vm1787, %v1777, %v1809
          %1811 = vst [vmem:[%s541 + $0xe] sm:$0x1] %v1810
          %v1812 = vld [vmem:[%s1263] sm:$0xff]
          %vm1813 = vcmp.eq.f32.partialorder %v1812, 0.0
          %v1814 = vsel %vm1813, 1.0, %v1812
          %v1815 = vld [vmem:[%s1271] sm:$0xff]
          %v1816 = vrcp.pop %v1814
          %1818 = vset.pattern.permute.xlu0 0
          %1819 = vperm.xlu0 %1818, %v1816
          %v1820 = vpop.permute.xlu0 %1819
          %v1822 = vmul.f32 %v1815, %v1820
          %v1823 = vpack.c.bf16 %v1822, %v1822
          %v1826 = vunpack.c.l.s4 1966171168
          %v1827 = vunpack.c.0.s8 %v1826
          %v1828 = vlaneseq
          %v1829 = vshrl.u32 %v1828, 7
          %v1830 = vsub.s32 %v1827, %v1829
          %v1831 = vrot.slane %v1823, %v1830
          %v1832 = vcombine.high %v1831, %v1831
          %v1834 = vunpack.c.l.s4 1966171168
          %v1835 = vunpack.c.0.s8 %v1834
          %v1836 = vlaneseq
          %v1837 = vshrl.u32 %v1836, 7
          %v1838 = vsub.s32 %v1835, %v1837
          %v1839 = vrot.slane %v1831, %v1838
          %v1841 = vunpack.c.l.s4 1966171168
          %v1842 = vunpack.c.0.s8 %v1841
          %v1843 = vlaneseq
          %v1844 = vshrl.u32 %v1843, 7
          %v1845 = vsub.s32 %v1842, %v1844
          %v1846 = vrot.slane %v1832, %v1845
          %v1847 = vcombine.high %v1839, %v1839
          %v1848 = vcombine.high %v1846, %v1846
          %v1849 = vunpack.i.l.s16 %v1839
          %v1850 = vunpack.i.h.s16 %v1839
          %v1851 = vunpack.i.l.s16 %v1846
          %v1852 = vunpack.i.h.s16 %v1846
          %v1853 = vunpack.i.l.s16 %v1847
          %v1854 = vunpack.i.h.s16 %v1847
          %v1855 = vunpack.i.l.s16 %v1848
          %v1856 = vunpack.i.h.s16 %v1848
          %v1857 = vpack.i.b16 %v1849, %v1849
          %v1858 = vpack.i.b16 %v1850, %v1850
          %v1859 = vpack.i.b16 %v1851, %v1851
          %v1860 = vpack.i.b16 %v1852, %v1852
          %v1861 = vpack.i.b16 %v1853, %v1853
          %v1862 = vpack.i.b16 %v1854, %v1854
          %v1863 = vpack.i.b16 %v1855, %v1855
          %v1864 = vpack.i.b16 %v1856, %v1856
          %v1866 = vunpack.c.l.s4 857870592
          %v1867 = vunpack.c.0.s8 %v1866
          %v1868 = vlaneseq
          %v1869 = vshrl.u32 %v1868, 7
          %v1870 = vsub.s32 %v1867, %v1869
          %v1871 = vrot.slane %v1857, %v1870
          %v1873 = vunpack.c.l.s4 857870592
          %v1874 = vunpack.c.0.s8 %v1873
          %v1875 = vlaneseq
          %v1876 = vshrl.u32 %v1875, 7
          %v1877 = vsub.s32 %v1874, %v1876
          %v1878 = vrot.slane %v1858, %v1877
          %v1880 = vunpack.c.l.s4 857870592
          %v1881 = vunpack.c.0.s8 %v1880
          %v1882 = vlaneseq
          %v1883 = vshrl.u32 %v1882, 7
          %v1884 = vsub.s32 %v1881, %v1883
          %v1885 = vrot.slane %v1859, %v1884
          %v1887 = vunpack.c.l.s4 857870592
          %v1888 = vunpack.c.0.s8 %v1887
          %v1889 = vlaneseq
          %v1890 = vshrl.u32 %v1889, 7
          %v1891 = vsub.s32 %v1888, %v1890
          %v1892 = vrot.slane %v1860, %v1891
          %v1894 = vunpack.c.l.s4 857870592
          %v1895 = vunpack.c.0.s8 %v1894
          %v1896 = vlaneseq
          %v1897 = vshrl.u32 %v1896, 7
          %v1898 = vsub.s32 %v1895, %v1897
          %v1899 = vrot.slane %v1861, %v1898
          %v1901 = vunpack.c.l.s4 857870592
          %v1902 = vunpack.c.0.s8 %v1901
          %v1903 = vlaneseq
          %v1904 = vshrl.u32 %v1903, 7
          %v1905 = vsub.s32 %v1902, %v1904
          %v1906 = vrot.slane %v1862, %v1905
          %v1908 = vunpack.c.l.s4 857870592
          %v1909 = vunpack.c.0.s8 %v1908
          %v1910 = vlaneseq
          %v1911 = vshrl.u32 %v1910, 7
          %v1912 = vsub.s32 %v1909, %v1911
          %v1913 = vrot.slane %v1863, %v1912
          %v1915 = vunpack.c.l.s4 857870592
          %v1916 = vunpack.c.0.s8 %v1915
          %v1917 = vlaneseq
          %v1918 = vshrl.u32 %v1917, 7
          %v1919 = vsub.s32 %v1916, %v1918
          %v1920 = vrot.slane %v1864, %v1919
          %vm1929 = vcmask 58369
          %vm1930 = vsmask.f32 1280
          %vm1931 = vmand %vm1929, %vm1930
          %v1932 = vld [vmem:[%s541] sm:$0x2]
          %v1933 = vsel %vm1931, %v1871, %v1932
          %1934 = vst [vmem:[%s541] sm:$0x2] %v1933
          %v1935 = vld [vmem:[%s541 + $0x2] sm:$0x2]
          %v1936 = vsel %vm1931, %v1878, %v1935
          %1937 = vst [vmem:[%s541 + $0x2] sm:$0x2] %v1936
          %v1938 = vld [vmem:[%s541 + $0x4] sm:$0x2]
          %v1939 = vsel %vm1931, %v1885, %v1938
          %1940 = vst [vmem:[%s541 + $0x4] sm:$0x2] %v1939
          %v1941 = vld [vmem:[%s541 + $0x6] sm:$0x2]
          %v1942 = vsel %vm1931, %v1892, %v1941
          %1943 = vst [vmem:[%s541 + $0x6] sm:$0x2] %v1942
          %v1944 = vld [vmem:[%s541 + $0x8] sm:$0x2]
          %v1945 = vsel %vm1931, %v1899, %v1944
          %1946 = vst [vmem:[%s541 + $0x8] sm:$0x2] %v1945
          %v1947 = vld [vmem:[%s541 + $0xa] sm:$0x2]
          %v1948 = vsel %vm1931, %v1906, %v1947
          %1949 = vst [vmem:[%s541 + $0xa] sm:$0x2] %v1948
          %v1950 = vld [vmem:[%s541 + $0xc] sm:$0x2]
          %v1951 = vsel %vm1931, %v1913, %v1950
          %1952 = vst [vmem:[%s541 + $0xc] sm:$0x2] %v1951
          %v1953 = vld [vmem:[%s541 + $0xe] sm:$0x2]
          %v1954 = vsel %vm1931, %v1920, %v1953
          %1955 = vst [vmem:[%s541 + $0xe] sm:$0x2] %v1954
          %v1956 = vld [vmem:[%s1441] sm:$0xff]
          %vm1957 = vcmp.eq.f32.partialorder %v1956, 0.0
          %v1958 = vsel %vm1957, 1.0, %v1956
          %v1959 = vld [vmem:[%s1449] sm:$0xff]
          %v1960 = vrcp.pop %v1958
          %1962 = vset.pattern.permute.xlu0 0
          %1963 = vperm.xlu0 %1962, %v1960
          %v1964 = vpop.permute.xlu0 %1963
          %v1966 = vmul.f32 %v1959, %v1964
          %v1967 = vpack.c.bf16 %v1966, %v1966
          %v1970 = vunpack.c.l.s4 1966171168
          %v1971 = vunpack.c.0.s8 %v1970
          %v1972 = vlaneseq
          %v1973 = vshrl.u32 %v1972, 7
          %v1974 = vsub.s32 %v1971, %v1973
          %v1975 = vrot.slane %v1967, %v1974
          %v1976 = vcombine.high %v1975, %v1975
          %v1978 = vunpack.c.l.s4 1966171168
          %v1979 = vunpack.c.0.s8 %v1978
          %v1980 = vlaneseq
          %v1981 = vshrl.u32 %v1980, 7
          %v1982 = vsub.s32 %v1979, %v1981
          %v1983 = vrot.slane %v1975, %v1982
          %v1985 = vunpack.c.l.s4 1966171168
          %v1986 = vunpack.c.0.s8 %v1985
          %v1987 = vlaneseq
          %v1988 = vshrl.u32 %v1987, 7
          %v1989 = vsub.s32 %v1986, %v1988
          %v1990 = vrot.slane %v1976, %v1989
          %v1991 = vcombine.high %v1983, %v1983
          %v1992 = vcombine.high %v1990, %v1990
          %v1993 = vunpack.i.l.s16 %v1983
          %v1994 = vunpack.i.h.s16 %v1983
          %v1995 = vunpack.i.l.s16 %v1990
          %v1996 = vunpack.i.h.s16 %v1990
          %v1997 = vunpack.i.l.s16 %v1991
          %v1998 = vunpack.i.h.s16 %v1991
          %v1999 = vunpack.i.l.s16 %v1992
          %v2000 = vunpack.i.h.s16 %v1992
          %v2001 = vpack.i.b16 %v1993, %v1993
          %v2002 = vpack.i.b16 %v1994, %v1994
          %v2003 = vpack.i.b16 %v1995, %v1995
          %v2004 = vpack.i.b16 %v1996, %v1996
          %v2005 = vpack.i.b16 %v1997, %v1997
          %v2006 = vpack.i.b16 %v1998, %v1998
          %v2007 = vpack.i.b16 %v1999, %v1999
          %v2008 = vpack.i.b16 %v2000, %v2000
          %v2010 = vunpack.c.l.s4 857870592
          %v2011 = vunpack.c.0.s8 %v2010
          %v2012 = vlaneseq
          %v2013 = vshrl.u32 %v2012, 7
          %v2014 = vsub.s32 %v2011, %v2013
          %v2015 = vrot.slane %v2001, %v2014
          %v2017 = vunpack.c.l.s4 857870592
          %v2018 = vunpack.c.0.s8 %v2017
          %v2019 = vlaneseq
          %v2020 = vshrl.u32 %v2019, 7
          %v2021 = vsub.s32 %v2018, %v2020
          %v2022 = vrot.slane %v2002, %v2021
          %v2024 = vunpack.c.l.s4 857870592
          %v2025 = vunpack.c.0.s8 %v2024
          %v2026 = vlaneseq
          %v2027 = vshrl.u32 %v2026, 7
          %v2028 = vsub.s32 %v2025, %v2027
          %v2029 = vrot.slane %v2003, %v2028
          %v2031 = vunpack.c.l.s4 857870592
          %v2032 = vunpack.c.0.s8 %v2031
          %v2033 = vlaneseq
          %v2034 = vshrl.u32 %v2033, 7
          %v2035 = vsub.s32 %v2032, %v2034
          %v2036 = vrot.slane %v2004, %v2035
          %v2038 = vunpack.c.l.s4 857870592
          %v2039 = vunpack.c.0.s8 %v2038
          %v2040 = vlaneseq
          %v2041 = vshrl.u32 %v2040, 7
          %v2042 = vsub.s32 %v2039, %v2041
          %v2043 = vrot.slane %v2005, %v2042
          %v2045 = vunpack.c.l.s4 857870592
          %v2046 = vunpack.c.0.s8 %v2045
          %v2047 = vlaneseq
          %v2048 = vshrl.u32 %v2047, 7
          %v2049 = vsub.s32 %v2046, %v2048
          %v2050 = vrot.slane %v2006, %v2049
          %v2052 = vunpack.c.l.s4 857870592
          %v2053 = vunpack.c.0.s8 %v2052
          %v2054 = vlaneseq
          %v2055 = vshrl.u32 %v2054, 7
          %v2056 = vsub.s32 %v2053, %v2055
          %v2057 = vrot.slane %v2007, %v2056
          %v2059 = vunpack.c.l.s4 857870592
          %v2060 = vunpack.c.0.s8 %v2059
          %v2061 = vlaneseq
          %v2062 = vshrl.u32 %v2061, 7
          %v2063 = vsub.s32 %v2060, %v2062
          %v2064 = vrot.slane %v2008, %v2063
          %vm2073 = vsmask.f32 7942
          %vm2074 = vmand %vm1929, %vm2073
          %v2075 = vld [vmem:[%s541] sm:$0x2]
          %v2076 = vsel %vm2074, %v2015, %v2075
          %2077 = vst [vmem:[%s541] sm:$0x2] %v2076
          %v2078 = vld [vmem:[%s541 + $0x2] sm:$0x2]
          %v2079 = vsel %vm2074, %v2022, %v2078
          %2080 = vst [vmem:[%s541 + $0x2] sm:$0x2] %v2079
          %v2081 = vld [vmem:[%s541 + $0x4] sm:$0x2]
          %v2082 = vsel %vm2074, %v2029, %v2081
          %2083 = vst [vmem:[%s541 + $0x4] sm:$0x2] %v2082
          %v2084 = vld [vmem:[%s541 + $0x6] sm:$0x2]
          %v2085 = vsel %vm2074, %v2036, %v2084
          %2086 = vst [vmem:[%s541 + $0x6] sm:$0x2] %v2085
          %v2087 = vld [vmem:[%s541 + $0x8] sm:$0x2]
          %v2088 = vsel %vm2074, %v2043, %v2087
          %2089 = vst [vmem:[%s541 + $0x8] sm:$0x2] %v2088
          %v2090 = vld [vmem:[%s541 + $0xa] sm:$0x2]
          %v2091 = vsel %vm2074, %v2050, %v2090
          %2092 = vst [vmem:[%s541 + $0xa] sm:$0x2] %v2091
          %v2093 = vld [vmem:[%s541 + $0xc] sm:$0x2]
          %v2094 = vsel %vm2074, %v2057, %v2093
          %2095 = vst [vmem:[%s541 + $0xc] sm:$0x2] %v2094
          %v2096 = vld [vmem:[%s541 + $0xe] sm:$0x2]
          %v2097 = vsel %vm2074, %v2064, %v2096
          %2098 = vst [vmem:[%s541 + $0xe] sm:$0x2] %v2097
        $region167: #{transformer_layer.5} parent=146 // pred_fallthru
          _
        %s2099 = smul.u32 8, %s21
        %p2100 = scmp.lt.s32.totalorder %s20, 1
        %s2101 = scalar_select %p2100, %s20, 1
        %p2102 = scmp.lt.s32.totalorder %s2099, 7
        %s2103 = scalar_select %p2102, %s2099, 7
        %s2104 = smul.addr %s2101, 8
        %s2105 = sadd.s32 %s2103, %s2104
        %s2106 = smul.addr %s2105, 2
        %s2107 = scalar_lea.vmem %s4, %s2106
        // Predicated region
        $region168: #{transformer_layer.5} parent=146 // pred_check
          %p2108 = pneg %p168
        $region169: #{transformer_layer.5} parent=146 // pred_check_branch
          %2110 = sbr.rel (%p2108) target = $region171
        $region170: #{transformer_layer.5} parent=146 // pred_region
          %s2111 = smul.u32 8, %s21
        $region171: #{transformer_layer.5} parent=146 // pred_fallthru
          _
      $region147: #{transformer_layer.5} parent=5 // pred_fallthru
        _
      %p2112 = scmp.le.s32.totalorder 2, %s10
      // Predicated region
      $region172: #{transformer_layer.5} parent=5 // pred_check
        %p2113 = pneg %p2112
      $region173: #{transformer_layer.5} parent=5 // pred_check_branch
        %2115 = sbr.rel (%p2113) target = $region175
      $region174: #{transformer_layer.5} parent=5 // pred_region
        %s2116 = ssub.s32 %s10, 2
        // Predicated region
        $region176: #{transformer_layer.5} parent=174 // pred_check
          %p2117 = pneg %p174
        $region177: #{transformer_layer.5} parent=174 // pred_check_branch
          %2119 = sbr.rel (%p2117) target = $region179
        $region178: #{transformer_layer.5} parent=174 // pred_region
          %s2120 = smul.u32 8, %s24
          %p2121 = scmp.lt.s32.totalorder %s23, 1
          %s2122 = scalar_select %p2121, %s23, 1
          %p2123 = scmp.lt.s32.totalorder %s2120, 7
          %s2124 = scalar_select %p2123, %s2120, 7
          %s2125 = smul.addr %s2122, 8
          %s2126 = sadd.s32 %s2124, %s2125
          %s2127 = smul.addr %s2126, 2
          %s2128 = scalar_lea.vmem %s4, %s2127
        $region179: #{transformer_layer.5} parent=174 // pred_fallthru
          _
      $region175: #{transformer_layer.5} parent=5 // pred_fallthru
        _
    $region6: #{transformer_layer.5} parent=1 // loop_footer
      %s14 = sadd.s32 1, %s10
    $region7: #{transformer_layer.5} parent=1 // loop_footer_branch
      %9 = sbr.rel target = $region3
    $region8: #{transformer_layer.5} parent=1 // loop_exit
      _

</llo_original>
